<compile_context>
chip_gen: v6e
topology: v6e:2x2x1
jax: 0.10.0
libtpu: 0.0.40
codegen_flags: <defaults>
</compile_context>

<pallas_src>
import math
from functools import partial

import jax
import jax.numpy as jnp
import numpy as np
from jax.experimental import pallas as pl
from jax.experimental.pallas import tpu as pltpu


# ---------------------------------------------------------------------------
# Pallas kernel: grid = (batch blocks ["parallel"], FFN F-chunks ["arbitrary"]).
# ---------------------------------------------------------------------------
def decoder_layer_kernel(
    tgt_ref, mem_ref,
    n1g_ref, n1b_ref, n2g_ref, n2b_ref, n3g_ref, n3b_ref,
    sa_wqkv_ref, sa_bqkv_ref, sa_wo_ref, sa_bo_ref,
    ca_wqkv_ref, ca_bqkv_ref, ca_wo_ref, ca_bo_ref,
    w1_ref, b1_ref, w2_ref, b2_ref,
    o_ref,
    head_acc_ref,        # VMEM (Nb, T, E) mxu-dtype: per-head attention outputs
    x_state_ref,         # VMEM (Nb, T, E) f32: residual stream after both attentions
    ffn_acc_ref,         # VMEM (Nb, T, E) f32: FFN output accumulator over F-chunks
    *, nhead: int, mxu_dtype,
):
    Nb, T, E = tgt_ref.shape
    S = mem_ref.shape[1]
    dh = E // nhead
    scale = 1.0 / math.sqrt(dh)
    f = pl.program_id(1)
    nf = pl.num_programs(1)

    def to_mxu(x):
        return x if mxu_dtype is None else x.astype(mxu_dtype)

    def matmul(a, b):
        # MXU matmul with f32 accumulation; operands optionally cast to bf16.
        return jnp.dot(to_mxu(a), to_mxu(b), preferred_element_type=jnp.float32)

    def layernorm(x, g, b):            # f32 statistics
        mu = jnp.mean(x, axis=-1, keepdims=True)
        var = jnp.mean((x - mu) ** 2, axis=-1, keepdims=True)
        return (x - mu) * jax.lax.rsqrt(var + 1e-5) * g + b

    def attention(q, k, v, kv_rows, wo, bo):
        # q: (Nb*T, E) f32, k/v: (Nb*kv_rows, E) f32.  Cast ONCE before the head loop.
        q3 = to_mxu(q).reshape(Nb, T, E)
        k3 = to_mxu(k).reshape(Nb, kv_rows, E)
        v3 = to_mxu(v).reshape(Nb, kv_rows, E)
        for h in range(nhead):         # static loop; each iteration batched over Nb
            sl = slice(h * dh, (h + 1) * dh)
            # contract q/k on the head dim -> no explicit K transpose materialized
            s = jnp.einsum("btd,bsd->bts", q3[:, :, sl], k3[:, :, sl],
                           preferred_element_type=jnp.float32) * scale
            s = s - jnp.max(s, axis=-1, keepdims=True)
            p = jnp.exp(s)
            denom = jnp.sum(p, axis=-1, keepdims=True)
            if mxu_dtype is not None:
                # approx reciprocal (EUP slot) only on the low-precision MXU path
                p = p * pl.reciprocal(denom, approx=True)
            else:
                p = p / denom          # exact: keeps the f32 path bit-tight
            oh = jnp.einsum("bts,bsd->btd", to_mxu(p), v3[:, :, sl],
                            preferred_element_type=jnp.float32)
            head_acc_ref[:, :, sl] = oh.astype(head_acc_ref.dtype)
        o = head_acc_ref[...].reshape(Nb * T, E)   # all heads, one dense tile
        return (matmul(o, wo) + bo).reshape(Nb, T, E)

    # ---- attention blocks: computed once per batch block (first F-chunk) ----
    @pl.when(f == 0)
    def _attention_blocks():
        x = tgt_ref[...].astype(jnp.float32)       # (Nb, T, E)
        m = mem_ref[...].astype(jnp.float32)       # (Nb, S, E)

        # self-attention: pre-norm computed once, fused QKV projection
        xn = layernorm(x, n1g_ref[...], n1b_ref[...]).reshape(Nb * T, E)
        qkv = matmul(xn, sa_wqkv_ref[...]) + sa_bqkv_ref[...]          # (Nb*T, 3E)
        x = x + attention(qkv[:, 0 * E:1 * E], qkv[:, 1 * E:2 * E], qkv[:, 2 * E:3 * E],
                          T, sa_wo_ref[...], sa_bo_ref[...])

        # cross-attention: Q from tgt stream, fused KV projection from memory
        xn = layernorm(x, n2g_ref[...], n2b_ref[...]).reshape(Nb * T, E)
        q = matmul(xn, ca_wqkv_ref[:, 0 * E:1 * E]) + ca_bqkv_ref[:, 0 * E:1 * E]
        kv = (matmul(m.reshape(Nb * S, E), ca_wqkv_ref[:, 1 * E:3 * E])
              + ca_bqkv_ref[:, 1 * E:3 * E])
        x = x + attention(q, kv[:, 0 * E:1 * E], kv[:, 1 * E:2 * E],
                          S, ca_wo_ref[...], ca_bo_ref[...])

        x_state_ref[...] = x
        ffn_acc_ref[...] = jnp.zeros_like(ffn_acc_ref)

    # ---- feed-forward block: streamed over F-chunks, accumulated in f32 ----
    x = x_state_ref[...]
    xn = layernorm(x, n3g_ref[...], n3b_ref[...]).reshape(Nb * T, E)
    h1 = jnp.maximum(matmul(xn, w1_ref[...]) + b1_ref[...], 0.0)       # (Nb*T, ff_block)
    ffn_acc_ref[...] += matmul(h1, w2_ref[...]).reshape(Nb, T, E)

    @pl.when(f == nf - 1)
    def _finalize():
        out = x_state_ref[...] + ffn_acc_ref[...] + b2_ref[...]
        o_ref[...] = out.astype(o_ref.dtype)


# ---------------------------------------------------------------------------
# Wrapper
# ---------------------------------------------------------------------------
def _default_batch_block(N, T):
    if N <= 1:
        return 1
    # Want >= 2 "parallel" grid steps (v7x megacore) while keeping Nb*T reasonably
    # large so the projection / FFN matmuls fill the MXU M dimension.
    target = max(1, min(N // 2, pl.cdiv(256, T)))
    bb = 1
    for d in range(1, N + 1):
        if N % d == 0 and d <= target:
            bb = d
    return bb


def transformer_decoder_layer(tgt, memory, params, nhead, *,
                              batch_block=None, ff_block=None,
                              mxu_dtype=jnp.bfloat16):
    N, T, E = tgt.shape
    _, S, _ = memory.shape
    F = params["w1"].shape[1]

    if batch_block is None:
        batch_block = _default_batch_block(N, T)
    assert N % batch_block == 0, "batch_block must divide N"

    if ff_block is None:
        ff_block = F
        if F > 2048 and F % 2048 == 0:
            ff_block = 2048
    assert F % ff_block == 0, "ff_block must divide dim_feedforward"
    assert ff_block == F or ff_block % 128 == 0, "F-chunks must be 128-lane multiples"

    grid = (N // batch_block, F // ff_block)

    weight_names = [
        "n1g", "n1b", "n2g", "n2b", "n3g", "n3b",
        "sa_wqkv", "sa_bqkv", "sa_wo", "sa_bo",
        "ca_wqkv", "ca_bqkv", "ca_wo", "ca_bo",
        "w1", "b1", "w2", "b2",
    ]
    # Only MXU weight matrices are cast (halves their DMA / VMEM footprint);
    # biases and LayerNorm affine params stay f32.
    mxu_mats = {"sa_wqkv", "sa_wo", "ca_wqkv", "ca_wo", "w1", "w2"}
    weights = [
        params[k].astype(mxu_dtype) if (mxu_dtype is not None and k in mxu_mats) else params[k]
        for k in weight_names
    ]

    def const_spec(arr):
        # fully-resident, constant index -> single buffer (no wasted double-buffer)
        nd = arr.ndim
        return pl.BlockSpec(arr.shape, lambda n, f, _nd=nd: (0,) * _nd,
                            pipeline_mode=pl.Buffered(1))

    def weight_spec(name, arr):
        if name == "w1":
            return pl.BlockSpec((E, ff_block), lambda n, f: (0, f))
        if name == "b1":
            return pl.BlockSpec((1, ff_block), lambda n, f: (0, f))
        if name == "w2":
            return pl.BlockSpec((ff_block, E), lambda n, f: (f, 0))
        return const_spec(arr)

    in_specs = (
        [pl.BlockSpec((batch_block, T, E), lambda n, f: (n, 0, 0)),   # tgt block
         pl.BlockSpec((batch_block, S, E), lambda n, f: (n, 0, 0))]   # memory block
        + [weight_spec(name, w) for name, w in zip(weight_names, weights)]
    )
    out_specs = pl.BlockSpec((batch_block, T, E), lambda n, f: (n, 0, 0))

    head_dtype = jnp.float32 if mxu_dtype is None else mxu_dtype
    scratch_shapes = [
        pltpu.VMEM((batch_block, T, E), head_dtype),    # per-head attention outputs
        pltpu.VMEM((batch_block, T, E), jnp.float32),   # residual state across F axis
        pltpu.VMEM((batch_block, T, E), jnp.float32),   # FFN accumulator
    ]

    # ---- resident VMEM estimate -> explicit scoped limit (with headroom) ----
    def nbytes(arr):
        return int(np.prod(arr.shape)) * arr.dtype.itemsize

    ff_itemsize = jnp.dtype(head_dtype).itemsize
    const_w_bytes = sum(nbytes(w) for name, w in zip(weight_names, weights)
                        if name not in ("w1", "b1", "w2"))
    ff_block_bytes = (E * ff_block + ff_block * E) * ff_itemsize + ff_block * 4
    act_bytes = batch_block * T * E * tgt.dtype.itemsize
    mem_bytes = batch_block * S * E * memory.dtype.itemsize
    resident = (
        2 * (act_bytes + mem_bytes + act_bytes)            # tgt / mem / out (dbl-buffered)
        + const_w_bytes                                    # Buffered(1) constants
        + 2 * ff_block_bytes                               # streamed FFN chunks
        + batch_block * T * E * (2 * 4 + ff_itemsize)      # scratches
        + batch_block * T * 3 * E * 4                      # qkv intermediate
        + batch_block * T * ff_block * 4                   # h1 intermediate
        + batch_block * T * max(T, S) * 4                  # per-head score tile
    )
    vmem_limit = int(min(64 * 2**20, max(32 * 2**20, int(1.3 * resident))))

    # ---- advisory cost estimate for XLA scheduling around the fused call ----
    flops = (
        2 * N * T * E * 3 * E          # self-attn fused QKV
        + 4 * N * T * T * E            # self-attn scores + PV
        + 2 * N * T * E * E            # self-attn out proj
        + 2 * N * T * E * E            # cross-attn Q
        + 2 * N * S * E * 2 * E        # cross-attn fused KV
        + 4 * N * T * S * E            # cross-attn scores + PV
        + 2 * N * T * E * E            # cross-attn out proj
        + 4 * N * T * E * F            # feed-forward
    )
    transcendentals = N * nhead * T * (T + S) + 3 * N * T
    bytes_accessed = (nbytes(tgt) + nbytes(memory) + N * T * E * tgt.dtype.itemsize
                      + sum(nbytes(w) for w in weights))

    return pl.pallas_call(
        partial(decoder_layer_kernel, nhead=nhead, mxu_dtype=mxu_dtype),
        out_shape=jax.ShapeDtypeStruct((N, T, E), tgt.dtype),
        grid=grid,
        in_specs=in_specs,
        out_specs=out_specs,
        scratch_shapes=scratch_shapes,
        compiler_params=pltpu.CompilerParams(
            dimension_semantics=("parallel", "arbitrary"),
            vmem_limit_bytes=vmem_limit),
        cost_estimate=pl.CostEstimate(flops=int(flops),
                                      transcendentals=int(transcendentals),
                                      bytes_accessed=int(bytes_accessed)),
    )(tgt, memory, *weights)


# ---------------------------------------------------------------------------
# Pure-JAX reference (for correctness checks)
# ---------------------------------------------------------------------------
def _ln_ref(x, g, b):
    mu = x.mean(-1, keepdims=True)
    var = ((x - mu) ** 2).mean(-1, keepdims=True)
    return (x - mu) * jax.lax.rsqrt(var + 1e-5) * g + b


def _mha_ref(xq, xkv, wqkv, bqkv, wo, bo, nhead):
    N, T, E = xq.shape
    S = xkv.shape[1]
    dh = E // nhead
    q = xq @ wqkv[:, :E] + bqkv[:, :E]
    k = xkv @ wqkv[:, E:2 * E] + bqkv[:, E:2 * E]
    v = xkv @ wqkv[:, 2 * E:] + bqkv[:, 2 * E:]
    q = q.reshape(N, T, nhead, dh)
    k = k.reshape(N, S, nhead, dh)
    v = v.reshape(N, S, nhead, dh)
    s = jnp.einsum("nthd,nshd->nhts", q, k) / math.sqrt(dh)
    p = jax.nn.softmax(s, axis=-1)
    o = jnp.einsum("nhts,nshd->nthd", p, v).reshape(N, T, E)
    return o @ wo + bo


def decoder_layer_ref(tgt, memory, p, nhead):
    x = tgt
    xn = _ln_ref(x, p["n1g"], p["n1b"])
    x = x + _mha_ref(xn, xn, p["sa_wqkv"], p["sa_bqkv"], p["sa_wo"], p["sa_bo"], nhead)
    x = x + _mha_ref(_ln_ref(x, p["n2g"], p["n2b"]), memory,
                     p["ca_wqkv"], p["ca_bqkv"], p["ca_wo"], p["ca_bo"], nhead)
    xn = _ln_ref(x, p["n3g"], p["n3b"])
    x = x + jnp.maximum(xn @ p["w1"] + p["b1"], 0.0) @ p["w2"] + p["b2"]
    return x


# ---------------------------------------------------------------------------
# Main
# ---------------------------------------------------------------------------
if __name__ == "__main__":
    N, T, S = 2, 8, 16          # batch, tgt seq, memory seq
    E, H, F = 32, 4, 64         # d_model, nhead, dim_feedforward
    dtype = jnp.float32

    key = jax.random.PRNGKey(0)
    ks = jax.random.split(key, 16)

    def rnd(k, shape, scale=0.05):
        return (scale * jax.random.normal(k, shape)).astype(dtype)

    params = {
        # LayerNorm affine params (kept (1, E) for clean 2-D VMEM layout)
        "n1g": jnp.ones((1, E), dtype), "n1b": jnp.zeros((1, E), dtype),
        "n2g": jnp.ones((1, E), dtype), "n2b": jnp.zeros((1, E), dtype),
        "n3g": jnp.ones((1, E), dtype), "n3b": jnp.zeros((1, E), dtype),
        # self-attention: packed QKV in-projection (E, 3E), out-projection (E, E)
        "sa_wqkv": rnd(ks[0], (E, 3 * E)), "sa_bqkv": rnd(ks[1], (1, 3 * E)),
        "sa_wo": rnd(ks[2], (E, E)),       "sa_bo": rnd(ks[3], (1, E)),
        # cross-attention
        "ca_wqkv": rnd(ks[4], (E, 3 * E)), "ca_bqkv": rnd(ks[5], (1, 3 * E)),
        "ca_wo": rnd(ks[6], (E, E)),       "ca_bo": rnd(ks[7], (1, E)),
        # feed-forward
        "w1": rnd(ks[8], (E, F)), "b1": rnd(ks[9], (1, F)),
        "w2": rnd(ks[10], (F, E)), "b2": rnd(ks[11], (1, E)),
    }

    tgt = rnd(ks[12], (N, T, E), scale=1.0)
    memory = rnd(ks[13], (N, S, E), scale=1.0)

    ref = decoder_layer_ref(tgt, memory, params, nhead=H)

    # f32 MXU path (exact softmax division): tight tolerance vs. the reference.
    out = transformer_decoder_layer(tgt, memory, params, nhead=H, mxu_dtype=None)
    out = jax.block_until_ready(out)
    np.testing.assert_allclose(np.asarray(out), np.asarray(ref), rtol=1e-4, atol=1e-4)

    # Default fast path: bf16 on the MXU (f32 accumulation + f32 LN/softmax/residuals).
    out_bf16 = transformer_decoder_layer(tgt, memory, params, nhead=H)
    out_bf16 = jax.block_until_ready(out_bf16)
    np.testing.assert_allclose(np.asarray(out_bf16), np.asarray(ref), rtol=5e-2, atol=5e-2)

    print("KERNEL_OK")
</pallas_src>

<mosaic_0001>
module attributes {stable_mosaic.version = 11 : i64} {
  func.func @decoder_layer_kernel(%arg0: i32, %arg1: i32, %arg2: memref<1x8x32xf32, #tpu.memory_space<vmem>>, %arg3: memref<1x16x32xf32, #tpu.memory_space<vmem>>, %arg4: memref<1x32xf32, #tpu.memory_space<vmem>>, %arg5: memref<1x32xf32, #tpu.memory_space<vmem>>, %arg6: memref<1x32xf32, #tpu.memory_space<vmem>>, %arg7: memref<1x32xf32, #tpu.memory_space<vmem>>, %arg8: memref<1x32xf32, #tpu.memory_space<vmem>>, %arg9: memref<1x32xf32, #tpu.memory_space<vmem>>, %arg10: memref<32x96xf32, #tpu.memory_space<vmem>>, %arg11: memref<1x96xf32, #tpu.memory_space<vmem>>, %arg12: memref<32x32xf32, #tpu.memory_space<vmem>>, %arg13: memref<1x32xf32, #tpu.memory_space<vmem>>, %arg14: memref<32x96xf32, #tpu.memory_space<vmem>>, %arg15: memref<1x96xf32, #tpu.memory_space<vmem>>, %arg16: memref<32x32xf32, #tpu.memory_space<vmem>>, %arg17: memref<1x32xf32, #tpu.memory_space<vmem>>, %arg18: memref<32x64xf32, #tpu.memory_space<vmem>>, %arg19: memref<1x64xf32, #tpu.memory_space<vmem>>, %arg20: memref<64x32xf32, #tpu.memory_space<vmem>>, %arg21: memref<1x32xf32, #tpu.memory_space<vmem>>, %arg22: memref<1x8x32xf32, #tpu.memory_space<vmem>>, %arg23: memref<1x8x32xf32, #tpu.memory_space<vmem>>, %arg24: memref<1x8x32xf32, #tpu.memory_space<vmem>>, %arg25: memref<1x8x32xf32, #tpu.memory_space<vmem>>) attributes {dimension_semantics = [#tpu.dimension_semantics<parallel>, #tpu.dimension_semantics<arbitrary>], iteration_bounds = array<i64: 2, 1>, scalar_prefetch = 0 : i64, scratch_operands = 3 : i64, tpu.core_type = #tpu.core_type<tc>, window_params = [{transform_indices = @transform_0, window_bounds = array<i64: 1, 8, 32>}, {transform_indices = @transform_1, window_bounds = array<i64: 1, 16, 32>}, {pipeline_mode = #tpu.pipeline_mode<synchronous>, transform_indices = @transform_2, window_bounds = array<i64: 1, 32>}, {pipeline_mode = #tpu.pipeline_mode<synchronous>, transform_indices = @transform_3, window_bounds = array<i64: 1, 32>}, {pipeline_mode = #tpu.pipeline_mode<synchronous>, transform_indices = @transform_4, window_bounds = array<i64: 1, 32>}, {pipeline_mode = #tpu.pipeline_mode<synchronous>, transform_indices = @transform_5, window_bounds = array<i64: 1, 32>}, {pipeline_mode = #tpu.pipeline_mode<synchronous>, transform_indices = @transform_6, window_bounds = array<i64: 1, 32>}, {pipeline_mode = #tpu.pipeline_mode<synchronous>, transform_indices = @transform_7, window_bounds = array<i64: 1, 32>}, {pipeline_mode = #tpu.pipeline_mode<synchronous>, transform_indices = @transform_8, window_bounds = array<i64: 32, 96>}, {pipeline_mode = #tpu.pipeline_mode<synchronous>, transform_indices = @transform_9, window_bounds = array<i64: 1, 96>}, {pipeline_mode = #tpu.pipeline_mode<synchronous>, transform_indices = @transform_10, window_bounds = array<i64: 32, 32>}, {pipeline_mode = #tpu.pipeline_mode<synchronous>, transform_indices = @transform_11, window_bounds = array<i64: 1, 32>}, {pipeline_mode = #tpu.pipeline_mode<synchronous>, transform_indices = @transform_12, window_bounds = array<i64: 32, 96>}, {pipeline_mode = #tpu.pipeline_mode<synchronous>, transform_indices = @transform_13, window_bounds = array<i64: 1, 96>}, {pipeline_mode = #tpu.pipeline_mode<synchronous>, transform_indices = @transform_14, window_bounds = array<i64: 32, 32>}, {pipeline_mode = #tpu.pipeline_mode<synchronous>, transform_indices = @transform_15, window_bounds = array<i64: 1, 32>}, {transform_indices = @transform_16, window_bounds = array<i64: 32, 64>}, {transform_indices = @transform_17, window_bounds = array<i64: 1, 64>}, {transform_indices = @transform_18, window_bounds = array<i64: 64, 32>}, {pipeline_mode = #tpu.pipeline_mode<synchronous>, transform_indices = @transform_19, window_bounds = array<i64: 1, 32>}, {transform_indices = @transform_20, window_bounds = array<i64: 1, 8, 32>}]} {
    %c0_i32 = arith.constant 0 : i32
    %0 = arith.cmpi eq, %arg1, %c0_i32 : i32
    %1 = arith.extui %0 : i1 to i32
    %c0_i32_0 = arith.constant 0 : i32
    %2 = arith.cmpi ne, %1, %c0_i32_0 : i32
    scf.if %2 {
      %c0_28 = arith.constant 0 : index
      %c0_29 = arith.constant 0 : index
      %c0_30 = arith.constant 0 : index
      %47 = vector.load %arg2[%c0_28, %c0_29, %c0_30] : memref<1x8x32xf32, #tpu.memory_space<vmem>>, vector<1x8x32xf32>
      %c0_31 = arith.constant 0 : index
      %c0_32 = arith.constant 0 : index
      %c0_33 = arith.constant 0 : index
      %48 = vector.load %arg3[%c0_31, %c0_32, %c0_33] : memref<1x16x32xf32, #tpu.memory_space<vmem>>, vector<1x16x32xf32>
      %c0_34 = arith.constant 0 : index
      %c0_35 = arith.constant 0 : index
      %49 = vector.load %arg4[%c0_34, %c0_35] : memref<1x32xf32, #tpu.memory_space<vmem>>, vector<1x32xf32>
      %c0_36 = arith.constant 0 : index
      %c0_37 = arith.constant 0 : index
      %50 = vector.load %arg5[%c0_36, %c0_37] : memref<1x32xf32, #tpu.memory_space<vmem>>, vector<1x32xf32>
      %cst_38 = arith.constant dense<0.000000e+00> : vector<1x8xf32>
      %51 = vector.multi_reduction <add>, %47, %cst_38 [2] : vector<1x8x32xf32> to vector<1x8xf32>
      %52 = vector.shape_cast %51 : vector<1x8xf32> to vector<1x8x1xf32>
      %cst_39 = arith.constant 3.200000e+01 : f32
      %53 = vector.broadcast %cst_39 : f32 to vector<1x8x1xf32>
      %54 = arith.divf %52, %53 : vector<1x8x1xf32>
      %55 = vector.broadcast %54 : vector<1x8x1xf32> to vector<1x8x32xf32>
      %56 = arith.subf %47, %55 : vector<1x8x32xf32>
      %57 = arith.mulf %56, %56 : vector<1x8x32xf32>
      %cst_40 = arith.constant dense<0.000000e+00> : vector<1x8xf32>
      %58 = vector.multi_reduction <add>, %57, %cst_40 [2] : vector<1x8x32xf32> to vector<1x8xf32>
      %59 = vector.shape_cast %58 : vector<1x8xf32> to vector<1x8x1xf32>
      %cst_41 = arith.constant 3.200000e+01 : f32
      %60 = vector.broadcast %cst_41 : f32 to vector<1x8x1xf32>
      %61 = arith.divf %59, %60 : vector<1x8x1xf32>
      %62 = vector.broadcast %54 : vector<1x8x1xf32> to vector<1x8x32xf32>
      %63 = arith.subf %47, %62 : vector<1x8x32xf32>
      %cst_42 = arith.constant 9.99999974E-6 : f32
      %64 = vector.broadcast %cst_42 : f32 to vector<1x8x1xf32>
      %65 = arith.addf %61, %64 : vector<1x8x1xf32>
      %66 = math.rsqrt %65 : vector<1x8x1xf32>
      %67 = vector.broadcast %66 : vector<1x8x1xf32> to vector<1x8x32xf32>
      %68 = arith.mulf %63, %67 : vector<1x8x32xf32>
      %69 = vector.shape_cast %49 : vector<1x32xf32> to vector<1x1x32xf32>
      %70 = vector.broadcast %69 : vector<1x1x32xf32> to vector<1x8x32xf32>
      %71 = arith.mulf %68, %70 : vector<1x8x32xf32>
      %72 = vector.shape_cast %50 : vector<1x32xf32> to vector<1x1x32xf32>
      %73 = vector.broadcast %72 : vector<1x1x32xf32> to vector<1x8x32xf32>
      %74 = arith.addf %71, %73 : vector<1x8x32xf32>
      %75 = vector.shape_cast %74 : vector<1x8x32xf32> to vector<8x32xf32>
      %c0_43 = arith.constant 0 : index
      %c0_44 = arith.constant 0 : index
      %76 = vector.load %arg10[%c0_43, %c0_44] : memref<32x96xf32, #tpu.memory_space<vmem>>, vector<32x96xf32>
      %cst_45 = arith.constant dense<0.000000e+00> : vector<8x96xf32>
      %77 = tpu.matmul %75, %76, %cst_45 {dimension_numbers = #tpu.dot_dimension_numbers<[1], [0], [0], [1], [0, 0, 1, 1], [], []>} : vector<8x32xf32>, vector<32x96xf32>, vector<8x96xf32> -> vector<8x96xf32>
      %c0_46 = arith.constant 0 : index
      %c0_47 = arith.constant 0 : index
      %78 = vector.load %arg11[%c0_46, %c0_47] : memref<1x96xf32, #tpu.memory_space<vmem>>, vector<1x96xf32>
      %79 = vector.broadcast %78 : vector<1x96xf32> to vector<8x96xf32>
      %80 = arith.addf %77, %79 : vector<8x96xf32>
      %81 = vector.extract_strided_slice %80 {offsets = [0, 0], sizes = [8, 32], strides = [1, 1]} : vector<8x96xf32> to vector<8x32xf32>
      %82 = vector.extract_strided_slice %80 {offsets = [0, 32], sizes = [8, 32], strides = [1, 1]} : vector<8x96xf32> to vector<8x32xf32>
      %83 = vector.extract_strided_slice %80 {offsets = [0, 64], sizes = [8, 32], strides = [1, 1]} : vector<8x96xf32> to vector<8x32xf32>
      %c0_48 = arith.constant 0 : index
      %c0_49 = arith.constant 0 : index
      %84 = vector.load %arg12[%c0_48, %c0_49] : memref<32x32xf32, #tpu.memory_space<vmem>>, vector<32x32xf32>
      %c0_50 = arith.constant 0 : index
      %c0_51 = arith.constant 0 : index
      %85 = vector.load %arg13[%c0_50, %c0_51] : memref<1x32xf32, #tpu.memory_space<vmem>>, vector<1x32xf32>
      %86 = vector.shape_cast %81 : vector<8x32xf32> to vector<1x8x32xf32>
      %87 = vector.shape_cast %82 : vector<8x32xf32> to vector<1x8x32xf32>
      %88 = vector.shape_cast %83 : vector<8x32xf32> to vector<1x8x32xf32>
      %89 = vector.extract_strided_slice %86 {offsets = [0, 0, 0], sizes = [1, 8, 8], strides = [1, 1, 1]} : vector<1x8x32xf32> to vector<1x8x8xf32>
      %90 = vector.extract_strided_slice %87 {offsets = [0, 0, 0], sizes = [1, 8, 8], strides = [1, 1, 1]} : vector<1x8x32xf32> to vector<1x8x8xf32>
      "tpu.trace_start"() <{level = 10 : i32, message = "btd,bsd->bts"}> : () -> ()
      %cst_52 = arith.constant dense<0.000000e+00> : vector<1x8x8xf32>
      %91 = tpu.matmul %89, %90, %cst_52 {dimension_numbers = #tpu.dot_dimension_numbers<[2], [2], [1], [1], [0, 0, 0, 1, 1, 1], [0], [0]>} : vector<1x8x8xf32>, vector<1x8x8xf32>, vector<1x8x8xf32> -> vector<1x8x8xf32>
      "tpu.trace_stop"() : () -> ()
      %cst_53 = arith.constant 0.353553385 : f32
      %92 = vector.broadcast %cst_53 : f32 to vector<1x8x8xf32>
      %93 = arith.mulf %91, %92 : vector<1x8x8xf32>
      %cst_54 = arith.constant dense<0xFF800000> : vector<1x8xf32>
      %94 = vector.multi_reduction <maximumf>, %93, %cst_54 [2] : vector<1x8x8xf32> to vector<1x8xf32>
      %95 = vector.shape_cast %94 : vector<1x8xf32> to vector<1x8x1xf32>
      %96 = vector.broadcast %95 : vector<1x8x1xf32> to vector<1x8x8xf32>
      %97 = arith.subf %93, %96 : vector<1x8x8xf32>
      %98 = math.exp %97 : vector<1x8x8xf32>
      %cst_55 = arith.constant dense<0.000000e+00> : vector<1x8xf32>
      %99 = vector.multi_reduction <add>, %98, %cst_55 [2] : vector<1x8x8xf32> to vector<1x8xf32>
      %100 = vector.shape_cast %99 : vector<1x8xf32> to vector<1x8x1xf32>
      %101 = vector.broadcast %100 : vector<1x8x1xf32> to vector<1x8x8xf32>
      %102 = arith.divf %98, %101 : vector<1x8x8xf32>
      %103 = vector.extract_strided_slice %88 {offsets = [0, 0, 0], sizes = [1, 8, 8], strides = [1, 1, 1]} : vector<1x8x32xf32> to vector<1x8x8xf32>
      "tpu.trace_start"() <{level = 10 : i32, message = "bts,bsd->btd"}> : () -> ()
      %cst_56 = arith.constant dense<0.000000e+00> : vector<1x8x8xf32>
      %104 = tpu.matmul %102, %103, %cst_56 {dimension_numbers = #tpu.dot_dimension_numbers<[2], [1], [1], [2], [0, 0, 0, 1, 1, 2], [0], [0]>} : vector<1x8x8xf32>, vector<1x8x8xf32>, vector<1x8x8xf32> -> vector<1x8x8xf32>
      "tpu.trace_stop"() : () -> ()
      %c0_57 = arith.constant 0 : index
      %c0_58 = arith.constant 0 : index
      %c0_59 = arith.constant 0 : index
      %105 = vector.load %arg23[%c0_57, %c0_58, %c0_59] : memref<1x8x32xf32, #tpu.memory_space<vmem>>, vector<1x8x8xf32>
      tpu.vector_store %arg23[%c0_57, %c0_58, %c0_59], %104 {strides = array<i32>} : memref<1x8x32xf32, #tpu.memory_space<vmem>>, vector<1x8x8xf32>,
      %106 = vector.extract_strided_slice %86 {offsets = [0, 0, 8], sizes = [1, 8, 8], strides = [1, 1, 1]} : vector<1x8x32xf32> to vector<1x8x8xf32>
      %107 = vector.extract_strided_slice %87 {offsets = [0, 0, 8], sizes = [1, 8, 8], strides = [1, 1, 1]} : vector<1x8x32xf32> to vector<1x8x8xf32>
      "tpu.trace_start"() <{level = 10 : i32, message = "btd,bsd->bts"}> : () -> ()
      %cst_60 = arith.constant dense<0.000000e+00> : vector<1x8x8xf32>
      %108 = tpu.matmul %106, %107, %cst_60 {dimension_numbers = #tpu.dot_dimension_numbers<[2], [2], [1], [1], [0, 0, 0, 1, 1, 1], [0], [0]>} : vector<1x8x8xf32>, vector<1x8x8xf32>, vector<1x8x8xf32> -> vector<1x8x8xf32>
      "tpu.trace_stop"() : () -> ()
      %cst_61 = arith.constant 0.353553385 : f32
      %109 = vector.broadcast %cst_61 : f32 to vector<1x8x8xf32>
      %110 = arith.mulf %108, %109 : vector<1x8x8xf32>
      %cst_62 = arith.constant dense<0xFF800000> : vector<1x8xf32>
      %111 = vector.multi_reduction <maximumf>, %110, %cst_62 [2] : vector<1x8x8xf32> to vector<1x8xf32>
      %112 = vector.shape_cast %111 : vector<1x8xf32> to vector<1x8x1xf32>
      %113 = vector.broadcast %112 : vector<1x8x1xf32> to vector<1x8x8xf32>
      %114 = arith.subf %110, %113 : vector<1x8x8xf32>
      %115 = math.exp %114 : vector<1x8x8xf32>
      %cst_63 = arith.constant dense<0.000000e+00> : vector<1x8xf32>
      %116 = vector.multi_reduction <add>, %115, %cst_63 [2] : vector<1x8x8xf32> to vector<1x8xf32>
      %117 = vector.shape_cast %116 : vector<1x8xf32> to vector<1x8x1xf32>
      %118 = vector.broadcast %117 : vector<1x8x1xf32> to vector<1x8x8xf32>
      %119 = arith.divf %115, %118 : vector<1x8x8xf32>
      %120 = vector.extract_strided_slice %88 {offsets = [0, 0, 8], sizes = [1, 8, 8], strides = [1, 1, 1]} : vector<1x8x32xf32> to vector<1x8x8xf32>
      "tpu.trace_start"() <{level = 10 : i32, message = "bts,bsd->btd"}> : () -> ()
      %cst_64 = arith.constant dense<0.000000e+00> : vector<1x8x8xf32>
      %121 = tpu.matmul %119, %120, %cst_64 {dimension_numbers = #tpu.dot_dimension_numbers<[2], [1], [1], [2], [0, 0, 0, 1, 1, 2], [0], [0]>} : vector<1x8x8xf32>, vector<1x8x8xf32>, vector<1x8x8xf32> -> vector<1x8x8xf32>
      "tpu.trace_stop"() : () -> ()
      %c0_65 = arith.constant 0 : index
      %c0_66 = arith.constant 0 : index
      %c8 = arith.constant 8 : index
      %122 = vector.load %arg23[%c0_65, %c0_66, %c8] : memref<1x8x32xf32, #tpu.memory_space<vmem>>, vector<1x8x8xf32>
      tpu.vector_store %arg23[%c0_65, %c0_66, %c8], %121 {strides = array<i32>} : memref<1x8x32xf32, #tpu.memory_space<vmem>>, vector<1x8x8xf32>,
      %123 = vector.extract_strided_slice %86 {offsets = [0, 0, 16], sizes = [1, 8, 8], strides = [1, 1, 1]} : vector<1x8x32xf32> to vector<1x8x8xf32>
      %124 = vector.extract_strided_slice %87 {offsets = [0, 0, 16], sizes = [1, 8, 8], strides = [1, 1, 1]} : vector<1x8x32xf32> to vector<1x8x8xf32>
      "tpu.trace_start"() <{level = 10 : i32, message = "btd,bsd->bts"}> : () -> ()
      %cst_67 = arith.constant dense<0.000000e+00> : vector<1x8x8xf32>
      %125 = tpu.matmul %123, %124, %cst_67 {dimension_numbers = #tpu.dot_dimension_numbers<[2], [2], [1], [1], [0, 0, 0, 1, 1, 1], [0], [0]>} : vector<1x8x8xf32>, vector<1x8x8xf32>, vector<1x8x8xf32> -> vector<1x8x8xf32>
      "tpu.trace_stop"() : () -> ()
      %cst_68 = arith.constant 0.353553385 : f32
      %126 = vector.broadcast %cst_68 : f32 to vector<1x8x8xf32>
      %127 = arith.mulf %125, %126 : vector<1x8x8xf32>
      %cst_69 = arith.constant dense<0xFF800000> : vector<1x8xf32>
      %128 = vector.multi_reduction <maximumf>, %127, %cst_69 [2] : vector<1x8x8xf32> to vector<1x8xf32>
      %129 = vector.shape_cast %128 : vector<1x8xf32> to vector<1x8x1xf32>
      %130 = vector.broadcast %129 : vector<1x8x1xf32> to vector<1x8x8xf32>
      %131 = arith.subf %127, %130 : vector<1x8x8xf32>
      %132 = math.exp %131 : vector<1x8x8xf32>
      %cst_70 = arith.constant dense<0.000000e+00> : vector<1x8xf32>
      %133 = vector.multi_reduction <add>, %132, %cst_70 [2] : vector<1x8x8xf32> to vector<1x8xf32>
      %134 = vector.shape_cast %133 : vector<1x8xf32> to vector<1x8x1xf32>
      %135 = vector.broadcast %134 : vector<1x8x1xf32> to vector<1x8x8xf32>
      %136 = arith.divf %132, %135 : vector<1x8x8xf32>
      %137 = vector.extract_strided_slice %88 {offsets = [0, 0, 16], sizes = [1, 8, 8], strides = [1, 1, 1]} : vector<1x8x32xf32> to vector<1x8x8xf32>
      "tpu.trace_start"() <{level = 10 : i32, message = "bts,bsd->btd"}> : () -> ()
      %cst_71 = arith.constant dense<0.000000e+00> : vector<1x8x8xf32>
      %138 = tpu.matmul %136, %137, %cst_71 {dimension_numbers = #tpu.dot_dimension_numbers<[2], [1], [1], [2], [0, 0, 0, 1, 1, 2], [0], [0]>} : vector<1x8x8xf32>, vector<1x8x8xf32>, vector<1x8x8xf32> -> vector<1x8x8xf32>
      "tpu.trace_stop"() : () -> ()
      %c0_72 = arith.constant 0 : index
      %c0_73 = arith.constant 0 : index
      %c16 = arith.constant 16 : index
      %139 = vector.load %arg23[%c0_72, %c0_73, %c16] : memref<1x8x32xf32, #tpu.memory_space<vmem>>, vector<1x8x8xf32>
      tpu.vector_store %arg23[%c0_72, %c0_73, %c16], %138 {strides = array<i32>} : memref<1x8x32xf32, #tpu.memory_space<vmem>>, vector<1x8x8xf32>,
      %140 = vector.extract_strided_slice %86 {offsets = [0, 0, 24], sizes = [1, 8, 8], strides = [1, 1, 1]} : vector<1x8x32xf32> to vector<1x8x8xf32>
      %141 = vector.extract_strided_slice %87 {offsets = [0, 0, 24], sizes = [1, 8, 8], strides = [1, 1, 1]} : vector<1x8x32xf32> to vector<1x8x8xf32>
      "tpu.trace_start"() <{level = 10 : i32, message = "btd,bsd->bts"}> : () -> ()
      %cst_74 = arith.constant dense<0.000000e+00> : vector<1x8x8xf32>
      %142 = tpu.matmul %140, %141, %cst_74 {dimension_numbers = #tpu.dot_dimension_numbers<[2], [2], [1], [1], [0, 0, 0, 1, 1, 1], [0], [0]>} : vector<1x8x8xf32>, vector<1x8x8xf32>, vector<1x8x8xf32> -> vector<1x8x8xf32>
      "tpu.trace_stop"() : () -> ()
      %cst_75 = arith.constant 0.353553385 : f32
      %143 = vector.broadcast %cst_75 : f32 to vector<1x8x8xf32>
      %144 = arith.mulf %142, %143 : vector<1x8x8xf32>
      %cst_76 = arith.constant dense<0xFF800000> : vector<1x8xf32>
      %145 = vector.multi_reduction <maximumf>, %144, %cst_76 [2] : vector<1x8x8xf32> to vector<1x8xf32>
      %146 = vector.shape_cast %145 : vector<1x8xf32> to vector<1x8x1xf32>
      %147 = vector.broadcast %146 : vector<1x8x1xf32> to vector<1x8x8xf32>
      %148 = arith.subf %144, %147 : vector<1x8x8xf32>
      %149 = math.exp %148 : vector<1x8x8xf32>
      %cst_77 = arith.constant dense<0.000000e+00> : vector<1x8xf32>
      %150 = vector.multi_reduction <add>, %149, %cst_77 [2] : vector<1x8x8xf32> to vector<1x8xf32>
      %151 = vector.shape_cast %150 : vector<1x8xf32> to vector<1x8x1xf32>
      %152 = vector.broadcast %151 : vector<1x8x1xf32> to vector<1x8x8xf32>
      %153 = arith.divf %149, %152 : vector<1x8x8xf32>
      %154 = vector.extract_strided_slice %88 {offsets = [0, 0, 24], sizes = [1, 8, 8], strides = [1, 1, 1]} : vector<1x8x32xf32> to vector<1x8x8xf32>
      "tpu.trace_start"() <{level = 10 : i32, message = "bts,bsd->btd"}> : () -> ()
      %cst_78 = arith.constant dense<0.000000e+00> : vector<1x8x8xf32>
      %155 = tpu.matmul %153, %154, %cst_78 {dimension_numbers = #tpu.dot_dimension_numbers<[2], [1], [1], [2], [0, 0, 0, 1, 1, 2], [0], [0]>} : vector<1x8x8xf32>, vector<1x8x8xf32>, vector<1x8x8xf32> -> vector<1x8x8xf32>
      "tpu.trace_stop"() : () -> ()
      %c0_79 = arith.constant 0 : index
      %c0_80 = arith.constant 0 : index
      %c24 = arith.constant 24 : index
      %156 = vector.load %arg23[%c0_79, %c0_80, %c24] : memref<1x8x32xf32, #tpu.memory_space<vmem>>, vector<1x8x8xf32>
      tpu.vector_store %arg23[%c0_79, %c0_80, %c24], %155 {strides = array<i32>} : memref<1x8x32xf32, #tpu.memory_space<vmem>>, vector<1x8x8xf32>,
      %c0_81 = arith.constant 0 : index
      %c0_82 = arith.constant 0 : index
      %c0_83 = arith.constant 0 : index
      %157 = vector.load %arg23[%c0_81, %c0_82, %c0_83] : memref<1x8x32xf32, #tpu.memory_space<vmem>>, vector<1x8x32xf32>
      %158 = vector.shape_cast %157 : vector<1x8x32xf32> to vector<8x32xf32>
      %cst_84 = arith.constant dense<0.000000e+00> : vector<8x32xf32>
      %159 = tpu.matmul %158, %84, %cst_84 {dimension_numbers = #tpu.dot_dimension_numbers<[1], [0], [0], [1], [0, 0, 1, 1], [], []>} : vector<8x32xf32>, vector<32x32xf32>, vector<8x32xf32> -> vector<8x32xf32>
      %160 = vector.broadcast %85 : vector<1x32xf32> to vector<8x32xf32>
      %161 = arith.addf %159, %160 : vector<8x32xf32>
      %162 = vector.shape_cast %161 : vector<8x32xf32> to vector<1x8x32xf32>
      %163 = arith.addf %47, %162 : vector<1x8x32xf32>
      %c0_85 = arith.constant 0 : index
      %c0_86 = arith.constant 0 : index
      %164 = vector.load %arg6[%c0_85, %c0_86] : memref<1x32xf32, #tpu.memory_space<vmem>>, vector<1x32xf32>
      %c0_87 = arith.constant 0 : index
      %c0_88 = arith.constant 0 : index
      %165 = vector.load %arg7[%c0_87, %c0_88] : memref<1x32xf32, #tpu.memory_space<vmem>>, vector<1x32xf32>
      %cst_89 = arith.constant dense<0.000000e+00> : vector<1x8xf32>
      %166 = vector.multi_reduction <add>, %163, %cst_89 [2] : vector<1x8x32xf32> to vector<1x8xf32>
      %167 = vector.shape_cast %166 : vector<1x8xf32> to vector<1x8x1xf32>
      %cst_90 = arith.constant 3.200000e+01 : f32
      %168 = vector.broadcast %cst_90 : f32 to vector<1x8x1xf32>
      %169 = arith.divf %167, %168 : vector<1x8x1xf32>
      %170 = vector.broadcast %169 : vector<1x8x1xf32> to vector<1x8x32xf32>
      %171 = arith.subf %163, %170 : vector<1x8x32xf32>
      %172 = arith.mulf %171, %171 : vector<1x8x32xf32>
      %cst_91 = arith.constant dense<0.000000e+00> : vector<1x8xf32>
      %173 = vector.multi_reduction <add>, %172, %cst_91 [2] : vector<1x8x32xf32> to vector<1x8xf32>
      %174 = vector.shape_cast %173 : vector<1x8xf32> to vector<1x8x1xf32>
      %cst_92 = arith.constant 3.200000e+01 : f32
      %175 = vector.broadcast %cst_92 : f32 to vector<1x8x1xf32>
      %176 = arith.divf %174, %175 : vector<1x8x1xf32>
      %177 = vector.broadcast %169 : vector<1x8x1xf32> to vector<1x8x32xf32>
      %178 = arith.subf %163, %177 : vector<1x8x32xf32>
      %cst_93 = arith.constant 9.99999974E-6 : f32
      %179 = vector.broadcast %cst_93 : f32 to vector<1x8x1xf32>
      %180 = arith.addf %176, %179 : vector<1x8x1xf32>
      %181 = math.rsqrt %180 : vector<1x8x1xf32>
      %182 = vector.broadcast %181 : vector<1x8x1xf32> to vector<1x8x32xf32>
      %183 = arith.mulf %178, %182 : vector<1x8x32xf32>
      %184 = vector.shape_cast %164 : vector<1x32xf32> to vector<1x1x32xf32>
      %185 = vector.broadcast %184 : vector<1x1x32xf32> to vector<1x8x32xf32>
      %186 = arith.mulf %183, %185 : vector<1x8x32xf32>
      %187 = vector.shape_cast %165 : vector<1x32xf32> to vector<1x1x32xf32>
      %188 = vector.broadcast %187 : vector<1x1x32xf32> to vector<1x8x32xf32>
      %189 = arith.addf %186, %188 : vector<1x8x32xf32>
      %190 = vector.shape_cast %189 : vector<1x8x32xf32> to vector<8x32xf32>
      %c0_94 = arith.constant 0 : index
      %c0_95 = arith.constant 0 : index
      %191 = vector.load %arg14[%c0_94, %c0_95] : memref<32x96xf32, #tpu.memory_space<vmem>>, vector<32x32xf32>
      %cst_96 = arith.constant dense<0.000000e+00> : vector<8x32xf32>
      %192 = tpu.matmul %190, %191, %cst_96 {dimension_numbers = #tpu.dot_dimension_numbers<[1], [0], [0], [1], [0, 0, 1, 1], [], []>} : vector<8x32xf32>, vector<32x32xf32>, vector<8x32xf32> -> vector<8x32xf32>
      %c0_97 = arith.constant 0 : index
      %c0_98 = arith.constant 0 : index
      %193 = vector.load %arg15[%c0_97, %c0_98] : memref<1x96xf32, #tpu.memory_space<vmem>>, vector<1x32xf32>
      %194 = vector.broadcast %193 : vector<1x32xf32> to vector<8x32xf32>
      %195 = arith.addf %192, %194 : vector<8x32xf32>
      %196 = vector.shape_cast %48 : vector<1x16x32xf32> to vector<16x32xf32>
      %c0_99 = arith.constant 0 : index
      %c32 = arith.constant 32 : index
      %197 = vector.load %arg14[%c0_99, %c32] : memref<32x96xf32, #tpu.memory_space<vmem>>, vector<32x64xf32>
      %cst_100 = arith.constant dense<0.000000e+00> : vector<16x64xf32>
      %198 = tpu.matmul %196, %197, %cst_100 {dimension_numbers = #tpu.dot_dimension_numbers<[1], [0], [0], [1], [0, 0, 1, 1], [], []>} : vector<16x32xf32>, vector<32x64xf32>, vector<16x64xf32> -> vector<16x64xf32>
      %c0_101 = arith.constant 0 : index
      %c32_102 = arith.constant 32 : index
      %199 = vector.load %arg15[%c0_101, %c32_102] : memref<1x96xf32, #tpu.memory_space<vmem>>, vector<1x64xf32>
      %200 = vector.broadcast %199 : vector<1x64xf32> to vector<16x64xf32>
      %201 = arith.addf %198, %200 : vector<16x64xf32>
      %202 = vector.extract_strided_slice %201 {offsets = [0, 0], sizes = [16, 32], strides = [1, 1]} : vector<16x64xf32> to vector<16x32xf32>
      %203 = vector.extract_strided_slice %201 {offsets = [0, 32], sizes = [16, 32], strides = [1, 1]} : vector<16x64xf32> to vector<16x32xf32>
      %c0_103 = arith.constant 0 : index
      %c0_104 = arith.constant 0 : index
      %204 = vector.load %arg16[%c0_103, %c0_104] : memref<32x32xf32, #tpu.memory_space<vmem>>, vector<32x32xf32>
      %c0_105 = arith.constant 0 : index
      %c0_106 = arith.constant 0 : index
      %205 = vector.load %arg17[%c0_105, %c0_106] : memref<1x32xf32, #tpu.memory_space<vmem>>, vector<1x32xf32>
      %206 = vector.shape_cast %195 : vector<8x32xf32> to vector<1x8x32xf32>
      %207 = vector.shape_cast %202 : vector<16x32xf32> to vector<1x16x32xf32>
      %208 = vector.shape_cast %203 : vector<16x32xf32> to vector<1x16x32xf32>
      %209 = vector.extract_strided_slice %206 {offsets = [0, 0, 0], sizes = [1, 8, 8], strides = [1, 1, 1]} : vector<1x8x32xf32> to vector<1x8x8xf32>
      %210 = vector.extract_strided_slice %207 {offsets = [0, 0, 0], sizes = [1, 16, 8], strides = [1, 1, 1]} : vector<1x16x32xf32> to vector<1x16x8xf32>
      "tpu.trace_start"() <{level = 10 : i32, message = "btd,bsd->bts"}> : () -> ()
      %cst_107 = arith.constant dense<0.000000e+00> : vector<1x8x16xf32>
      %211 = tpu.matmul %209, %210, %cst_107 {dimension_numbers = #tpu.dot_dimension_numbers<[2], [2], [1], [1], [0, 0, 0, 1, 1, 1], [0], [0]>} : vector<1x8x8xf32>, vector<1x16x8xf32>, vector<1x8x16xf32> -> vector<1x8x16xf32>
      "tpu.trace_stop"() : () -> ()
      %cst_108 = arith.constant 0.353553385 : f32
      %212 = vector.broadcast %cst_108 : f32 to vector<1x8x16xf32>
      %213 = arith.mulf %211, %212 : vector<1x8x16xf32>
      %cst_109 = arith.constant dense<0xFF800000> : vector<1x8xf32>
      %214 = vector.multi_reduction <maximumf>, %213, %cst_109 [2] : vector<1x8x16xf32> to vector<1x8xf32>
      %215 = vector.shape_cast %214 : vector<1x8xf32> to vector<1x8x1xf32>
      %216 = vector.broadcast %215 : vector<1x8x1xf32> to vector<1x8x16xf32>
      %217 = arith.subf %213, %216 : vector<1x8x16xf32>
      %218 = math.exp %217 : vector<1x8x16xf32>
      %cst_110 = arith.constant dense<0.000000e+00> : vector<1x8xf32>
      %219 = vector.multi_reduction <add>, %218, %cst_110 [2] : vector<1x8x16xf32> to vector<1x8xf32>
      %220 = vector.shape_cast %219 : vector<1x8xf32> to vector<1x8x1xf32>
      %221 = vector.broadcast %220 : vector<1x8x1xf32> to vector<1x8x16xf32>
      %222 = arith.divf %218, %221 : vector<1x8x16xf32>
      %223 = vector.extract_strided_slice %208 {offsets = [0, 0, 0], sizes = [1, 16, 8], strides = [1, 1, 1]} : vector<1x16x32xf32> to vector<1x16x8xf32>
      "tpu.trace_start"() <{level = 10 : i32, message = "bts,bsd->btd"}> : () -> ()
      %cst_111 = arith.constant dense<0.000000e+00> : vector<1x8x8xf32>
      %224 = tpu.matmul %222, %223, %cst_111 {dimension_numbers = #tpu.dot_dimension_numbers<[2], [1], [1], [2], [0, 0, 0, 1, 1, 2], [0], [0]>} : vector<1x8x16xf32>, vector<1x16x8xf32>, vector<1x8x8xf32> -> vector<1x8x8xf32>
      "tpu.trace_stop"() : () -> ()
      %c0_112 = arith.constant 0 : index
      %c0_113 = arith.constant 0 : index
      %c0_114 = arith.constant 0 : index
      %225 = vector.load %arg23[%c0_112, %c0_113, %c0_114] : memref<1x8x32xf32, #tpu.memory_space<vmem>>, vector<1x8x8xf32>
      tpu.vector_store %arg23[%c0_112, %c0_113, %c0_114], %224 {strides = array<i32>} : memref<1x8x32xf32, #tpu.memory_space<vmem>>, vector<1x8x8xf32>,
      %226 = vector.extract_strided_slice %206 {offsets = [0, 0, 8], sizes = [1, 8, 8], strides = [1, 1, 1]} : vector<1x8x32xf32> to vector<1x8x8xf32>
      %227 = vector.extract_strided_slice %207 {offsets = [0, 0, 8], sizes = [1, 16, 8], strides = [1, 1, 1]} : vector<1x16x32xf32> to vector<1x16x8xf32>
      "tpu.trace_start"() <{level = 10 : i32, message = "btd,bsd->bts"}> : () -> ()
      %cst_115 = arith.constant dense<0.000000e+00> : vector<1x8x16xf32>
      %228 = tpu.matmul %226, %227, %cst_115 {dimension_numbers = #tpu.dot_dimension_numbers<[2], [2], [1], [1], [0, 0, 0, 1, 1, 1], [0], [0]>} : vector<1x8x8xf32>, vector<1x16x8xf32>, vector<1x8x16xf32> -> vector<1x8x16xf32>
      "tpu.trace_stop"() : () -> ()
      %cst_116 = arith.constant 0.353553385 : f32
      %229 = vector.broadcast %cst_116 : f32 to vector<1x8x16xf32>
      %230 = arith.mulf %228, %229 : vector<1x8x16xf32>
      %cst_117 = arith.constant dense<0xFF800000> : vector<1x8xf32>
      %231 = vector.multi_reduction <maximumf>, %230, %cst_117 [2] : vector<1x8x16xf32> to vector<1x8xf32>
      %232 = vector.shape_cast %231 : vector<1x8xf32> to vector<1x8x1xf32>
      %233 = vector.broadcast %232 : vector<1x8x1xf32> to vector<1x8x16xf32>
      %234 = arith.subf %230, %233 : vector<1x8x16xf32>
      %235 = math.exp %234 : vector<1x8x16xf32>
      %cst_118 = arith.constant dense<0.000000e+00> : vector<1x8xf32>
      %236 = vector.multi_reduction <add>, %235, %cst_118 [2] : vector<1x8x16xf32> to vector<1x8xf32>
      %237 = vector.shape_cast %236 : vector<1x8xf32> to vector<1x8x1xf32>
      %238 = vector.broadcast %237 : vector<1x8x1xf32> to vector<1x8x16xf32>
      %239 = arith.divf %235, %238 : vector<1x8x16xf32>
      %240 = vector.extract_strided_slice %208 {offsets = [0, 0, 8], sizes = [1, 16, 8], strides = [1, 1, 1]} : vector<1x16x32xf32> to vector<1x16x8xf32>
      "tpu.trace_start"() <{level = 10 : i32, message = "bts,bsd->btd"}> : () -> ()
      %cst_119 = arith.constant dense<0.000000e+00> : vector<1x8x8xf32>
      %241 = tpu.matmul %239, %240, %cst_119 {dimension_numbers = #tpu.dot_dimension_numbers<[2], [1], [1], [2], [0, 0, 0, 1, 1, 2], [0], [0]>} : vector<1x8x16xf32>, vector<1x16x8xf32>, vector<1x8x8xf32> -> vector<1x8x8xf32>
      "tpu.trace_stop"() : () -> ()
      %c0_120 = arith.constant 0 : index
      %c0_121 = arith.constant 0 : index
      %c8_122 = arith.constant 8 : index
      %242 = vector.load %arg23[%c0_120, %c0_121, %c8_122] : memref<1x8x32xf32, #tpu.memory_space<vmem>>, vector<1x8x8xf32>
      tpu.vector_store %arg23[%c0_120, %c0_121, %c8_122], %241 {strides = array<i32>} : memref<1x8x32xf32, #tpu.memory_space<vmem>>, vector<1x8x8xf32>,
      %243 = vector.extract_strided_slice %206 {offsets = [0, 0, 16], sizes = [1, 8, 8], strides = [1, 1, 1]} : vector<1x8x32xf32> to vector<1x8x8xf32>
      %244 = vector.extract_strided_slice %207 {offsets = [0, 0, 16], sizes = [1, 16, 8], strides = [1, 1, 1]} : vector<1x16x32xf32> to vector<1x16x8xf32>
      "tpu.trace_start"() <{level = 10 : i32, message = "btd,bsd->bts"}> : () -> ()
      %cst_123 = arith.constant dense<0.000000e+00> : vector<1x8x16xf32>
      %245 = tpu.matmul %243, %244, %cst_123 {dimension_numbers = #tpu.dot_dimension_numbers<[2], [2], [1], [1], [0, 0, 0, 1, 1, 1], [0], [0]>} : vector<1x8x8xf32>, vector<1x16x8xf32>, vector<1x8x16xf32> -> vector<1x8x16xf32>
      "tpu.trace_stop"() : () -> ()
      %cst_124 = arith.constant 0.353553385 : f32
      %246 = vector.broadcast %cst_124 : f32 to vector<1x8x16xf32>
      %247 = arith.mulf %245, %246 : vector<1x8x16xf32>
      %cst_125 = arith.constant dense<0xFF800000> : vector<1x8xf32>
      %248 = vector.multi_reduction <maximumf>, %247, %cst_125 [2] : vector<1x8x16xf32> to vector<1x8xf32>
      %249 = vector.shape_cast %248 : vector<1x8xf32> to vector<1x8x1xf32>
      %250 = vector.broadcast %249 : vector<1x8x1xf32> to vector<1x8x16xf32>
      %251 = arith.subf %247, %250 : vector<1x8x16xf32>
      %252 = math.exp %251 : vector<1x8x16xf32>
      %cst_126 = arith.constant dense<0.000000e+00> : vector<1x8xf32>
      %253 = vector.multi_reduction <add>, %252, %cst_126 [2] : vector<1x8x16xf32> to vector<1x8xf32>
      %254 = vector.shape_cast %253 : vector<1x8xf32> to vector<1x8x1xf32>
      %255 = vector.broadcast %254 : vector<1x8x1xf32> to vector<1x8x16xf32>
      %256 = arith.divf %252, %255 : vector<1x8x16xf32>
      %257 = vector.extract_strided_slice %208 {offsets = [0, 0, 16], sizes = [1, 16, 8], strides = [1, 1, 1]} : vector<1x16x32xf32> to vector<1x16x8xf32>
      "tpu.trace_start"() <{level = 10 : i32, message = "bts,bsd->btd"}> : () -> ()
      %cst_127 = arith.constant dense<0.000000e+00> : vector<1x8x8xf32>
      %258 = tpu.matmul %256, %257, %cst_127 {dimension_numbers = #tpu.dot_dimension_numbers<[2], [1], [1], [2], [0, 0, 0, 1, 1, 2], [0], [0]>} : vector<1x8x16xf32>, vector<1x16x8xf32>, vector<1x8x8xf32> -> vector<1x8x8xf32>
      "tpu.trace_stop"() : () -> ()
      %c0_128 = arith.constant 0 : index
      %c0_129 = arith.constant 0 : index
      %c16_130 = arith.constant 16 : index
      %259 = vector.load %arg23[%c0_128, %c0_129, %c16_130] : memref<1x8x32xf32, #tpu.memory_space<vmem>>, vector<1x8x8xf32>
      tpu.vector_store %arg23[%c0_128, %c0_129, %c16_130], %258 {strides = array<i32>} : memref<1x8x32xf32, #tpu.memory_space<vmem>>, vector<1x8x8xf32>,
      %260 = vector.extract_strided_slice %206 {offsets = [0, 0, 24], sizes = [1, 8, 8], strides = [1, 1, 1]} : vector<1x8x32xf32> to vector<1x8x8xf32>
      %261 = vector.extract_strided_slice %207 {offsets = [0, 0, 24], sizes = [1, 16, 8], strides = [1, 1, 1]} : vector<1x16x32xf32> to vector<1x16x8xf32>
      "tpu.trace_start"() <{level = 10 : i32, message = "btd,bsd->bts"}> : () -> ()
      %cst_131 = arith.constant dense<0.000000e+00> : vector<1x8x16xf32>
      %262 = tpu.matmul %260, %261, %cst_131 {dimension_numbers = #tpu.dot_dimension_numbers<[2], [2], [1], [1], [0, 0, 0, 1, 1, 1], [0], [0]>} : vector<1x8x8xf32>, vector<1x16x8xf32>, vector<1x8x16xf32> -> vector<1x8x16xf32>
      "tpu.trace_stop"() : () -> ()
      %cst_132 = arith.constant 0.353553385 : f32
      %263 = vector.broadcast %cst_132 : f32 to vector<1x8x16xf32>
      %264 = arith.mulf %262, %263 : vector<1x8x16xf32>
      %cst_133 = arith.constant dense<0xFF800000> : vector<1x8xf32>
      %265 = vector.multi_reduction <maximumf>, %264, %cst_133 [2] : vector<1x8x16xf32> to vector<1x8xf32>
      %266 = vector.shape_cast %265 : vector<1x8xf32> to vector<1x8x1xf32>
      %267 = vector.broadcast %266 : vector<1x8x1xf32> to vector<1x8x16xf32>
      %268 = arith.subf %264, %267 : vector<1x8x16xf32>
      %269 = math.exp %268 : vector<1x8x16xf32>
      %cst_134 = arith.constant dense<0.000000e+00> : vector<1x8xf32>
      %270 = vector.multi_reduction <add>, %269, %cst_134 [2] : vector<1x8x16xf32> to vector<1x8xf32>
      %271 = vector.shape_cast %270 : vector<1x8xf32> to vector<1x8x1xf32>
      %272 = vector.broadcast %271 : vector<1x8x1xf32> to vector<1x8x16xf32>
      %273 = arith.divf %269, %272 : vector<1x8x16xf32>
      %274 = vector.extract_strided_slice %208 {offsets = [0, 0, 24], sizes = [1, 16, 8], strides = [1, 1, 1]} : vector<1x16x32xf32> to vector<1x16x8xf32>
      "tpu.trace_start"() <{level = 10 : i32, message = "bts,bsd->btd"}> : () -> ()
      %cst_135 = arith.constant dense<0.000000e+00> : vector<1x8x8xf32>
      %275 = tpu.matmul %273, %274, %cst_135 {dimension_numbers = #tpu.dot_dimension_numbers<[2], [1], [1], [2], [0, 0, 0, 1, 1, 2], [0], [0]>} : vector<1x8x16xf32>, vector<1x16x8xf32>, vector<1x8x8xf32> -> vector<1x8x8xf32>
      "tpu.trace_stop"() : () -> ()
      %c0_136 = arith.constant 0 : index
      %c0_137 = arith.constant 0 : index
      %c24_138 = arith.constant 24 : index
      %276 = vector.load %arg23[%c0_136, %c0_137, %c24_138] : memref<1x8x32xf32, #tpu.memory_space<vmem>>, vector<1x8x8xf32>
      tpu.vector_store %arg23[%c0_136, %c0_137, %c24_138], %275 {strides = array<i32>} : memref<1x8x32xf32, #tpu.memory_space<vmem>>, vector<1x8x8xf32>,
      %c0_139 = arith.constant 0 : index
      %c0_140 = arith.constant 0 : index
      %c0_141 = arith.constant 0 : index
      %277 = vector.load %arg23[%c0_139, %c0_140, %c0_141] : memref<1x8x32xf32, #tpu.memory_space<vmem>>, vector<1x8x32xf32>
      %278 = vector.shape_cast %277 : vector<1x8x32xf32> to vector<8x32xf32>
      %cst_142 = arith.constant dense<0.000000e+00> : vector<8x32xf32>
      %279 = tpu.matmul %278, %204, %cst_142 {dimension_numbers = #tpu.dot_dimension_numbers<[1], [0], [0], [1], [0, 0, 1, 1], [], []>} : vector<8x32xf32>, vector<32x32xf32>, vector<8x32xf32> -> vector<8x32xf32>
      %280 = vector.broadcast %205 : vector<1x32xf32> to vector<8x32xf32>
      %281 = arith.addf %279, %280 : vector<8x32xf32>
      %282 = vector.shape_cast %281 : vector<8x32xf32> to vector<1x8x32xf32>
      %283 = arith.addf %163, %282 : vector<1x8x32xf32>
      %c0_143 = arith.constant 0 : index
      %c0_144 = arith.constant 0 : index
      %c0_145 = arith.constant 0 : index
      %284 = vector.load %arg24[%c0_143, %c0_144, %c0_145] : memref<1x8x32xf32, #tpu.memory_space<vmem>>, vector<1x8x32xf32>
      tpu.vector_store %arg24[%c0_143, %c0_144, %c0_145], %283 {strides = array<i32>} : memref<1x8x32xf32, #tpu.memory_space<vmem>>, vector<1x8x32xf32>,
      %cst_146 = arith.constant 0.000000e+00 : f32
      %285 = vector.broadcast %cst_146 : f32 to vector<1x8x32xf32>
      %c0_147 = arith.constant 0 : index
      %c0_148 = arith.constant 0 : index
      %c0_149 = arith.constant 0 : index
      %286 = vector.load %arg25[%c0_147, %c0_148, %c0_149] : memref<1x8x32xf32, #tpu.memory_space<vmem>>, vector<1x8x32xf32>
      tpu.vector_store %arg25[%c0_147, %c0_148, %c0_149], %285 {strides = array<i32>} : memref<1x8x32xf32, #tpu.memory_space<vmem>>, vector<1x8x32xf32>,
    } else {
    }
    %c0 = arith.constant 0 : index
    %c0_1 = arith.constant 0 : index
    %c0_2 = arith.constant 0 : index
    %3 = vector.load %arg24[%c0, %c0_1, %c0_2] : memref<1x8x32xf32, #tpu.memory_space<vmem>>, vector<1x8x32xf32>
    %c0_3 = arith.constant 0 : index
    %c0_4 = arith.constant 0 : index
    %4 = vector.load %arg8[%c0_3, %c0_4] : memref<1x32xf32, #tpu.memory_space<vmem>>, vector<1x32xf32>
    %c0_5 = arith.constant 0 : index
    %c0_6 = arith.constant 0 : index
    %5 = vector.load %arg9[%c0_5, %c0_6] : memref<1x32xf32, #tpu.memory_space<vmem>>, vector<1x32xf32>
    %cst = arith.constant dense<0.000000e+00> : vector<1x8xf32>
    %6 = vector.multi_reduction <add>, %3, %cst [2] : vector<1x8x32xf32> to vector<1x8xf32>
    %7 = vector.shape_cast %6 : vector<1x8xf32> to vector<1x8x1xf32>
    %cst_7 = arith.constant 3.200000e+01 : f32
    %8 = vector.broadcast %cst_7 : f32 to vector<1x8x1xf32>
    %9 = arith.divf %7, %8 : vector<1x8x1xf32>
    %10 = vector.broadcast %9 : vector<1x8x1xf32> to vector<1x8x32xf32>
    %11 = arith.subf %3, %10 : vector<1x8x32xf32>
    %12 = arith.mulf %11, %11 : vector<1x8x32xf32>
    %cst_8 = arith.constant dense<0.000000e+00> : vector<1x8xf32>
    %13 = vector.multi_reduction <add>, %12, %cst_8 [2] : vector<1x8x32xf32> to vector<1x8xf32>
    %14 = vector.shape_cast %13 : vector<1x8xf32> to vector<1x8x1xf32>
    %cst_9 = arith.constant 3.200000e+01 : f32
    %15 = vector.broadcast %cst_9 : f32 to vector<1x8x1xf32>
    %16 = arith.divf %14, %15 : vector<1x8x1xf32>
    %17 = vector.broadcast %9 : vector<1x8x1xf32> to vector<1x8x32xf32>
    %18 = arith.subf %3, %17 : vector<1x8x32xf32>
    %cst_10 = arith.constant 9.99999974E-6 : f32
    %19 = vector.broadcast %cst_10 : f32 to vector<1x8x1xf32>
    %20 = arith.addf %16, %19 : vector<1x8x1xf32>
    %21 = math.rsqrt %20 : vector<1x8x1xf32>
    %22 = vector.broadcast %21 : vector<1x8x1xf32> to vector<1x8x32xf32>
    %23 = arith.mulf %18, %22 : vector<1x8x32xf32>
    %24 = vector.shape_cast %4 : vector<1x32xf32> to vector<1x1x32xf32>
    %25 = vector.broadcast %24 : vector<1x1x32xf32> to vector<1x8x32xf32>
    %26 = arith.mulf %23, %25 : vector<1x8x32xf32>
    %27 = vector.shape_cast %5 : vector<1x32xf32> to vector<1x1x32xf32>
    %28 = vector.broadcast %27 : vector<1x1x32xf32> to vector<1x8x32xf32>
    %29 = arith.addf %26, %28 : vector<1x8x32xf32>
    %30 = vector.shape_cast %29 : vector<1x8x32xf32> to vector<8x32xf32>
    %c0_11 = arith.constant 0 : index
    %c0_12 = arith.constant 0 : index
    %31 = vector.load %arg18[%c0_11, %c0_12] : memref<32x64xf32, #tpu.memory_space<vmem>>, vector<32x64xf32>
    %cst_13 = arith.constant dense<0.000000e+00> : vector<8x64xf32>
    %32 = tpu.matmul %30, %31, %cst_13 {dimension_numbers = #tpu.dot_dimension_numbers<[1], [0], [0], [1], [0, 0, 1, 1], [], []>} : vector<8x32xf32>, vector<32x64xf32>, vector<8x64xf32> -> vector<8x64xf32>
    %c0_14 = arith.constant 0 : index
    %c0_15 = arith.constant 0 : index
    %33 = vector.load %arg19[%c0_14, %c0_15] : memref<1x64xf32, #tpu.memory_space<vmem>>, vector<1x64xf32>
    %34 = vector.broadcast %33 : vector<1x64xf32> to vector<8x64xf32>
    %35 = arith.addf %32, %34 : vector<8x64xf32>
    %cst_16 = arith.constant 0.000000e+00 : f32
    %36 = vector.broadcast %cst_16 : f32 to vector<8x64xf32>
    %37 = arith.maximumf %35, %36 : vector<8x64xf32>
    %c0_17 = arith.constant 0 : index
    %c0_18 = arith.constant 0 : index
    %c0_19 = arith.constant 0 : index
    %38 = vector.load %arg25[%c0_17, %c0_18, %c0_19] : memref<1x8x32xf32, #tpu.memory_space<vmem>>, vector<1x8x32xf32>
    %c0_20 = arith.constant 0 : index
    %c0_21 = arith.constant 0 : index
    %39 = vector.load %arg20[%c0_20, %c0_21] : memref<64x32xf32, #tpu.memory_space<vmem>>, vector<64x32xf32>
    %cst_22 = arith.constant dense<0.000000e+00> : vector<8x32xf32>
    %40 = tpu.matmul %37, %39, %cst_22 {dimension_numbers = #tpu.dot_dimension_numbers<[1], [0], [0], [1], [0, 0, 1, 1], [], []>} : vector<8x64xf32>, vector<64x32xf32>, vector<8x32xf32> -> vector<8x32xf32>
    %41 = vector.shape_cast %40 : vector<8x32xf32> to vector<1x8x32xf32>
    %42 = arith.addf %38, %41 : vector<1x8x32xf32>
    %c0_23 = arith.constant 0 : index
    %c0_24 = arith.constant 0 : index
    %c0_25 = arith.constant 0 : index
    %43 = vector.load %arg25[%c0_23, %c0_24, %c0_25] : memref<1x8x32xf32, #tpu.memory_space<vmem>>, vector<1x8x32xf32>
    tpu.vector_store %arg25[%c0_23, %c0_24, %c0_25], %42 {strides = array<i32>} : memref<1x8x32xf32, #tpu.memory_space<vmem>>, vector<1x8x32xf32>,
    %c0_i32_26 = arith.constant 0 : i32
    %44 = arith.cmpi eq, %arg1, %c0_i32_26 : i32
    %45 = arith.extui %44 : i1 to i32
    %c0_i32_27 = arith.constant 0 : i32
    %46 = arith.cmpi ne, %45, %c0_i32_27 : i32
    scf.if %46 {
      %c0_28 = arith.constant 0 : index
      %c0_29 = arith.constant 0 : index
      %c0_30 = arith.constant 0 : index
      %47 = vector.load %arg24[%c0_28, %c0_29, %c0_30] : memref<1x8x32xf32, #tpu.memory_space<vmem>>, vector<1x8x32xf32>
      %c0_31 = arith.constant 0 : index
      %c0_32 = arith.constant 0 : index
      %c0_33 = arith.constant 0 : index
      %48 = vector.load %arg25[%c0_31, %c0_32, %c0_33] : memref<1x8x32xf32, #tpu.memory_space<vmem>>, vector<1x8x32xf32>
      %49 = arith.addf %47, %48 : vector<1x8x32xf32>
      %c0_34 = arith.constant 0 : index
      %c0_35 = arith.constant 0 : index
      %50 = vector.load %arg21[%c0_34, %c0_35] : memref<1x32xf32, #tpu.memory_space<vmem>>, vector<1x32xf32>
      %51 = vector.shape_cast %50 : vector<1x32xf32> to vector<1x1x32xf32>
      %52 = vector.broadcast %51 : vector<1x1x32xf32> to vector<1x8x32xf32>
      %53 = arith.addf %49, %52 : vector<1x8x32xf32>
      %c0_36 = arith.constant 0 : index
      %c0_37 = arith.constant 0 : index
      %c0_38 = arith.constant 0 : index
      %54 = vector.load %arg22[%c0_36, %c0_37, %c0_38] : memref<1x8x32xf32, #tpu.memory_space<vmem>>, vector<1x8x32xf32>
      tpu.vector_store %arg22[%c0_36, %c0_37, %c0_38], %53 {strides = array<i32>} : memref<1x8x32xf32, #tpu.memory_space<vmem>>, vector<1x8x32xf32>,
    } else {
    }
    return
  }
  func.func @transform_0(%arg0: i32, %arg1: i32) -> (i32, i32, i32) {
    %c0_i32 = arith.constant 0 : i32
    %c0_i32_0 = arith.constant 0 : i32
    %c0_i32_1 = arith.constant 0 : i32
    return %arg0, %c0_i32, %c0_i32_0 : i32, i32, i32
  }
  func.func @transform_1(%arg0: i32, %arg1: i32) -> (i32, i32, i32) {
    %c0_i32 = arith.constant 0 : i32
    %c0_i32_0 = arith.constant 0 : i32
    %c0_i32_1 = arith.constant 0 : i32
    return %arg0, %c0_i32, %c0_i32_0 : i32, i32, i32
  }
  func.func @transform_2(%arg0: i32, %arg1: i32) -> (i32, i32) {
    %c0_i32 = arith.constant 0 : i32
    %c0_i32_0 = arith.constant 0 : i32
    %c0_i32_1 = arith.constant 0 : i32
    return %c0_i32, %c0_i32_0 : i32, i32
  }
  func.func @transform_3(%arg0: i32, %arg1: i32) -> (i32, i32) {
    %c0_i32 = arith.constant 0 : i32
    %c0_i32_0 = arith.constant 0 : i32
    %c0_i32_1 = arith.constant 0 : i32
    return %c0_i32, %c0_i32_0 : i32, i32
  }
  func.func @transform_4(%arg0: i32, %arg1: i32) -> (i32, i32) {
    %c0_i32 = arith.constant 0 : i32
    %c0_i32_0 = arith.constant 0 : i32
    %c0_i32_1 = arith.constant 0 : i32
    return %c0_i32, %c0_i32_0 : i32, i32
  }
  func.func @transform_5(%arg0: i32, %arg1: i32) -> (i32, i32) {
    %c0_i32 = arith.constant 0 : i32
    %c0_i32_0 = arith.constant 0 : i32
    %c0_i32_1 = arith.constant 0 : i32
    return %c0_i32, %c0_i32_0 : i32, i32
  }
  func.func @transform_6(%arg0: i32, %arg1: i32) -> (i32, i32) {
    %c0_i32 = arith.constant 0 : i32
    %c0_i32_0 = arith.constant 0 : i32
    %c0_i32_1 = arith.constant 0 : i32
    return %c0_i32, %c0_i32_0 : i32, i32
  }
  func.func @transform_7(%arg0: i32, %arg1: i32) -> (i32, i32) {
    %c0_i32 = arith.constant 0 : i32
    %c0_i32_0 = arith.constant 0 : i32
    %c0_i32_1 = arith.constant 0 : i32
    return %c0_i32, %c0_i32_0 : i32, i32
  }
  func.func @transform_8(%arg0: i32, %arg1: i32) -> (i32, i32) {
    %c0_i32 = arith.constant 0 : i32
    %c0_i32_0 = arith.constant 0 : i32
    %c0_i32_1 = arith.constant 0 : i32
    return %c0_i32, %c0_i32_0 : i32, i32
  }
  func.func @transform_9(%arg0: i32, %arg1: i32) -> (i32, i32) {
    %c0_i32 = arith.constant 0 : i32
    %c0_i32_0 = arith.constant 0 : i32
    %c0_i32_1 = arith.constant 0 : i32
    return %c0_i32, %c0_i32_0 : i32, i32
  }
  func.func @transform_10(%arg0: i32, %arg1: i32) -> (i32, i32) {
    %c0_i32 = arith.constant 0 : i32
    %c0_i32_0 = arith.constant 0 : i32
    %c0_i32_1 = arith.constant 0 : i32
    return %c0_i32, %c0_i32_0 : i32, i32
  }
  func.func @transform_11(%arg0: i32, %arg1: i32) -> (i32, i32) {
    %c0_i32 = arith.constant 0 : i32
    %c0_i32_0 = arith.constant 0 : i32
    %c0_i32_1 = arith.constant 0 : i32
    return %c0_i32, %c0_i32_0 : i32, i32
  }
  func.func @transform_12(%arg0: i32, %arg1: i32) -> (i32, i32) {
    %c0_i32 = arith.constant 0 : i32
    %c0_i32_0 = arith.constant 0 : i32
    %c0_i32_1 = arith.constant 0 : i32
    return %c0_i32, %c0_i32_0 : i32, i32
  }
  func.func @transform_13(%arg0: i32, %arg1: i32) -> (i32, i32) {
    %c0_i32 = arith.constant 0 : i32
    %c0_i32_0 = arith.constant 0 : i32
    %c0_i32_1 = arith.constant 0 : i32
    return %c0_i32, %c0_i32_0 : i32, i32
  }
  func.func @transform_14(%arg0: i32, %arg1: i32) -> (i32, i32) {
    %c0_i32 = arith.constant 0 : i32
    %c0_i32_0 = arith.constant 0 : i32
    %c0_i32_1 = arith.constant 0 : i32
    return %c0_i32, %c0_i32_0 : i32, i32
  }
  func.func @transform_15(%arg0: i32, %arg1: i32) -> (i32, i32) {
    %c0_i32 = arith.constant 0 : i32
    %c0_i32_0 = arith.constant 0 : i32
    %c0_i32_1 = arith.constant 0 : i32
    return %c0_i32, %c0_i32_0 : i32, i32
  }
  func.func @transform_16(%arg0: i32, %arg1: i32) -> (i32, i32) {
    %c0_i32 = arith.constant 0 : i32
    %c0_i32_0 = arith.constant 0 : i32
    return %c0_i32, %arg1 : i32, i32
  }
  func.func @transform_17(%arg0: i32, %arg1: i32) -> (i32, i32) {
    %c0_i32 = arith.constant 0 : i32
    %c0_i32_0 = arith.constant 0 : i32
    return %c0_i32, %arg1 : i32, i32
  }
  func.func @transform_18(%arg0: i32, %arg1: i32) -> (i32, i32) {
    %c0_i32 = arith.constant 0 : i32
    %c0_i32_0 = arith.constant 0 : i32
    return %arg1, %c0_i32 : i32, i32
  }
  func.func @transform_19(%arg0: i32, %arg1: i32) -> (i32, i32) {
    %c0_i32 = arith.constant 0 : i32
    %c0_i32_0 = arith.constant 0 : i32
    %c0_i32_1 = arith.constant 0 : i32
    return %c0_i32, %c0_i32_0 : i32, i32
  }
  func.func @transform_20(%arg0: i32, %arg1: i32) -> (i32, i32, i32) {
    %c0_i32 = arith.constant 0 : i32
    %c0_i32_0 = arith.constant 0 : i32
    %c0_i32_1 = arith.constant 0 : i32
    return %arg0, %c0_i32, %c0_i32_0 : i32, i32, i32
  }
}

</mosaic_0001>

<llo_original>
// kernel: tpu_custom_call.1
$region0: #{tpu_custom_call.1}
  #allocation0 [shape = 'u32[]', space=smem, size = 0x4, offset = 0x4, fixed_abs, tag = 'smem constant byte address 0x4 - core index']
  #allocation1 [shape = 'u32[144,128]{1,0:T(1,128)}', space=vmem, size = 0x12000, scoped, tag = 'internal scratch']
  #allocation2 [shape = 'f32[1,8,32]{2,1,0:T(8,128)}', space=vmem, size = 0x1000, scoped, tag = 'scratch operand']
  #allocation3 [shape = 'f32[1,8,32]{2,1,0:T(8,128)}', space=vmem, size = 0x1000, scoped, tag = 'scratch operand']
  #allocation4 [shape = 'f32[1,8,32]{2,1,0:T(8,128)}', space=vmem, size = 0x1000, scoped, tag = 'scratch operand']
  %s0 = inlined_call_operand.hbm [shape: f32[2,8,32], index: 0, kind: input, shape index: {}]
  %s1 = inlined_call_operand.vmem [shape: f32[2,16,32], index: 1, kind: input, shape index: {}]
  %s2 = inlined_call_operand.hbm [shape: f32[1,32], index: 2, kind: input, shape index: {}]
  %s3 = inlined_call_operand.hbm [shape: f32[1,32], index: 3, kind: input, shape index: {}]
  %s4 = inlined_call_operand.hbm [shape: f32[1,32], index: 4, kind: input, shape index: {}]
  %s5 = inlined_call_operand.hbm [shape: f32[1,32], index: 5, kind: input, shape index: {}]
  %s6 = inlined_call_operand.hbm [shape: f32[1,32], index: 6, kind: input, shape index: {}]
  %s7 = inlined_call_operand.hbm [shape: f32[1,32], index: 7, kind: input, shape index: {}]
  %s8 = inlined_call_operand.vmem [shape: f32[32,96], index: 8, kind: input, shape index: {}]
  %s9 = inlined_call_operand.hbm [shape: f32[1,96], index: 9, kind: input, shape index: {}]
  %s10 = inlined_call_operand.vmem [shape: f32[32,32], index: 10, kind: input, shape index: {}]
  %s11 = inlined_call_operand.hbm [shape: f32[1,32], index: 11, kind: input, shape index: {}]
  %s12 = inlined_call_operand.hbm [shape: f32[32,96], index: 12, kind: input, shape index: {}]
  %s13 = inlined_call_operand.hbm [shape: f32[1,96], index: 13, kind: input, shape index: {}]
  %s14 = inlined_call_operand.hbm [shape: f32[32,32], index: 14, kind: input, shape index: {}]
  %s15 = inlined_call_operand.hbm [shape: f32[1,32], index: 15, kind: input, shape index: {}]
  %s16 = inlined_call_operand.hbm [shape: f32[32,64], index: 16, kind: input, shape index: {}]
  %s17 = inlined_call_operand.hbm [shape: f32[1,64], index: 17, kind: input, shape index: {}]
  %s18 = inlined_call_operand.vmem [shape: f32[64,32], index: 18, kind: input, shape index: {}]
  %s19 = inlined_call_operand.vmem [shape: f32[1,32], index: 19, kind: input, shape index: {}]
  %s20 = inlined_call_operand.hbm [shape: f32[2,8,32], index: 20, kind: output, shape index: {}]
  %s21 = sld [smem:[#allocation0]]
  $region181: #{tpu_custom_call.1} parent=0
    _
  %s23 = ssub.s32 1, %s21
  %s24 = scalar_select 0, %s23, %s21
  $region1: #{tpu_custom_call.1} parent=0
    #allocation5 [shape = 'u8[8192]{0}', space=vmem, size = 0x2000, scoped, tag = 'input window, operand 0']
    #allocation6 [shape = 's32[2]{0}', space=sflag, size = 0x8, scoped, tag = 'scoped memory for tpu_custom_call.1']
    #allocation7 [shape = 's32[2]{0}', space=sflag, size = 0x8, scoped, tag = 'scoped memory for tpu_custom_call.1']
    #allocation8 [shape = 'u8[512]{0}', space=vmem, size = 0x400, scoped, tag = 'input window, operand 2, single buffered']
    #allocation9 [shape = 's32[1]{0}', space=sflag, size = 0x4, scoped, tag = 'scoped memory for tpu_custom_call.1']
    #allocation10 [shape = 'u8[512]{0}', space=vmem, size = 0x400, scoped, tag = 'input window, operand 3, single buffered']
    #allocation11 [shape = 'u8[512]{0}', space=vmem, size = 0x400, scoped, tag = 'input window, operand 4, single buffered']
    #allocation12 [shape = 's32[1]{0}', space=sflag, size = 0x4, scoped, tag = 'scoped memory for tpu_custom_call.1']
    #allocation13 [shape = 'u8[512]{0}', space=vmem, size = 0x400, scoped, tag = 'input window, operand 5, single buffered']
    #allocation14 [shape = 'u8[512]{0}', space=vmem, size = 0x400, scoped, tag = 'input window, operand 6, single buffered']
    #allocation15 [shape = 's32[1]{0}', space=sflag, size = 0x4, scoped, tag = 'scoped memory for tpu_custom_call.1']
    #allocation16 [shape = 'u8[512]{0}', space=vmem, size = 0x400, scoped, tag = 'input window, operand 7, single buffered']
    #allocation17 [shape = 'u8[512]{0}', space=vmem, size = 0x400, scoped, tag = 'input window, operand 9, single buffered']
    #allocation18 [shape = 's32[1]{0}', space=sflag, size = 0x4, scoped, tag = 'scoped memory for tpu_custom_call.1']
    #allocation19 [shape = 'u8[512]{0}', space=vmem, size = 0x400, scoped, tag = 'input window, operand 11, single buffered']
    #allocation20 [shape = 'u8[16384]{0}', space=vmem, size = 0x4000, scoped, tag = 'input window, operand 12, single buffered']
    #allocation21 [shape = 's32[1]{0}', space=sflag, size = 0x4, scoped, tag = 'scoped memory for tpu_custom_call.1']
    #allocation22 [shape = 'u8[512]{0}', space=vmem, size = 0x400, scoped, tag = 'input window, operand 13, single buffered']
    #allocation23 [shape = 'u8[16384]{0}', space=vmem, size = 0x4000, scoped, tag = 'input window, operand 14, single buffered']
    #allocation24 [shape = 's32[1]{0}', space=sflag, size = 0x4, scoped, tag = 'scoped memory for tpu_custom_call.1']
    #allocation25 [shape = 'u8[512]{0}', space=vmem, size = 0x400, scoped, tag = 'input window, operand 15, single buffered']
    #allocation26 [shape = 'u8[16384]{0}', space=vmem, size = 0x4000, scoped, tag = 'input window, operand 16, single buffered']
    #allocation27 [shape = 's32[1]{0}', space=sflag, size = 0x4, scoped, tag = 'scoped memory for tpu_custom_call.1']
    #allocation28 [shape = 'u8[512]{0}', space=vmem, size = 0x400, scoped, tag = 'input window, operand 17, single buffered']
    #allocation29 [shape = 'u8[8192]{0}', space=vmem, size = 0x2000, scoped, tag = 'output window, operand 0']
    %25 = vsyncpa [#allocation6], 0
    %s26 = scalar_lea.sflag [#allocation6], 1
    %27 = vsyncpa %s26, 0
    %28 = vsyncpa [#allocation9], 0
    %29 = vsyncpa [#allocation12], 0
    %30 = vsyncpa [#allocation15], 0
    %31 = vsyncpa [#allocation18], 0
    %32 = vsyncpa [#allocation21], 0
    %33 = vsyncpa [#allocation24], 0
    %34 = vsyncpa [#allocation27], 0
    %35 = vsyncpa [#allocation7], 0
    %s36 = scalar_lea.sflag [#allocation7], 1
    %37 = vsyncpa %s36, 0
    loop: start=0, step=1, limit=4
    $region2: #{tpu_custom_call.1} parent=1 // loop_pre_header
      _
    $region3: #{tpu_custom_call.1} parent=1 // loop_header
      %s39 = sphi 0, %s43
      %p40 = scmp.ge.s32.totalorder %s39, 4
      %s46 = sphi 0, %s58
      %s47 = sphi 0, %s54
      %s48 = sphi 0, %s46
      %s49 = sphi 0, %s47
      %s50 = sphi 0, %s48
      %s51 = sphi 0, %s49
      %s61 = sphi 0, %s63
      %s64 = sphi 0, %s61
      %s65 = sphi 0, %s64
      %s81 = sphi 0, %s65
      %s87 = sphi 0, %s89
      %s90 = sphi 0, %s87
      %s91 = sphi 0, %s90
      %s107 = sphi 0, %s91
      %s111 = sphi 0, %s111
      %s113 = sphi 0, %s111
      %s114 = sphi 0, %s113
      %s128 = sphi 0, %s114
      %s132 = sphi 0, %s132
      %s134 = sphi 0, %s132
      %s135 = sphi 0, %s134
      %s149 = sphi 0, %s135
      %s153 = sphi 0, %s153
      %s155 = sphi 0, %s153
      %s156 = sphi 0, %s155
      %s170 = sphi 0, %s156
      %s174 = sphi 0, %s174
      %s176 = sphi 0, %s174
      %s177 = sphi 0, %s176
      %s191 = sphi 0, %s177
      %s195 = sphi 0, %s195
      %s197 = sphi 0, %s195
      %s198 = sphi 0, %s197
      %s212 = sphi 0, %s198
      %s216 = sphi 0, %s216
      %s218 = sphi 0, %s216
      %s219 = sphi 0, %s218
      %s233 = sphi 0, %s219
      %s237 = sphi 0, %s237
      %s239 = sphi 0, %s237
      %s240 = sphi 0, %s239
      %s254 = sphi 0, %s240
      %s258 = sphi 0, %s258
      %s260 = sphi 0, %s258
      %s261 = sphi 0, %s260
      %s275 = sphi 0, %s261
      %s279 = sphi 0, %s279
      %s281 = sphi 0, %s279
      %s282 = sphi 0, %s281
      %s296 = sphi 0, %s282
      %s300 = sphi 0, %s300
      %s302 = sphi 0, %s300
      %s303 = sphi 0, %s302
      %s317 = sphi 0, %s303
      %s321 = sphi 0, %s321
      %s323 = sphi 0, %s321
      %s324 = sphi 0, %s323
      %s338 = sphi 0, %s324
      %s342 = sphi 0, %s342
      %s344 = sphi 0, %s342
      %s345 = sphi 0, %s344
      %s359 = sphi 0, %s345
      %s363 = sphi 0, %s363
      %s365 = sphi 0, %s363
      %s366 = sphi 0, %s365
      %s380 = sphi 0, %s366
      %s384 = sphi 0, %s384
      %s386 = sphi 0, %s384
      %s387 = sphi 0, %s386
      %s401 = sphi 0, %s387
      %s407 = sphi 0, %s409
      %s410 = sphi 0, %s407
      %s411 = sphi 0, %s410
      %s427 = sphi 0, %s411
      %s433 = sphi 0, %s435
      %s436 = sphi 0, %s433
      %s437 = sphi 0, %s436
      %s453 = sphi 0, %s437
      %s459 = sphi 0, %s461
      %s462 = sphi 0, %s459
      %s463 = sphi 0, %s462
      %s479 = sphi 0, %s463
      %s483 = sphi 0, %s483
      %s485 = sphi 0, %s483
      %s486 = sphi 0, %s485
      %s500 = sphi 0, %s486
      %s506 = sphi 0, %s508
      %s509 = sphi 0, %s506
      %s510 = sphi 0, %s509
      %s526 = sphi 0, %s510
    $region4: #{tpu_custom_call.1} parent=1 // loop_header_branch
      %42 = sbr.rel (%p40) target = $region8
    $region5: #{tpu_custom_call.1} parent=1 // loop_body
      %s44 = ssub.s32 %s39, 1
      %s45 = ssub.s32 %s39, 2
      %s52 = sadd.s32 1, %s47
      %p53 = scmp.ge.s32.totalorder %s52, 1
      %s54 = scalar_select %p53, 0, %s52
      %s55 = sadd.s32 1, %s46
      %s56 = scalar_select %p53, %s55, %s46
      %p57 = scmp.ge.s32.totalorder %s56, 2
      %s58 = scalar_select %p57, 0, %s56
      %s59 = ssub.s32 %s46, %s58
      %p60 = scmp.eq.s32.totalorder %s59, 0
      %s62 = sadd.s32 %s61, 1
      %s63 = scalar_select %p60, %s61, %s62
      %p66 = pneg %p60
      %p67 = scmp.eq.s32.totalorder %s39, 1
      %p68 = por %p66, %p67
      %p69 = scmp.ne.s32.totalorder %s61, %s64
      %p70 = scmp.eq.s32.totalorder %s39, 0
      %p71 = por %p69, %p70
      %p72 = scmp.ne.s32.totalorder %s61, %s64
      %p73 = scmp.eq.s32.totalorder %s44, 1
      %p74 = por %p72, %p73
      %p75 = scmp.ne.s32.totalorder %s64, %s65
      %p76 = scmp.eq.s32.totalorder %s44, 0
      %p77 = por %p75, %p76
      %p78 = scmp.ne.s32.totalorder %s64, %s65
      %p79 = scmp.eq.s32.totalorder %s45, 1
      %p80 = por %p78, %p79
      %p82 = scmp.ne.s32.totalorder %s65, %s81
      %p83 = scmp.eq.s32.totalorder %s45, 0
      %p84 = por %p82, %p83
      %s85 = ssub.s32 %s46, %s58
      %p86 = scmp.eq.s32.totalorder %s85, 0
      %s88 = sadd.s32 %s87, 1
      %s89 = scalar_select %p86, %s87, %s88
      %p92 = pneg %p86
      %p93 = scmp.eq.s32.totalorder %s39, 1
      %p94 = por %p92, %p93
      %p95 = scmp.ne.s32.totalorder %s87, %s90
      %p96 = scmp.eq.s32.totalorder %s39, 0
      %p97 = por %p95, %p96
      %p98 = scmp.ne.s32.totalorder %s87, %s90
      %p99 = scmp.eq.s32.totalorder %s44, 1
      %p100 = por %p98, %p99
      %p101 = scmp.ne.s32.totalorder %s90, %s91
      %p102 = scmp.eq.s32.totalorder %s44, 0
      %p103 = por %p101, %p102
      %p104 = scmp.ne.s32.totalorder %s90, %s91
      %p105 = scmp.eq.s32.totalorder %s45, 1
      %p106 = por %p104, %p105
      %p108 = scmp.ne.s32.totalorder %s91, %s107
      %p109 = scmp.eq.s32.totalorder %s45, 0
      %p110 = por %p108, %p109
      %s112 = sadd.s32 %s111, 1
      %p115 = scmp.eq.s32.totalorder %s39, 1
      %p116 = scmp.ne.s32.totalorder %s111, %s113
      %p117 = scmp.eq.s32.totalorder %s39, 0
      %p118 = por %p116, %p117
      %p119 = scmp.ne.s32.totalorder %s111, %s113
      %p120 = scmp.eq.s32.totalorder %s44, 1
      %p121 = por %p119, %p120
      %p122 = scmp.ne.s32.totalorder %s113, %s114
      %p123 = scmp.eq.s32.totalorder %s44, 0
      %p124 = por %p122, %p123
      %p125 = scmp.ne.s32.totalorder %s113, %s114
      %p126 = scmp.eq.s32.totalorder %s45, 1
      %p127 = por %p125, %p126
      %p129 = scmp.ne.s32.totalorder %s114, %s128
      %p130 = scmp.eq.s32.totalorder %s45, 0
      %p131 = por %p129, %p130
      %s133 = sadd.s32 %s132, 1
      %p136 = scmp.eq.s32.totalorder %s39, 1
      %p137 = scmp.ne.s32.totalorder %s132, %s134
      %p138 = scmp.eq.s32.totalorder %s39, 0
      %p139 = por %p137, %p138
      %p140 = scmp.ne.s32.totalorder %s132, %s134
      %p141 = scmp.eq.s32.totalorder %s44, 1
      %p142 = por %p140, %p141
      %p143 = scmp.ne.s32.totalorder %s134, %s135
      %p144 = scmp.eq.s32.totalorder %s44, 0
      %p145 = por %p143, %p144
      %p146 = scmp.ne.s32.totalorder %s134, %s135
      %p147 = scmp.eq.s32.totalorder %s45, 1
      %p148 = por %p146, %p147
      %p150 = scmp.ne.s32.totalorder %s135, %s149
      %p151 = scmp.eq.s32.totalorder %s45, 0
      %p152 = por %p150, %p151
      %s154 = sadd.s32 %s153, 1
      %p157 = scmp.eq.s32.totalorder %s39, 1
      %p158 = scmp.ne.s32.totalorder %s153, %s155
      %p159 = scmp.eq.s32.totalorder %s39, 0
      %p160 = por %p158, %p159
      %p161 = scmp.ne.s32.totalorder %s153, %s155
      %p162 = scmp.eq.s32.totalorder %s44, 1
      %p163 = por %p161, %p162
      %p164 = scmp.ne.s32.totalorder %s155, %s156
      %p165 = scmp.eq.s32.totalorder %s44, 0
      %p166 = por %p164, %p165
      %p167 = scmp.ne.s32.totalorder %s155, %s156
      %p168 = scmp.eq.s32.totalorder %s45, 1
      %p169 = por %p167, %p168
      %p171 = scmp.ne.s32.totalorder %s156, %s170
      %p172 = scmp.eq.s32.totalorder %s45, 0
      %p173 = por %p171, %p172
      %s175 = sadd.s32 %s174, 1
      %p178 = scmp.eq.s32.totalorder %s39, 1
      %p179 = scmp.ne.s32.totalorder %s174, %s176
      %p180 = scmp.eq.s32.totalorder %s39, 0
      %p181 = por %p179, %p180
      %p182 = scmp.ne.s32.totalorder %s174, %s176
      %p183 = scmp.eq.s32.totalorder %s44, 1
      %p184 = por %p182, %p183
      %p185 = scmp.ne.s32.totalorder %s176, %s177
      %p186 = scmp.eq.s32.totalorder %s44, 0
      %p187 = por %p185, %p186
      %p188 = scmp.ne.s32.totalorder %s176, %s177
      %p189 = scmp.eq.s32.totalorder %s45, 1
      %p190 = por %p188, %p189
      %p192 = scmp.ne.s32.totalorder %s177, %s191
      %p193 = scmp.eq.s32.totalorder %s45, 0
      %p194 = por %p192, %p193
      %s196 = sadd.s32 %s195, 1
      %p199 = scmp.eq.s32.totalorder %s39, 1
      %p200 = scmp.ne.s32.totalorder %s195, %s197
      %p201 = scmp.eq.s32.totalorder %s39, 0
      %p202 = por %p200, %p201
      %p203 = scmp.ne.s32.totalorder %s195, %s197
      %p204 = scmp.eq.s32.totalorder %s44, 1
      %p205 = por %p203, %p204
      %p206 = scmp.ne.s32.totalorder %s197, %s198
      %p207 = scmp.eq.s32.totalorder %s44, 0
      %p208 = por %p206, %p207
      %p209 = scmp.ne.s32.totalorder %s197, %s198
      %p210 = scmp.eq.s32.totalorder %s45, 1
      %p211 = por %p209, %p210
      %p213 = scmp.ne.s32.totalorder %s198, %s212
      %p214 = scmp.eq.s32.totalorder %s45, 0
      %p215 = por %p213, %p214
      %s217 = sadd.s32 %s216, 1
      %p220 = scmp.eq.s32.totalorder %s39, 1
      %p221 = scmp.ne.s32.totalorder %s216, %s218
      %p222 = scmp.eq.s32.totalorder %s39, 0
      %p223 = por %p221, %p222
      %p224 = scmp.ne.s32.totalorder %s216, %s218
      %p225 = scmp.eq.s32.totalorder %s44, 1
      %p226 = por %p224, %p225
      %p227 = scmp.ne.s32.totalorder %s218, %s219
      %p228 = scmp.eq.s32.totalorder %s44, 0
      %p229 = por %p227, %p228
      %p230 = scmp.ne.s32.totalorder %s218, %s219
      %p231 = scmp.eq.s32.totalorder %s45, 1
      %p232 = por %p230, %p231
      %p234 = scmp.ne.s32.totalorder %s219, %s233
      %p235 = scmp.eq.s32.totalorder %s45, 0
      %p236 = por %p234, %p235
      %s238 = sadd.s32 %s237, 1
      %p241 = scmp.eq.s32.totalorder %s39, 1
      %p242 = scmp.ne.s32.totalorder %s237, %s239
      %p243 = scmp.eq.s32.totalorder %s39, 0
      %p244 = por %p242, %p243
      %p245 = scmp.ne.s32.totalorder %s237, %s239
      %p246 = scmp.eq.s32.totalorder %s44, 1
      %p247 = por %p245, %p246
      %p248 = scmp.ne.s32.totalorder %s239, %s240
      %p249 = scmp.eq.s32.totalorder %s44, 0
      %p250 = por %p248, %p249
      %p251 = scmp.ne.s32.totalorder %s239, %s240
      %p252 = scmp.eq.s32.totalorder %s45, 1
      %p253 = por %p251, %p252
      %p255 = scmp.ne.s32.totalorder %s240, %s254
      %p256 = scmp.eq.s32.totalorder %s45, 0
      %p257 = por %p255, %p256
      %s259 = sadd.s32 %s258, 1
      %p262 = scmp.eq.s32.totalorder %s39, 1
      %p263 = scmp.ne.s32.totalorder %s258, %s260
      %p264 = scmp.eq.s32.totalorder %s39, 0
      %p265 = por %p263, %p264
      %p266 = scmp.ne.s32.totalorder %s258, %s260
      %p267 = scmp.eq.s32.totalorder %s44, 1
      %p268 = por %p266, %p267
      %p269 = scmp.ne.s32.totalorder %s260, %s261
      %p270 = scmp.eq.s32.totalorder %s44, 0
      %p271 = por %p269, %p270
      %p272 = scmp.ne.s32.totalorder %s260, %s261
      %p273 = scmp.eq.s32.totalorder %s45, 1
      %p274 = por %p272, %p273
      %p276 = scmp.ne.s32.totalorder %s261, %s275
      %p277 = scmp.eq.s32.totalorder %s45, 0
      %p278 = por %p276, %p277
      %s280 = sadd.s32 %s279, 1
      %p283 = scmp.eq.s32.totalorder %s39, 1
      %p284 = scmp.ne.s32.totalorder %s279, %s281
      %p285 = scmp.eq.s32.totalorder %s39, 0
      %p286 = por %p284, %p285
      %p287 = scmp.ne.s32.totalorder %s279, %s281
      %p288 = scmp.eq.s32.totalorder %s44, 1
      %p289 = por %p287, %p288
      %p290 = scmp.ne.s32.totalorder %s281, %s282
      %p291 = scmp.eq.s32.totalorder %s44, 0
      %p292 = por %p290, %p291
      %p293 = scmp.ne.s32.totalorder %s281, %s282
      %p294 = scmp.eq.s32.totalorder %s45, 1
      %p295 = por %p293, %p294
      %p297 = scmp.ne.s32.totalorder %s282, %s296
      %p298 = scmp.eq.s32.totalorder %s45, 0
      %p299 = por %p297, %p298
      %s301 = sadd.s32 %s300, 1
      %p304 = scmp.eq.s32.totalorder %s39, 1
      %p305 = scmp.ne.s32.totalorder %s300, %s302
      %p306 = scmp.eq.s32.totalorder %s39, 0
      %p307 = por %p305, %p306
      %p308 = scmp.ne.s32.totalorder %s300, %s302
      %p309 = scmp.eq.s32.totalorder %s44, 1
      %p310 = por %p308, %p309
      %p311 = scmp.ne.s32.totalorder %s302, %s303
      %p312 = scmp.eq.s32.totalorder %s44, 0
      %p313 = por %p311, %p312
      %p314 = scmp.ne.s32.totalorder %s302, %s303
      %p315 = scmp.eq.s32.totalorder %s45, 1
      %p316 = por %p314, %p315
      %p318 = scmp.ne.s32.totalorder %s303, %s317
      %p319 = scmp.eq.s32.totalorder %s45, 0
      %p320 = por %p318, %p319
      %s322 = sadd.s32 %s321, 1
      %p325 = scmp.eq.s32.totalorder %s39, 1
      %p326 = scmp.ne.s32.totalorder %s321, %s323
      %p327 = scmp.eq.s32.totalorder %s39, 0
      %p328 = por %p326, %p327
      %p329 = scmp.ne.s32.totalorder %s321, %s323
      %p330 = scmp.eq.s32.totalorder %s44, 1
      %p331 = por %p329, %p330
      %p332 = scmp.ne.s32.totalorder %s323, %s324
      %p333 = scmp.eq.s32.totalorder %s44, 0
      %p334 = por %p332, %p333
      %p335 = scmp.ne.s32.totalorder %s323, %s324
      %p336 = scmp.eq.s32.totalorder %s45, 1
      %p337 = por %p335, %p336
      %p339 = scmp.ne.s32.totalorder %s324, %s338
      %p340 = scmp.eq.s32.totalorder %s45, 0
      %p341 = por %p339, %p340
      %s343 = sadd.s32 %s342, 1
      %p346 = scmp.eq.s32.totalorder %s39, 1
      %p347 = scmp.ne.s32.totalorder %s342, %s344
      %p348 = scmp.eq.s32.totalorder %s39, 0
      %p349 = por %p347, %p348
      %p350 = scmp.ne.s32.totalorder %s342, %s344
      %p351 = scmp.eq.s32.totalorder %s44, 1
      %p352 = por %p350, %p351
      %p353 = scmp.ne.s32.totalorder %s344, %s345
      %p354 = scmp.eq.s32.totalorder %s44, 0
      %p355 = por %p353, %p354
      %p356 = scmp.ne.s32.totalorder %s344, %s345
      %p357 = scmp.eq.s32.totalorder %s45, 1
      %p358 = por %p356, %p357
      %p360 = scmp.ne.s32.totalorder %s345, %s359
      %p361 = scmp.eq.s32.totalorder %s45, 0
      %p362 = por %p360, %p361
      %s364 = sadd.s32 %s363, 1
      %p367 = scmp.eq.s32.totalorder %s39, 1
      %p368 = scmp.ne.s32.totalorder %s363, %s365
      %p369 = scmp.eq.s32.totalorder %s39, 0
      %p370 = por %p368, %p369
      %p371 = scmp.ne.s32.totalorder %s363, %s365
      %p372 = scmp.eq.s32.totalorder %s44, 1
      %p373 = por %p371, %p372
      %p374 = scmp.ne.s32.totalorder %s365, %s366
      %p375 = scmp.eq.s32.totalorder %s44, 0
      %p376 = por %p374, %p375
      %p377 = scmp.ne.s32.totalorder %s365, %s366
      %p378 = scmp.eq.s32.totalorder %s45, 1
      %p379 = por %p377, %p378
      %p381 = scmp.ne.s32.totalorder %s366, %s380
      %p382 = scmp.eq.s32.totalorder %s45, 0
      %p383 = por %p381, %p382
      %s385 = sadd.s32 %s384, 1
      %p388 = scmp.eq.s32.totalorder %s39, 1
      %p389 = scmp.ne.s32.totalorder %s384, %s386
      %p390 = scmp.eq.s32.totalorder %s39, 0
      %p391 = por %p389, %p390
      %p392 = scmp.ne.s32.totalorder %s384, %s386
      %p393 = scmp.eq.s32.totalorder %s44, 1
      %p394 = por %p392, %p393
      %p395 = scmp.ne.s32.totalorder %s386, %s387
      %p396 = scmp.eq.s32.totalorder %s44, 0
      %p397 = por %p395, %p396
      %p398 = scmp.ne.s32.totalorder %s386, %s387
      %p399 = scmp.eq.s32.totalorder %s45, 1
      %p400 = por %p398, %p399
      %p402 = scmp.ne.s32.totalorder %s387, %s401
      %p403 = scmp.eq.s32.totalorder %s45, 0
      %p404 = por %p402, %p403
      %s405 = ssub.s32 %s47, %s54
      %p406 = scmp.eq.s32.totalorder %s405, 0
      %s408 = sadd.s32 %s407, 1
      %s409 = scalar_select %p406, %s407, %s408
      %p412 = pneg %p406
      %p413 = scmp.eq.s32.totalorder %s39, 1
      %p414 = por %p412, %p413
      %p415 = scmp.ne.s32.totalorder %s407, %s410
      %p416 = scmp.eq.s32.totalorder %s39, 0
      %p417 = por %p415, %p416
      %p418 = scmp.ne.s32.totalorder %s407, %s410
      %p419 = scmp.eq.s32.totalorder %s44, 1
      %p420 = por %p418, %p419
      %p421 = scmp.ne.s32.totalorder %s410, %s411
      %p422 = scmp.eq.s32.totalorder %s44, 0
      %p423 = por %p421, %p422
      %p424 = scmp.ne.s32.totalorder %s410, %s411
      %p425 = scmp.eq.s32.totalorder %s45, 1
      %p426 = por %p424, %p425
      %p428 = scmp.ne.s32.totalorder %s411, %s427
      %p429 = scmp.eq.s32.totalorder %s45, 0
      %p430 = por %p428, %p429
      %s431 = ssub.s32 %s47, %s54
      %p432 = scmp.eq.s32.totalorder %s431, 0
      %s434 = sadd.s32 %s433, 1
      %s435 = scalar_select %p432, %s433, %s434
      %p438 = pneg %p432
      %p439 = scmp.eq.s32.totalorder %s39, 1
      %p440 = por %p438, %p439
      %p441 = scmp.ne.s32.totalorder %s433, %s436
      %p442 = scmp.eq.s32.totalorder %s39, 0
      %p443 = por %p441, %p442
      %p444 = scmp.ne.s32.totalorder %s433, %s436
      %p445 = scmp.eq.s32.totalorder %s44, 1
      %p446 = por %p444, %p445
      %p447 = scmp.ne.s32.totalorder %s436, %s437
      %p448 = scmp.eq.s32.totalorder %s44, 0
      %p449 = por %p447, %p448
      %p450 = scmp.ne.s32.totalorder %s436, %s437
      %p451 = scmp.eq.s32.totalorder %s45, 1
      %p452 = por %p450, %p451
      %p454 = scmp.ne.s32.totalorder %s437, %s453
      %p455 = scmp.eq.s32.totalorder %s45, 0
      %p456 = por %p454, %p455
      %s457 = ssub.s32 %s47, %s54
      %p458 = scmp.eq.s32.totalorder %s457, 0
      %s460 = sadd.s32 %s459, 1
      %s461 = scalar_select %p458, %s459, %s460
      %p464 = pneg %p458
      %p465 = scmp.eq.s32.totalorder %s39, 1
      %p466 = por %p464, %p465
      %p467 = scmp.ne.s32.totalorder %s459, %s462
      %p468 = scmp.eq.s32.totalorder %s39, 0
      %p469 = por %p467, %p468
      %p470 = scmp.ne.s32.totalorder %s459, %s462
      %p471 = scmp.eq.s32.totalorder %s44, 1
      %p472 = por %p470, %p471
      %p473 = scmp.ne.s32.totalorder %s462, %s463
      %p474 = scmp.eq.s32.totalorder %s44, 0
      %p475 = por %p473, %p474
      %p476 = scmp.ne.s32.totalorder %s462, %s463
      %p477 = scmp.eq.s32.totalorder %s45, 1
      %p478 = por %p476, %p477
      %p480 = scmp.ne.s32.totalorder %s463, %s479
      %p481 = scmp.eq.s32.totalorder %s45, 0
      %p482 = por %p480, %p481
      %s484 = sadd.s32 %s483, 1
      %p487 = scmp.eq.s32.totalorder %s39, 1
      %p488 = scmp.ne.s32.totalorder %s483, %s485
      %p489 = scmp.eq.s32.totalorder %s39, 0
      %p490 = por %p488, %p489
      %p491 = scmp.ne.s32.totalorder %s483, %s485
      %p492 = scmp.eq.s32.totalorder %s44, 1
      %p493 = por %p491, %p492
      %p494 = scmp.ne.s32.totalorder %s485, %s486
      %p495 = scmp.eq.s32.totalorder %s44, 0
      %p496 = por %p494, %p495
      %p497 = scmp.ne.s32.totalorder %s485, %s486
      %p498 = scmp.eq.s32.totalorder %s45, 1
      %p499 = por %p497, %p498
      %p501 = scmp.ne.s32.totalorder %s486, %s500
      %p502 = scmp.eq.s32.totalorder %s45, 0
      %p503 = por %p501, %p502
      %s504 = ssub.s32 %s46, %s58
      %p505 = scmp.eq.s32.totalorder %s504, 0
      %s507 = sadd.s32 %s506, 1
      %s508 = scalar_select %p505, %s506, %s507
      %p511 = pneg %p505
      %p512 = scmp.eq.s32.totalorder %s39, 1
      %p513 = por %p511, %p512
      %p514 = scmp.ne.s32.totalorder %s506, %s509
      %p515 = scmp.eq.s32.totalorder %s39, 0
      %p516 = por %p514, %p515
      %p517 = scmp.ne.s32.totalorder %s506, %s509
      %p518 = scmp.eq.s32.totalorder %s44, 1
      %p519 = por %p517, %p518
      %p520 = scmp.ne.s32.totalorder %s509, %s510
      %p521 = scmp.eq.s32.totalorder %s44, 0
      %p522 = por %p520, %p521
      %p523 = scmp.ne.s32.totalorder %s509, %s510
      %p524 = scmp.eq.s32.totalorder %s45, 1
      %p525 = por %p523, %p524
      %p527 = scmp.ne.s32.totalorder %s510, %s526
      %p528 = scmp.eq.s32.totalorder %s45, 0
      %p529 = por %p527, %p528
      %p530 = scmp.le.s32.totalorder 1, %s39
      %p531 = scmp.lt.s32.totalorder %s39, 3
      %p532 = pnand %p530, %p531
      %p533 = pneg %p532
      // Predicated region
      $region9: #{tpu_custom_call.1} parent=5 // pred_check
        _
      $region10: #{tpu_custom_call.1} parent=5 // pred_check_branch
        %535 = sbr.rel (%p532) target = $region12
      $region11: #{tpu_custom_call.1} parent=5 // pred_region
        %s536 = ssub.s32 %s39, 1
        // Predicated region
        $region13: #{tpu_custom_call.1} parent=11 // pred_check
          %p537 = pneg %p124
        $region14: #{tpu_custom_call.1} parent=11 // pred_check_branch
          %539 = sbr.rel (%p537) target = $region16
        $region15: #{tpu_custom_call.1} parent=11 // pred_region
          %s541 = ssub.s32 16, 16
          %542 = vsyncadd [#allocation9], %s541
          %s544 = sshll.u32 [#allocation8], 4
          %s545 = int_to_ptr.vmem [resolvable:$true] %s544
          %547 = dma.hbm_to_vmem [thread:$0]  %s2, 16, %s545, [#allocation9]
        $region16: #{tpu_custom_call.1} parent=11 // pred_fallthru
          _
        // Predicated region
        $region17: #{tpu_custom_call.1} parent=11 // pred_check
          %p548 = pneg %p145
        $region18: #{tpu_custom_call.1} parent=11 // pred_check_branch
          %550 = sbr.rel (%p548) target = $region20
        $region19: #{tpu_custom_call.1} parent=11 // pred_region
          %s552 = ssub.s32 16, 16
          %553 = vsyncadd [#allocation9], %s552
          %s555 = sshll.u32 [#allocation10], 4
          %s556 = int_to_ptr.vmem [resolvable:$true] %s555
          %558 = dma.hbm_to_vmem [thread:$0]  %s3, 16, %s556, [#allocation9]
        $region20: #{tpu_custom_call.1} parent=11 // pred_fallthru
          _
        // Predicated region
        $region21: #{tpu_custom_call.1} parent=11 // pred_check
          %p559 = pneg %p166
        $region22: #{tpu_custom_call.1} parent=11 // pred_check_branch
          %561 = sbr.rel (%p559) target = $region24
        $region23: #{tpu_custom_call.1} parent=11 // pred_region
          %s563 = ssub.s32 16, 16
          %564 = vsyncadd [#allocation12], %s563
          %s566 = sshll.u32 [#allocation11], 4
          %s567 = int_to_ptr.vmem [resolvable:$true] %s566
          %569 = dma.hbm_to_vmem [thread:$0]  %s4, 16, %s567, [#allocation12]
        $region24: #{tpu_custom_call.1} parent=11 // pred_fallthru
          _
        // Predicated region
        $region25: #{tpu_custom_call.1} parent=11 // pred_check
          %p570 = pneg %p187
        $region26: #{tpu_custom_call.1} parent=11 // pred_check_branch
          %572 = sbr.rel (%p570) target = $region28
        $region27: #{tpu_custom_call.1} parent=11 // pred_region
          %s574 = ssub.s32 16, 16
          %575 = vsyncadd [#allocation12], %s574
          %s577 = sshll.u32 [#allocation13], 4
          %s578 = int_to_ptr.vmem [resolvable:$true] %s577
          %580 = dma.hbm_to_vmem [thread:$0]  %s5, 16, %s578, [#allocation12]
        $region28: #{tpu_custom_call.1} parent=11 // pred_fallthru
          _
        // Predicated region
        $region29: #{tpu_custom_call.1} parent=11 // pred_check
          %p581 = pneg %p208
        $region30: #{tpu_custom_call.1} parent=11 // pred_check_branch
          %583 = sbr.rel (%p581) target = $region32
        $region31: #{tpu_custom_call.1} parent=11 // pred_region
          %s585 = ssub.s32 16, 16
          %586 = vsyncadd [#allocation15], %s585
          %s588 = sshll.u32 [#allocation14], 4
          %s589 = int_to_ptr.vmem [resolvable:$true] %s588
          %591 = dma.hbm_to_vmem [thread:$0]  %s6, 16, %s589, [#allocation15]
        $region32: #{tpu_custom_call.1} parent=11 // pred_fallthru
          _
        // Predicated region
        $region33: #{tpu_custom_call.1} parent=11 // pred_check
          %p592 = pneg %p229
        $region34: #{tpu_custom_call.1} parent=11 // pred_check_branch
          %594 = sbr.rel (%p592) target = $region36
        $region35: #{tpu_custom_call.1} parent=11 // pred_region
          %s596 = ssub.s32 16, 16
          %597 = vsyncadd [#allocation15], %s596
          %s599 = sshll.u32 [#allocation16], 4
          %s600 = int_to_ptr.vmem [resolvable:$true] %s599
          %602 = dma.hbm_to_vmem [thread:$0]  %s7, 16, %s600, [#allocation15]
        $region36: #{tpu_custom_call.1} parent=11 // pred_fallthru
          _
        // Predicated region
        $region37: #{tpu_custom_call.1} parent=11 // pred_check
          %p603 = pneg %p250
        $region38: #{tpu_custom_call.1} parent=11 // pred_check_branch
          %605 = sbr.rel (%p603) target = $region40
        $region39: #{tpu_custom_call.1} parent=11 // pred_region
          _
        $region40: #{tpu_custom_call.1} parent=11 // pred_fallthru
          _
        // Predicated region
        $region41: #{tpu_custom_call.1} parent=11 // pred_check
          %p606 = pneg %p271
        $region42: #{tpu_custom_call.1} parent=11 // pred_check_branch
          %608 = sbr.rel (%p606) target = $region44
        $region43: #{tpu_custom_call.1} parent=11 // pred_region
          %s610 = ssub.s32 16, 16
          %611 = vsyncadd [#allocation18], %s610
          %s613 = sshll.u32 [#allocation17], 4
          %s614 = int_to_ptr.vmem [resolvable:$true] %s613
          %616 = dma.hbm_to_vmem [thread:$0]  %s9, 16, %s614, [#allocation18]
        $region44: #{tpu_custom_call.1} parent=11 // pred_fallthru
          _
        // Predicated region
        $region45: #{tpu_custom_call.1} parent=11 // pred_check
          %p617 = pneg %p292
        $region46: #{tpu_custom_call.1} parent=11 // pred_check_branch
          %619 = sbr.rel (%p617) target = $region48
        $region47: #{tpu_custom_call.1} parent=11 // pred_region
          _
        $region48: #{tpu_custom_call.1} parent=11 // pred_fallthru
          _
        // Predicated region
        $region49: #{tpu_custom_call.1} parent=11 // pred_check
          %p620 = pneg %p313
        $region50: #{tpu_custom_call.1} parent=11 // pred_check_branch
          %622 = sbr.rel (%p620) target = $region52
        $region51: #{tpu_custom_call.1} parent=11 // pred_region
          %s624 = ssub.s32 16, 16
          %625 = vsyncadd [#allocation18], %s624
          %s627 = sshll.u32 [#allocation19], 4
          %s628 = int_to_ptr.vmem [resolvable:$true] %s627
          %630 = dma.hbm_to_vmem [thread:$0]  %s11, 16, %s628, [#allocation18]
        $region52: #{tpu_custom_call.1} parent=11 // pred_fallthru
          _
        // Predicated region
        $region53: #{tpu_custom_call.1} parent=11 // pred_check
          %p631 = pneg %p334
        $region54: #{tpu_custom_call.1} parent=11 // pred_check_branch
          %633 = sbr.rel (%p631) target = $region56
        $region55: #{tpu_custom_call.1} parent=11 // pred_region
          %s635 = ssub.s32 512, 512
          %636 = vsyncadd [#allocation21], %s635
          %s637 = sshll.u32 [#allocation20], 4
          %s638 = int_to_ptr.vmem [resolvable:$true] %s637
          %643 = dma.hbm_to_vmem [thread:$0]  %s12, 512, %s638, [#allocation21], 128, 128, 8
        $region56: #{tpu_custom_call.1} parent=11 // pred_fallthru
          _
        // Predicated region
        $region57: #{tpu_custom_call.1} parent=11 // pred_check
          %p644 = pneg %p355
        $region58: #{tpu_custom_call.1} parent=11 // pred_check_branch
          %646 = sbr.rel (%p644) target = $region60
        $region59: #{tpu_custom_call.1} parent=11 // pred_region
          %s648 = ssub.s32 16, 16
          %649 = vsyncadd [#allocation21], %s648
          %s651 = sshll.u32 [#allocation22], 4
          %s652 = int_to_ptr.vmem [resolvable:$true] %s651
          %654 = dma.hbm_to_vmem [thread:$0]  %s13, 16, %s652, [#allocation21]
        $region60: #{tpu_custom_call.1} parent=11 // pred_fallthru
          _
        // Predicated region
        $region61: #{tpu_custom_call.1} parent=11 // pred_check
          %p655 = pneg %p376
        $region62: #{tpu_custom_call.1} parent=11 // pred_check_branch
          %657 = sbr.rel (%p655) target = $region64
        $region63: #{tpu_custom_call.1} parent=11 // pred_region
          %s659 = ssub.s32 512, 512
          %660 = vsyncadd [#allocation24], %s659
          %s661 = sshll.u32 [#allocation23], 4
          %s662 = int_to_ptr.vmem [resolvable:$true] %s661
          %667 = dma.hbm_to_vmem [thread:$0]  %s14, 512, %s662, [#allocation24], 128, 128, 8
        $region64: #{tpu_custom_call.1} parent=11 // pred_fallthru
          _
        // Predicated region
        $region65: #{tpu_custom_call.1} parent=11 // pred_check
          %p668 = pneg %p397
        $region66: #{tpu_custom_call.1} parent=11 // pred_check_branch
          %670 = sbr.rel (%p668) target = $region68
        $region67: #{tpu_custom_call.1} parent=11 // pred_region
          %s672 = ssub.s32 16, 16
          %673 = vsyncadd [#allocation24], %s672
          %s675 = sshll.u32 [#allocation25], 4
          %s676 = int_to_ptr.vmem [resolvable:$true] %s675
          %678 = dma.hbm_to_vmem [thread:$0]  %s15, 16, %s676, [#allocation24]
        $region68: #{tpu_custom_call.1} parent=11 // pred_fallthru
          _
        // Predicated region
        $region69: #{tpu_custom_call.1} parent=11 // pred_check
          %p679 = pneg %p423
        $region70: #{tpu_custom_call.1} parent=11 // pred_check_branch
          %681 = sbr.rel (%p679) target = $region72
        $region71: #{tpu_custom_call.1} parent=11 // pred_region
          %s683 = ssub.s32 512, 512
          %684 = vsyncadd [#allocation27], %s683
          %s685 = smul.addr %s49, 128
          %s686 = scalar_lea.hbm %s16, %s685
          %s687 = sshll.u32 [#allocation26], 4
          %s688 = int_to_ptr.vmem [resolvable:$true] %s687
          %693 = dma.hbm_to_vmem [thread:$0]  %s686, 512, %s688, [#allocation27], 128, 128, 8
        $region72: #{tpu_custom_call.1} parent=11 // pred_fallthru
          _
        // Predicated region
        $region73: #{tpu_custom_call.1} parent=11 // pred_check
          %p694 = pneg %p449
        $region74: #{tpu_custom_call.1} parent=11 // pred_check_branch
          %696 = sbr.rel (%p694) target = $region76
        $region75: #{tpu_custom_call.1} parent=11 // pred_region
          %s698 = ssub.s32 16, 16
          %699 = vsyncadd [#allocation27], %s698
          %s700 = smul.addr %s49, 16
          %s701 = scalar_lea.hbm %s17, %s700
          %s703 = sshll.u32 [#allocation28], 4
          %s704 = int_to_ptr.vmem [resolvable:$true] %s703
          %706 = dma.hbm_to_vmem [thread:$0]  %s701, 16, %s704, [#allocation27]
        $region76: #{tpu_custom_call.1} parent=11 // pred_fallthru
          _
        // Predicated region
        $region77: #{tpu_custom_call.1} parent=11 // pred_check
          %p707 = pneg %p475
        $region78: #{tpu_custom_call.1} parent=11 // pred_check_branch
          %709 = sbr.rel (%p707) target = $region80
        $region79: #{tpu_custom_call.1} parent=11 // pred_region
          %s710 = smul.u32 8, %s49
          %p711 = scmp.lt.s32.totalorder %s710, 7
          %s712 = scalar_select %p711, %s710, 7
          %s713 = smul.addr %s712, 8
          %s714 = scalar_lea.vmem %s18, %s713
          %s715 = smul.u32 8, %s49
        $region80: #{tpu_custom_call.1} parent=11 // pred_fallthru
          _
        // Predicated region
        $region81: #{tpu_custom_call.1} parent=11 // pred_check
          %p716 = pneg %p496
        $region82: #{tpu_custom_call.1} parent=11 // pred_check_branch
          %718 = sbr.rel (%p716) target = $region84
        $region83: #{tpu_custom_call.1} parent=11 // pred_region
          _
        $region84: #{tpu_custom_call.1} parent=11 // pred_fallthru
          _
      $region12: #{tpu_custom_call.1} parent=5 // pred_fallthru
        _
      %p719 = scmp.lt.s32.totalorder %s39, 2
      // Predicated region
      $region85: #{tpu_custom_call.1} parent=5 // pred_check
        %p720 = pneg %p719
      $region86: #{tpu_custom_call.1} parent=5 // pred_check_branch
        %722 = sbr.rel (%p720) target = $region88
      $region87: #{tpu_custom_call.1} parent=5 // pred_region
        // Predicated region
        $region89: #{tpu_custom_call.1} parent=87 // pred_check
          %p723 = pneg %p71
        $region90: #{tpu_custom_call.1} parent=87 // pred_check_branch
          %725 = sbr.rel (%p723) target = $region92
        $region91: #{tpu_custom_call.1} parent=87 // pred_region
          %s726 = sand.u32 %s61, 1
          %s727 = scalar_lea.sflag [#allocation6], %s726
          %s728 = sand.u32 %s61, 1
          %s729 = smul.addr %s728, 8
          %s730 = scalar_lea.vmem [#allocation5], %s729
          %s732 = ssub.s32 128, 128
          %733 = vsyncadd %s727, %s732
          %s734 = smul.addr %s46, 128
          %s735 = scalar_lea.hbm %s0, %s734
          %s737 = sshll.u32 %s730, 4
          %s738 = int_to_ptr.vmem [resolvable:$true] %s737
          %740 = dma.hbm_to_vmem [thread:$0]  %s735, 128, %s738, %s727
        $region92: #{tpu_custom_call.1} parent=87 // pred_fallthru
          _
        // Predicated region
        $region93: #{tpu_custom_call.1} parent=87 // pred_check
          %p741 = pneg %p97
        $region94: #{tpu_custom_call.1} parent=87 // pred_check_branch
          %743 = sbr.rel (%p741) target = $region96
        $region95: #{tpu_custom_call.1} parent=87 // pred_region
          %p744 = scmp.lt.s32.totalorder %s46, 1
          %s745 = scalar_select %p744, %s46, 1
          %s746 = smul.addr %s745, 2
          %s747 = smul.addr %s746, 8
          %s748 = scalar_lea.vmem %s1, %s747
        $region96: #{tpu_custom_call.1} parent=87 // pred_fallthru
          _
      $region88: #{tpu_custom_call.1} parent=5 // pred_fallthru
        _
      %p749 = scmp.le.s32.totalorder 1, %s39
      %p750 = scmp.lt.s32.totalorder %s39, 3
      %p751 = pnand %p749, %p750
      %p752 = pneg %p751
      // Predicated region
      $region97: #{tpu_custom_call.1} parent=5 // pred_check
        _
      $region98: #{tpu_custom_call.1} parent=5 // pred_check_branch
        %754 = sbr.rel (%p751) target = $region100
      $region99: #{tpu_custom_call.1} parent=5 // pred_region
        %s755 = ssub.s32 %s39, 1
        %s756 = sand.u32 %s64, 1
        %s757 = scalar_lea.sflag [#allocation6], %s756
        %s758 = sand.u32 %s64, 1
        %s759 = smul.addr %s758, 8
        %s760 = scalar_lea.vmem [#allocation5], %s759
        // Predicated region
        $region101: #{tpu_custom_call.1} parent=99 // pred_check
          %p761 = pneg %p77
        $region102: #{tpu_custom_call.1} parent=99 // pred_check_branch
          %763 = sbr.rel (%p761) target = $region104
        $region103: #{tpu_custom_call.1} parent=99 // pred_region
          %764 = dma.done %s757, 128
        $region104: #{tpu_custom_call.1} parent=99 // pred_fallthru
          _
        // Predicated region
        $region105: #{tpu_custom_call.1} parent=99 // pred_check
          %p765 = pneg %p124
        $region106: #{tpu_custom_call.1} parent=99 // pred_check_branch
          %767 = sbr.rel (%p765) target = $region108
        $region107: #{tpu_custom_call.1} parent=99 // pred_region
          %768 = dma.done [#allocation9], 16
        $region108: #{tpu_custom_call.1} parent=99 // pred_fallthru
          _
        // Predicated region
        $region109: #{tpu_custom_call.1} parent=99 // pred_check
          %p769 = pneg %p145
        $region110: #{tpu_custom_call.1} parent=99 // pred_check_branch
          %771 = sbr.rel (%p769) target = $region112
        $region111: #{tpu_custom_call.1} parent=99 // pred_region
          %772 = dma.done [#allocation9], 16
        $region112: #{tpu_custom_call.1} parent=99 // pred_fallthru
          _
        // Predicated region
        $region113: #{tpu_custom_call.1} parent=99 // pred_check
          %p773 = pneg %p166
        $region114: #{tpu_custom_call.1} parent=99 // pred_check_branch
          %775 = sbr.rel (%p773) target = $region116
        $region115: #{tpu_custom_call.1} parent=99 // pred_region
          %776 = dma.done [#allocation12], 16
        $region116: #{tpu_custom_call.1} parent=99 // pred_fallthru
          _
        // Predicated region
        $region117: #{tpu_custom_call.1} parent=99 // pred_check
          %p777 = pneg %p187
        $region118: #{tpu_custom_call.1} parent=99 // pred_check_branch
          %779 = sbr.rel (%p777) target = $region120
        $region119: #{tpu_custom_call.1} parent=99 // pred_region
          %780 = dma.done [#allocation12], 16
        $region120: #{tpu_custom_call.1} parent=99 // pred_fallthru
          _
        // Predicated region
        $region121: #{tpu_custom_call.1} parent=99 // pred_check
          %p781 = pneg %p208
        $region122: #{tpu_custom_call.1} parent=99 // pred_check_branch
          %783 = sbr.rel (%p781) target = $region124
        $region123: #{tpu_custom_call.1} parent=99 // pred_region
          %784 = dma.done [#allocation15], 16
        $region124: #{tpu_custom_call.1} parent=99 // pred_fallthru
          _
        // Predicated region
        $region125: #{tpu_custom_call.1} parent=99 // pred_check
          %p785 = pneg %p229
        $region126: #{tpu_custom_call.1} parent=99 // pred_check_branch
          %787 = sbr.rel (%p785) target = $region128
        $region127: #{tpu_custom_call.1} parent=99 // pred_region
          %788 = dma.done [#allocation15], 16
        $region128: #{tpu_custom_call.1} parent=99 // pred_fallthru
          _
        // Predicated region
        $region129: #{tpu_custom_call.1} parent=99 // pred_check
          %p789 = pneg %p271
        $region130: #{tpu_custom_call.1} parent=99 // pred_check_branch
          %791 = sbr.rel (%p789) target = $region132
        $region131: #{tpu_custom_call.1} parent=99 // pred_region
          %792 = dma.done [#allocation18], 16
        $region132: #{tpu_custom_call.1} parent=99 // pred_fallthru
          _
        // Predicated region
        $region133: #{tpu_custom_call.1} parent=99 // pred_check
          %p793 = pneg %p313
        $region134: #{tpu_custom_call.1} parent=99 // pred_check_branch
          %795 = sbr.rel (%p793) target = $region136
        $region135: #{tpu_custom_call.1} parent=99 // pred_region
          %796 = dma.done [#allocation18], 16
        $region136: #{tpu_custom_call.1} parent=99 // pred_fallthru
          _
        // Predicated region
        $region137: #{tpu_custom_call.1} parent=99 // pred_check
          %p797 = pneg %p334
        $region138: #{tpu_custom_call.1} parent=99 // pred_check_branch
          %799 = sbr.rel (%p797) target = $region140
        $region139: #{tpu_custom_call.1} parent=99 // pred_region
          %800 = dma.done [#allocation21], 512
        $region140: #{tpu_custom_call.1} parent=99 // pred_fallthru
          _
        // Predicated region
        $region141: #{tpu_custom_call.1} parent=99 // pred_check
          %p801 = pneg %p355
        $region142: #{tpu_custom_call.1} parent=99 // pred_check_branch
          %803 = sbr.rel (%p801) target = $region144
        $region143: #{tpu_custom_call.1} parent=99 // pred_region
          %804 = dma.done [#allocation21], 16
        $region144: #{tpu_custom_call.1} parent=99 // pred_fallthru
          _
        // Predicated region
        $region145: #{tpu_custom_call.1} parent=99 // pred_check
          %p805 = pneg %p376
        $region146: #{tpu_custom_call.1} parent=99 // pred_check_branch
          %807 = sbr.rel (%p805) target = $region148
        $region147: #{tpu_custom_call.1} parent=99 // pred_region
          %808 = dma.done [#allocation24], 512
        $region148: #{tpu_custom_call.1} parent=99 // pred_fallthru
          _
        // Predicated region
        $region149: #{tpu_custom_call.1} parent=99 // pred_check
          %p809 = pneg %p397
        $region150: #{tpu_custom_call.1} parent=99 // pred_check_branch
          %811 = sbr.rel (%p809) target = $region152
        $region151: #{tpu_custom_call.1} parent=99 // pred_region
          %812 = dma.done [#allocation24], 16
        $region152: #{tpu_custom_call.1} parent=99 // pred_fallthru
          _
        // Predicated region
        $region153: #{tpu_custom_call.1} parent=99 // pred_check
          %p813 = pneg %p423
        $region154: #{tpu_custom_call.1} parent=99 // pred_check_branch
          %815 = sbr.rel (%p813) target = $region156
        $region155: #{tpu_custom_call.1} parent=99 // pred_region
          %816 = dma.done [#allocation27], 512
        $region156: #{tpu_custom_call.1} parent=99 // pred_fallthru
          _
        // Predicated region
        $region157: #{tpu_custom_call.1} parent=99 // pred_check
          %p817 = pneg %p449
        $region158: #{tpu_custom_call.1} parent=99 // pred_check_branch
          %819 = sbr.rel (%p817) target = $region160
        $region159: #{tpu_custom_call.1} parent=99 // pred_region
          %820 = dma.done [#allocation27], 16
        $region160: #{tpu_custom_call.1} parent=99 // pred_fallthru
          _
        %s821 = sand.u32 %s64, 1
        %s822 = scalar_lea.sflag [#allocation6], %s821
        %s823 = sand.u32 %s64, 1
        %s824 = smul.addr %s823, 8
        %s825 = scalar_lea.vmem [#allocation5], %s824
        %p826 = pneg %p77
        %p827 = pneg %p74
        %p828 = scmp.lt.s32.totalorder %s48, 1
        %s829 = scalar_select %p828, %s48, 1
        %s830 = smul.addr %s829, 2
        %s831 = smul.addr %s830, 8
        %s832 = scalar_lea.vmem %s1, %s831
        %p833 = pneg %p103
        %p834 = pneg %p100
        %p835 = pneg %p124
        %p836 = pneg %p121
        %p837 = pneg %p145
        %p838 = pneg %p142
        %p839 = pneg %p166
        %p840 = pneg %p163
        %p841 = pneg %p187
        %p842 = pneg %p184
        %p843 = pneg %p208
        %p844 = pneg %p205
        %p845 = pneg %p229
        %p846 = pneg %p226
        %p847 = pneg %p250
        %p848 = pneg %p247
        %p849 = pneg %p271
        %p850 = pneg %p268
        %p851 = pneg %p292
        %p852 = pneg %p289
        %p853 = pneg %p313
        %p854 = pneg %p310
        %p855 = pneg %p334
        %p856 = pneg %p331
        %p857 = pneg %p355
        %p858 = pneg %p352
        %p859 = pneg %p376
        %p860 = pneg %p373
        %p861 = pneg %p397
        %p862 = pneg %p394
        %p863 = pneg %p423
        %p864 = pneg %p420
        %p865 = pneg %p449
        %p866 = pneg %p446
        %s867 = smul.u32 8, %s49
        %p868 = scmp.lt.s32.totalorder %s867, 7
        %s869 = scalar_select %p868, %s867, 7
        %s870 = smul.addr %s869, 8
        %s871 = scalar_lea.vmem %s18, %s870
        %p872 = pneg %p475
        %p873 = pneg %p472
        %p874 = pneg %p496
        %p875 = pneg %p493
        %p876 = pneg %p522
        %p877 = pneg %p519
        %s878 = sand.u32 %s509, 1
        %s879 = scalar_lea.sflag [#allocation7], %s878
        %s880 = sand.u32 %s509, 1
        %s881 = smul.addr %s880, 8
        %s882 = scalar_lea.vmem [#allocation29], %s881
        %p883 = scmp.lt.s32.totalorder %s48, 1
        %s884 = scalar_select %p883, %s48, 1
        %s885 = smul.addr %s884, 2
        %s886 = smul.addr %s885, 8
        %s887 = scalar_lea.vmem %s1, %s886
        %s888 = smul.u32 8, %s49
        %p889 = scmp.lt.s32.totalorder %s888, 7
        %s890 = scalar_select %p889, %s888, 7
        %s891 = smul.addr %s890, 8
        %s892 = scalar_lea.vmem %s18, %s891
        %s893 = smul.u32 8, %s49
        %p894 = scmp.eq.s32.totalorder %s49, 0
        // Predicated region
        $region161: #{tpu_custom_call.1} parent=99 // pred_check
          %p895 = pneg %p894
        $region162: #{tpu_custom_call.1} parent=99 // pred_check_branch
          %897 = sbr.rel (%p895) target = $region164
        $region163: #{tpu_custom_call.1} parent=99 // pred_region
          %v898 = vld [vmem:[%s760] sm:$0xff]
          %v899 = vld [vmem:[%s887] sm:$0xff]
          %v900 = vld [vmem:[%s887 + $0x8] sm:$0xff]
          %v901 = vld [vmem:[#allocation8] sm:$0x1]
          %v902 = vld [vmem:[#allocation10] sm:$0x1]
          %vm903 = vcmask 261120
          %v904 = vsel %vm903, %v898, 0.0
          %905 = vadd.xlane.f32.xlu0 %v904
          %v906 = vpop.xlane.xlu0 %905
          %v907 = vrcp.pop 32.0
          %v908 = vmul.f32 %v906, %v907
          %v909 = vsub.f32 %v898, %v908
          %v910 = vmul.f32 %v909, %v909
          %v911 = vsel %vm903, %v910, 0.0
          %912 = vadd.xlane.f32.xlu0 %v911
          %v913 = vpop.xlane.xlu0 %912
          %v914 = vmul.f32 %v913, %v907
          %v915 = vadd.f32 %v914, 1e-05
          %v916 = vrsqrt.pop %v915
          %v917 = vmul.f32 %v909, %v916
          %v919 = vlaneseq
          %v920 = vshrl.u32 %v919, 7
          %v921 = vsub.s32 0, %v920
          %v922 = vrot.slane %v901, %v921
          %v924 = vmul.f32 %v917, %v922
          %v926 = vlaneseq
          %v927 = vshrl.u32 %v926, 7
          %v928 = vsub.s32 0, %v927
          %v929 = vrot.slane %v902, %v928
          %v931 = vadd.f32 %v924, %v929
          %v932 = vld [vmem:[%s8] sm:$0xff]
          %v933 = vld [vmem:[%s8 + $0x8] sm:$0xff]
          %v934 = vld [vmem:[%s8 + $0x10] sm:$0xff]
          %v935 = vld [vmem:[%s8 + $0x18] sm:$0xff]
          %v936 = vld [vmem:[#allocation17] sm:$0x1]
          %v938 = vlaneseq
          %v939 = vshrl.u32 %v938, 7
          %v940 = vsub.s32 0, %v939
          %v941 = vrot.slane %v936, %v940
          %v944 = vsel %vm903, %v931, 0
          %946 = vmatprep.subr.mxu0 0.0
          %947 = vmatpush1.msra.mxu0 0.0
          %948 = vmatprep.subr.mxu0 0.0
          %949 = vmatpush1.msra.mxu0 0.0
          %950 = vmatprep.subr.mxu0 0.0
          %951 = vmatpush1.msra.mxu0 0.0
          %952 = vmatprep.subr.mxu0 0.0
          %953 = vmatpush1.msra.mxu0 0.0
          %954 = vmatprep.subr.mxu0 0.0
          %955 = vmatpush1.msra.mxu0 0.0
          %956 = vmatprep.subr.mxu0 0.0
          %957 = vmatpush1.msra.mxu0 0.0
          %958 = vmatprep.subr.mxu0 0.0
          %959 = vmatpush1.msra.mxu0 0.0
          %960 = vmatprep.subr.mxu0 0.0
          %961 = vmatpush1.msra.mxu0 0.0
          %962 = vmatprep.subr.mxu0 0.0
          %963 = vmatpush1.msra.mxu0 0.0
          %964 = vmatprep.subr.mxu0 0.0
          %965 = vmatpush1.msra.mxu0 0.0
          %966 = vmatprep.subr.mxu0 0.0
          %967 = vmatpush1.msra.mxu0 0.0
          %968 = vmatprep.subr.mxu0 0.0
          %969 = vmatpush1.msra.mxu0 0.0
          %970 = vmatprep.subr.mxu0 0.0
          %971 = vmatpush1.msra.mxu0 %v935
          %972 = vmatprep.subr.mxu0 0.0
          %973 = vmatpush1.msra.mxu0 %v934
          %974 = vmatprep.subr.mxu0 0.0
          %975 = vmatpush1.msra.mxu0 %v933
          %976 = vmatprep.subr.mxu0 0.0
          %977 = vmatpush1.msra.mxu0 %v932
          %978 = vmatprep.subr.mxu0 0.0
          %979 = vmatpush2.msra.mxu0 0.0
          %980 = vmatprep.subr.mxu0 0.0
          %981 = vmatpush2.msra.mxu0 0.0
          %982 = vmatprep.subr.mxu0 0.0
          %983 = vmatpush2.msra.mxu0 0.0
          %984 = vmatprep.subr.mxu0 0.0
          %985 = vmatpush2.msra.mxu0 0.0
          %986 = vmatprep.subr.mxu0 0.0
          %987 = vmatpush2.msra.mxu0 0.0
          %988 = vmatprep.subr.mxu0 0.0
          %989 = vmatpush2.msra.mxu0 0.0
          %990 = vmatprep.subr.mxu0 0.0
          %991 = vmatpush2.msra.mxu0 0.0
          %992 = vmatprep.subr.mxu0 0.0
          %993 = vmatpush2.msra.mxu0 0.0
          %994 = vmatprep.subr.mxu0 0.0
          %995 = vmatpush2.msra.mxu0 0.0
          %996 = vmatprep.subr.mxu0 0.0
          %997 = vmatpush2.msra.mxu0 0.0
          %998 = vmatprep.subr.mxu0 0.0
          %999 = vmatpush2.msra.mxu0 0.0
          %1000 = vmatprep.subr.mxu0 0.0
          %1001 = vmatpush2.msra.mxu0 0.0
          %1002 = vmatprep.subr.mxu0 0.0
          %1003 = vmatpush2.msra.mxu0 0.0
          %1004 = vmatprep.subr.mxu0 0.0
          %1005 = vmatpush2.msra.mxu0 0.0
          %1006 = vmatprep.subr.mxu0 0.0
          %1007 = vmatpush2.msra.mxu0 0.0
          %1008 = vmatprep.subr.mxu0 0.0
          %1009 = vmatpush2.msra.mxu0 0.0
          %1010 = vmatprep.mubr.f32.mxu0 0.0
          %1011 = vmatmul.mubr.f32.gmra.mxu0 %v944
          %v1012 = vpop.f32.mrf.mxu0
          %v1013 = vadd.f32 %v941, %v1012
          %v1014 = vpop.f32.mrf.mxu0
          %1015 = vdwg.mxu0
          %v1016 = vld [vmem:[%s10] sm:$0xff]
          %v1017 = vld [vmem:[%s10 + $0x8] sm:$0xff]
          %v1018 = vld [vmem:[%s10 + $0x10] sm:$0xff]
          %v1019 = vld [vmem:[%s10 + $0x18] sm:$0xff]
          %v1020 = vld [vmem:[#allocation19] sm:$0x1]
          %1022 = vrot.lane.b32.xlu0 %v1013, 96
          %v1023 = vpop.permute.xlu0 %1022
          %vm1024 = vcmask 64512
          %v1025 = vsel %vm1024, %v1013, 0
          %v1027 = vsel %vm1024, %v1023, 0
          %1029 = vmatprep.subr.mxu0 0.0
          %1030 = vmatpush1.xpose.msra.mxu0 0.0
          %1031 = vmatprep.subr.mxu0 0.0
          %1032 = vmatpush1.xpose.msra.mxu0 0.0
          %1033 = vmatprep.subr.mxu0 0.0
          %1034 = vmatpush1.xpose.msra.mxu0 0.0
          %1035 = vmatprep.subr.mxu0 0.0
          %1036 = vmatpush1.xpose.msra.mxu0 0.0
          %1037 = vmatprep.subr.mxu0 0.0
          %1038 = vmatpush1.xpose.msra.mxu0 0.0
          %1039 = vmatprep.subr.mxu0 0.0
          %1040 = vmatpush1.xpose.msra.mxu0 0.0
          %1041 = vmatprep.subr.mxu0 0.0
          %1042 = vmatpush1.xpose.msra.mxu0 0.0
          %1043 = vmatprep.subr.mxu0 0.0
          %1044 = vmatpush1.xpose.msra.mxu0 0.0
          %1045 = vmatprep.subr.mxu0 0.0
          %1046 = vmatpush1.xpose.msra.mxu0 0.0
          %1047 = vmatprep.subr.mxu0 0.0
          %1048 = vmatpush1.xpose.msra.mxu0 0.0
          %1049 = vmatprep.subr.mxu0 0.0
          %1050 = vmatpush1.xpose.msra.mxu0 0.0
          %1051 = vmatprep.subr.mxu0 0.0
          %1052 = vmatpush1.xpose.msra.mxu0 0.0
          %1053 = vmatprep.subr.mxu0 0.0
          %1054 = vmatpush1.xpose.msra.mxu0 0.0
          %1055 = vmatprep.subr.mxu0 0.0
          %1056 = vmatpush1.xpose.msra.mxu0 0.0
          %1057 = vmatprep.subr.mxu0 0.0
          %1058 = vmatpush1.xpose.msra.mxu0 0.0
          %1059 = vmatprep.subr.mxu0 0.0
          %1060 = vmatpush1.xpose.msra.mxu0 %v1027
          %1061 = vmatprep.subr.mxu0 0.0
          %1062 = vmatpush2.xpose.msra.mxu0 0.0
          %1063 = vmatprep.subr.mxu0 0.0
          %1064 = vmatpush2.xpose.msra.mxu0 0.0
          %1065 = vmatprep.subr.mxu0 0.0
          %1066 = vmatpush2.xpose.msra.mxu0 0.0
          %1067 = vmatprep.subr.mxu0 0.0
          %1068 = vmatpush2.xpose.msra.mxu0 0.0
          %1069 = vmatprep.subr.mxu0 0.0
          %1070 = vmatpush2.xpose.msra.mxu0 0.0
          %1071 = vmatprep.subr.mxu0 0.0
          %1072 = vmatpush2.xpose.msra.mxu0 0.0
          %1073 = vmatprep.subr.mxu0 0.0
          %1074 = vmatpush2.xpose.msra.mxu0 0.0
          %1075 = vmatprep.subr.mxu0 0.0
          %1076 = vmatpush2.xpose.msra.mxu0 0.0
          %1077 = vmatprep.subr.mxu0 0.0
          %1078 = vmatpush2.xpose.msra.mxu0 0.0
          %1079 = vmatprep.subr.mxu0 0.0
          %1080 = vmatpush2.xpose.msra.mxu0 0.0
          %1081 = vmatprep.subr.mxu0 0.0
          %1082 = vmatpush2.xpose.msra.mxu0 0.0
          %1083 = vmatprep.subr.mxu0 0.0
          %1084 = vmatpush2.xpose.msra.mxu0 0.0
          %1085 = vmatprep.subr.mxu0 0.0
          %1086 = vmatpush2.xpose.msra.mxu0 0.0
          %1087 = vmatprep.subr.mxu0 0.0
          %1088 = vmatpush2.xpose.msra.mxu0 0.0
          %1089 = vmatprep.subr.mxu0 0.0
          %1090 = vmatpush2.xpose.msra.mxu0 0.0
          %1091 = vmatprep.subr.mxu0 0.0
          %1092 = vmatpush2.xpose.msra.mxu0 0.0
          %1093 = vmatprep.mubr.f32.mxu0 0.0
          %1094 = vmatmul.mubr.f32.gmra.mxu0 %v1025
          %v1095 = vpop.f32.mrf.mxu0
          %v1096 = vadd.f32 0.0, %v1095
          %v1097 = vpop.f32.mrf.mxu0
          %1098 = vdwg.mxu0
          %v1099 = vmul.f32 %v1096, 0.35355338
          %v1100 = vsel %vm1024, %v1099, -inf
          %1101 = vmax.xlane.f32.xlu0 %v1100
          %v1102 = vpop.xlane.xlu0 %1101
          %v1103 = vsub.f32 %v1099, %v1102
          %v1104 = vmul.f32 %v1103, 1.442695
          %v1105 = vpow.pop %v1104
          %v1106 = vsel %vm1024, %v1105, 0.0
          %1107 = vadd.xlane.f32.xlu0 %v1106
          %v1108 = vpop.xlane.xlu0 %1107
          %v1109 = vrcp.pop %v1108
          %v1110 = vmul.f32 %v1105, %v1109
          %1111 = vrot.lane.b32.xlu0 %v1013, 64
          %v1112 = vpop.permute.xlu0 %1111
          %v1115 = vsel %vm1024, %v1110, 0
          %1117 = vmatprep.subr.mxu0 0.0
          %1118 = vmatpush1.msra.mxu0 0.0
          %1119 = vmatprep.subr.mxu0 0.0
          %1120 = vmatpush1.msra.mxu0 0.0
          %1121 = vmatprep.subr.mxu0 0.0
          %1122 = vmatpush1.msra.mxu0 0.0
          %1123 = vmatprep.subr.mxu0 0.0
          %1124 = vmatpush1.msra.mxu0 0.0
          %1125 = vmatprep.subr.mxu0 0.0
          %1126 = vmatpush1.msra.mxu0 0.0
          %1127 = vmatprep.subr.mxu0 0.0
          %1128 = vmatpush1.msra.mxu0 0.0
          %1129 = vmatprep.subr.mxu0 0.0
          %1130 = vmatpush1.msra.mxu0 0.0
          %1131 = vmatprep.subr.mxu0 0.0
          %1132 = vmatpush1.msra.mxu0 0.0
          %1133 = vmatprep.subr.mxu0 0.0
          %1134 = vmatpush1.msra.mxu0 0.0
          %1135 = vmatprep.subr.mxu0 0.0
          %1136 = vmatpush1.msra.mxu0 0.0
          %1137 = vmatprep.subr.mxu0 0.0
          %1138 = vmatpush1.msra.mxu0 0.0
          %1139 = vmatprep.subr.mxu0 0.0
          %1140 = vmatpush1.msra.mxu0 0.0
          %1141 = vmatprep.subr.mxu0 0.0
          %1142 = vmatpush1.msra.mxu0 0.0
          %1143 = vmatprep.subr.mxu0 0.0
          %1144 = vmatpush1.msra.mxu0 0.0
          %1145 = vmatprep.subr.mxu0 0.0
          %1146 = vmatpush1.msra.mxu0 0.0
          %1147 = vmatprep.subr.mxu0 0.0
          %1148 = vmatpush1.msra.mxu0 %v1112
          %1149 = vmatprep.subr.mxu0 0.0
          %1150 = vmatpush2.msra.mxu0 0.0
          %1151 = vmatprep.subr.mxu0 0.0
          %1152 = vmatpush2.msra.mxu0 0.0
          %1153 = vmatprep.subr.mxu0 0.0
          %1154 = vmatpush2.msra.mxu0 0.0
          %1155 = vmatprep.subr.mxu0 0.0
          %1156 = vmatpush2.msra.mxu0 0.0
          %1157 = vmatprep.subr.mxu0 0.0
          %1158 = vmatpush2.msra.mxu0 0.0
          %1159 = vmatprep.subr.mxu0 0.0
          %1160 = vmatpush2.msra.mxu0 0.0
          %1161 = vmatprep.subr.mxu0 0.0
          %1162 = vmatpush2.msra.mxu0 0.0
          %1163 = vmatprep.subr.mxu0 0.0
          %1164 = vmatpush2.msra.mxu0 0.0
          %1165 = vmatprep.subr.mxu0 0.0
          %1166 = vmatpush2.msra.mxu0 0.0
          %1167 = vmatprep.subr.mxu0 0.0
          %1168 = vmatpush2.msra.mxu0 0.0
          %1169 = vmatprep.subr.mxu0 0.0
          %1170 = vmatpush2.msra.mxu0 0.0
          %1171 = vmatprep.subr.mxu0 0.0
          %1172 = vmatpush2.msra.mxu0 0.0
          %1173 = vmatprep.subr.mxu0 0.0
          %1174 = vmatpush2.msra.mxu0 0.0
          %1175 = vmatprep.subr.mxu0 0.0
          %1176 = vmatpush2.msra.mxu0 0.0
          %1177 = vmatprep.subr.mxu0 0.0
          %1178 = vmatpush2.msra.mxu0 0.0
          %1179 = vmatprep.subr.mxu0 0.0
          %1180 = vmatpush2.msra.mxu0 0.0
          %1181 = vmatprep.mubr.f32.mxu0 0.0
          %1182 = vmatmul.mubr.f32.gmra.mxu0 %v1115
          %v1183 = vpop.f32.mrf.mxu0
          %v1184 = vadd.f32 0.0, %v1183
          %v1185 = vpop.f32.mrf.mxu0
          %1186 = vdwg.mxu0
          %1187 = vst.msk [vmem:[#allocation2] sm:$0xff] %vm1024, %v1184
          %1188 = vrot.lane.b32.xlu0 %v1013, 120
          %v1189 = vpop.permute.xlu0 %1188
          %1190 = vrot.lane.b32.xlu0 %v1013, 88
          %v1191 = vpop.permute.xlu0 %1190
          %v1192 = vsel %vm1024, %v1189, 0
          %v1194 = vsel %vm1024, %v1191, 0
          %1196 = vmatprep.subr.mxu0 0.0
          %1197 = vmatpush1.xpose.msra.mxu0 0.0
          %1198 = vmatprep.subr.mxu0 0.0
          %1199 = vmatpush1.xpose.msra.mxu0 0.0
          %1200 = vmatprep.subr.mxu0 0.0
          %1201 = vmatpush1.xpose.msra.mxu0 0.0
          %1202 = vmatprep.subr.mxu0 0.0
          %1203 = vmatpush1.xpose.msra.mxu0 0.0
          %1204 = vmatprep.subr.mxu0 0.0
          %1205 = vmatpush1.xpose.msra.mxu0 0.0
          %1206 = vmatprep.subr.mxu0 0.0
          %1207 = vmatpush1.xpose.msra.mxu0 0.0
          %1208 = vmatprep.subr.mxu0 0.0
          %1209 = vmatpush1.xpose.msra.mxu0 0.0
          %1210 = vmatprep.subr.mxu0 0.0
          %1211 = vmatpush1.xpose.msra.mxu0 0.0
          %1212 = vmatprep.subr.mxu0 0.0
          %1213 = vmatpush1.xpose.msra.mxu0 0.0
          %1214 = vmatprep.subr.mxu0 0.0
          %1215 = vmatpush1.xpose.msra.mxu0 0.0
          %1216 = vmatprep.subr.mxu0 0.0
          %1217 = vmatpush1.xpose.msra.mxu0 0.0
          %1218 = vmatprep.subr.mxu0 0.0
          %1219 = vmatpush1.xpose.msra.mxu0 0.0
          %1220 = vmatprep.subr.mxu0 0.0
          %1221 = vmatpush1.xpose.msra.mxu0 0.0
          %1222 = vmatprep.subr.mxu0 0.0
          %1223 = vmatpush1.xpose.msra.mxu0 0.0
          %1224 = vmatprep.subr.mxu0 0.0
          %1225 = vmatpush1.xpose.msra.mxu0 0.0
          %1226 = vmatprep.subr.mxu0 0.0
          %1227 = vmatpush1.xpose.msra.mxu0 %v1194
          %1228 = vmatprep.subr.mxu0 0.0
          %1229 = vmatpush2.xpose.msra.mxu0 0.0
          %1230 = vmatprep.subr.mxu0 0.0
          %1231 = vmatpush2.xpose.msra.mxu0 0.0
          %1232 = vmatprep.subr.mxu0 0.0
          %1233 = vmatpush2.xpose.msra.mxu0 0.0
          %1234 = vmatprep.subr.mxu0 0.0
          %1235 = vmatpush2.xpose.msra.mxu0 0.0
          %1236 = vmatprep.subr.mxu0 0.0
          %1237 = vmatpush2.xpose.msra.mxu0 0.0
          %1238 = vmatprep.subr.mxu0 0.0
          %1239 = vmatpush2.xpose.msra.mxu0 0.0
          %1240 = vmatprep.subr.mxu0 0.0
          %1241 = vmatpush2.xpose.msra.mxu0 0.0
          %1242 = vmatprep.subr.mxu0 0.0
          %1243 = vmatpush2.xpose.msra.mxu0 0.0
          %1244 = vmatprep.subr.mxu0 0.0
          %1245 = vmatpush2.xpose.msra.mxu0 0.0
          %1246 = vmatprep.subr.mxu0 0.0
          %1247 = vmatpush2.xpose.msra.mxu0 0.0
          %1248 = vmatprep.subr.mxu0 0.0
          %1249 = vmatpush2.xpose.msra.mxu0 0.0
          %1250 = vmatprep.subr.mxu0 0.0
          %1251 = vmatpush2.xpose.msra.mxu0 0.0
          %1252 = vmatprep.subr.mxu0 0.0
          %1253 = vmatpush2.xpose.msra.mxu0 0.0
          %1254 = vmatprep.subr.mxu0 0.0
          %1255 = vmatpush2.xpose.msra.mxu0 0.0
          %1256 = vmatprep.subr.mxu0 0.0
          %1257 = vmatpush2.xpose.msra.mxu0 0.0
          %1258 = vmatprep.subr.mxu0 0.0
          %1259 = vmatpush2.xpose.msra.mxu0 0.0
          %1260 = vmatprep.mubr.f32.mxu0 0.0
          %1261 = vmatmul.mubr.f32.gmra.mxu0 %v1192
          %v1262 = vpop.f32.mrf.mxu0
          %v1263 = vadd.f32 0.0, %v1262
          %v1264 = vpop.f32.mrf.mxu0
          %1265 = vdwg.mxu0
          %v1266 = vmul.f32 %v1263, 0.35355338
          %v1267 = vsel %vm1024, %v1266, -inf
          %1268 = vmax.xlane.f32.xlu0 %v1267
          %v1269 = vpop.xlane.xlu0 %1268
          %v1270 = vsub.f32 %v1266, %v1269
          %v1271 = vmul.f32 %v1270, 1.442695
          %v1272 = vpow.pop %v1271
          %v1273 = vsel %vm1024, %v1272, 0.0
          %1274 = vadd.xlane.f32.xlu0 %v1273
          %v1275 = vpop.xlane.xlu0 %1274
          %v1276 = vrcp.pop %v1275
          %v1277 = vmul.f32 %v1272, %v1276
          %1278 = vrot.lane.b32.xlu0 %v1013, 56
          %v1279 = vpop.permute.xlu0 %1278
          %v1282 = vsel %vm1024, %v1277, 0
          %1284 = vmatprep.subr.mxu0 0.0
          %1285 = vmatpush1.msra.mxu0 0.0
          %1286 = vmatprep.subr.mxu0 0.0
          %1287 = vmatpush1.msra.mxu0 0.0
          %1288 = vmatprep.subr.mxu0 0.0
          %1289 = vmatpush1.msra.mxu0 0.0
          %1290 = vmatprep.subr.mxu0 0.0
          %1291 = vmatpush1.msra.mxu0 0.0
          %1292 = vmatprep.subr.mxu0 0.0
          %1293 = vmatpush1.msra.mxu0 0.0
          %1294 = vmatprep.subr.mxu0 0.0
          %1295 = vmatpush1.msra.mxu0 0.0
          %1296 = vmatprep.subr.mxu0 0.0
          %1297 = vmatpush1.msra.mxu0 0.0
          %1298 = vmatprep.subr.mxu0 0.0
          %1299 = vmatpush1.msra.mxu0 0.0
          %1300 = vmatprep.subr.mxu0 0.0
          %1301 = vmatpush1.msra.mxu0 0.0
          %1302 = vmatprep.subr.mxu0 0.0
          %1303 = vmatpush1.msra.mxu0 0.0
          %1304 = vmatprep.subr.mxu0 0.0
          %1305 = vmatpush1.msra.mxu0 0.0
          %1306 = vmatprep.subr.mxu0 0.0
          %1307 = vmatpush1.msra.mxu0 0.0
          %1308 = vmatprep.subr.mxu0 0.0
          %1309 = vmatpush1.msra.mxu0 0.0
          %1310 = vmatprep.subr.mxu0 0.0
          %1311 = vmatpush1.msra.mxu0 0.0
          %1312 = vmatprep.subr.mxu0 0.0
          %1313 = vmatpush1.msra.mxu0 0.0
          %1314 = vmatprep.subr.mxu0 0.0
          %1315 = vmatpush1.msra.mxu0 %v1279
          %1316 = vmatprep.subr.mxu0 0.0
          %1317 = vmatpush2.msra.mxu0 0.0
          %1318 = vmatprep.subr.mxu0 0.0
          %1319 = vmatpush2.msra.mxu0 0.0
          %1320 = vmatprep.subr.mxu0 0.0
          %1321 = vmatpush2.msra.mxu0 0.0
          %1322 = vmatprep.subr.mxu0 0.0
          %1323 = vmatpush2.msra.mxu0 0.0
          %1324 = vmatprep.subr.mxu0 0.0
          %1325 = vmatpush2.msra.mxu0 0.0
          %1326 = vmatprep.subr.mxu0 0.0
          %1327 = vmatpush2.msra.mxu0 0.0
          %1328 = vmatprep.subr.mxu0 0.0
          %1329 = vmatpush2.msra.mxu0 0.0
          %1330 = vmatprep.subr.mxu0 0.0
          %1331 = vmatpush2.msra.mxu0 0.0
          %1332 = vmatprep.subr.mxu0 0.0
          %1333 = vmatpush2.msra.mxu0 0.0
          %1334 = vmatprep.subr.mxu0 0.0
          %1335 = vmatpush2.msra.mxu0 0.0
          %1336 = vmatprep.subr.mxu0 0.0
          %1337 = vmatpush2.msra.mxu0 0.0
          %1338 = vmatprep.subr.mxu0 0.0
          %1339 = vmatpush2.msra.mxu0 0.0
          %1340 = vmatprep.subr.mxu0 0.0
          %1341 = vmatpush2.msra.mxu0 0.0
          %1342 = vmatprep.subr.mxu0 0.0
          %1343 = vmatpush2.msra.mxu0 0.0
          %1344 = vmatprep.subr.mxu0 0.0
          %1345 = vmatpush2.msra.mxu0 0.0
          %1346 = vmatprep.subr.mxu0 0.0
          %1347 = vmatpush2.msra.mxu0 0.0
          %1348 = vmatprep.mubr.f32.mxu0 0.0
          %1349 = vmatmul.mubr.f32.gmra.mxu0 %v1282
          %v1350 = vpop.f32.mrf.mxu0
          %v1351 = vadd.f32 0.0, %v1350
          %v1352 = vpop.f32.mrf.mxu0
          %1353 = vdwg.mxu0
          %1355 = vrot.lane.b32.xlu0 %v1351, 8
          %v1356 = vpop.permute.xlu0 %1355
          %vm1358 = vcmask 130112
          %1359 = vst.msk [vmem:[#allocation2] sm:$0xff] %vm1358, %v1356
          %1360 = vrot.lane.b32.xlu0 %v1013, 112
          %v1361 = vpop.permute.xlu0 %1360
          %1362 = vrot.lane.b32.xlu0 %v1013, 80
          %v1363 = vpop.permute.xlu0 %1362
          %v1364 = vsel %vm1024, %v1361, 0
          %v1366 = vsel %vm1024, %v1363, 0
          %1368 = vmatprep.subr.mxu0 0.0
          %1369 = vmatpush1.xpose.msra.mxu0 0.0
          %1370 = vmatprep.subr.mxu0 0.0
          %1371 = vmatpush1.xpose.msra.mxu0 0.0
          %1372 = vmatprep.subr.mxu0 0.0
          %1373 = vmatpush1.xpose.msra.mxu0 0.0
          %1374 = vmatprep.subr.mxu0 0.0
          %1375 = vmatpush1.xpose.msra.mxu0 0.0
          %1376 = vmatprep.subr.mxu0 0.0
          %1377 = vmatpush1.xpose.msra.mxu0 0.0
          %1378 = vmatprep.subr.mxu0 0.0
          %1379 = vmatpush1.xpose.msra.mxu0 0.0
          %1380 = vmatprep.subr.mxu0 0.0
          %1381 = vmatpush1.xpose.msra.mxu0 0.0
          %1382 = vmatprep.subr.mxu0 0.0
          %1383 = vmatpush1.xpose.msra.mxu0 0.0
          %1384 = vmatprep.subr.mxu0 0.0
          %1385 = vmatpush1.xpose.msra.mxu0 0.0
          %1386 = vmatprep.subr.mxu0 0.0
          %1387 = vmatpush1.xpose.msra.mxu0 0.0
          %1388 = vmatprep.subr.mxu0 0.0
          %1389 = vmatpush1.xpose.msra.mxu0 0.0
          %1390 = vmatprep.subr.mxu0 0.0
          %1391 = vmatpush1.xpose.msra.mxu0 0.0
          %1392 = vmatprep.subr.mxu0 0.0
          %1393 = vmatpush1.xpose.msra.mxu0 0.0
          %1394 = vmatprep.subr.mxu0 0.0
          %1395 = vmatpush1.xpose.msra.mxu0 0.0
          %1396 = vmatprep.subr.mxu0 0.0
          %1397 = vmatpush1.xpose.msra.mxu0 0.0
          %1398 = vmatprep.subr.mxu0 0.0
          %1399 = vmatpush1.xpose.msra.mxu0 %v1366
          %1400 = vmatprep.subr.mxu0 0.0
          %1401 = vmatpush2.xpose.msra.mxu0 0.0
          %1402 = vmatprep.subr.mxu0 0.0
          %1403 = vmatpush2.xpose.msra.mxu0 0.0
          %1404 = vmatprep.subr.mxu0 0.0
          %1405 = vmatpush2.xpose.msra.mxu0 0.0
          %1406 = vmatprep.subr.mxu0 0.0
          %1407 = vmatpush2.xpose.msra.mxu0 0.0
          %1408 = vmatprep.subr.mxu0 0.0
          %1409 = vmatpush2.xpose.msra.mxu0 0.0
          %1410 = vmatprep.subr.mxu0 0.0
          %1411 = vmatpush2.xpose.msra.mxu0 0.0
          %1412 = vmatprep.subr.mxu0 0.0
          %1413 = vmatpush2.xpose.msra.mxu0 0.0
          %1414 = vmatprep.subr.mxu0 0.0
          %1415 = vmatpush2.xpose.msra.mxu0 0.0
          %1416 = vmatprep.subr.mxu0 0.0
          %1417 = vmatpush2.xpose.msra.mxu0 0.0
          %1418 = vmatprep.subr.mxu0 0.0
          %1419 = vmatpush2.xpose.msra.mxu0 0.0
          %1420 = vmatprep.subr.mxu0 0.0
          %1421 = vmatpush2.xpose.msra.mxu0 0.0
          %1422 = vmatprep.subr.mxu0 0.0
          %1423 = vmatpush2.xpose.msra.mxu0 0.0
          %1424 = vmatprep.subr.mxu0 0.0
          %1425 = vmatpush2.xpose.msra.mxu0 0.0
          %1426 = vmatprep.subr.mxu0 0.0
          %1427 = vmatpush2.xpose.msra.mxu0 0.0
          %1428 = vmatprep.subr.mxu0 0.0
          %1429 = vmatpush2.xpose.msra.mxu0 0.0
          %1430 = vmatprep.subr.mxu0 0.0
          %1431 = vmatpush2.xpose.msra.mxu0 0.0
          %1432 = vmatprep.mubr.f32.mxu0 0.0
          %1433 = vmatmul.mubr.f32.gmra.mxu0 %v1364
          %v1434 = vpop.f32.mrf.mxu0
          %v1435 = vadd.f32 0.0, %v1434
          %v1436 = vpop.f32.mrf.mxu0
          %1437 = vdwg.mxu0
          %v1438 = vmul.f32 %v1435, 0.35355338
          %v1439 = vsel %vm1024, %v1438, -inf
          %1440 = vmax.xlane.f32.xlu0 %v1439
          %v1441 = vpop.xlane.xlu0 %1440
          %v1442 = vsub.f32 %v1438, %v1441
          %v1443 = vmul.f32 %v1442, 1.442695
          %v1444 = vpow.pop %v1443
          %v1445 = vsel %vm1024, %v1444, 0.0
          %1446 = vadd.xlane.f32.xlu0 %v1445
          %v1447 = vpop.xlane.xlu0 %1446
          %v1448 = vrcp.pop %v1447
          %v1449 = vmul.f32 %v1444, %v1448
          %1450 = vrot.lane.b32.xlu0 %v1013, 48
          %v1451 = vpop.permute.xlu0 %1450
          %v1454 = vsel %vm1024, %v1449, 0
          %1456 = vmatprep.subr.mxu0 0.0
          %1457 = vmatpush1.msra.mxu0 0.0
          %1458 = vmatprep.subr.mxu0 0.0
          %1459 = vmatpush1.msra.mxu0 0.0
          %1460 = vmatprep.subr.mxu0 0.0
          %1461 = vmatpush1.msra.mxu0 0.0
          %1462 = vmatprep.subr.mxu0 0.0
          %1463 = vmatpush1.msra.mxu0 0.0
          %1464 = vmatprep.subr.mxu0 0.0
          %1465 = vmatpush1.msra.mxu0 0.0
          %1466 = vmatprep.subr.mxu0 0.0
          %1467 = vmatpush1.msra.mxu0 0.0
          %1468 = vmatprep.subr.mxu0 0.0
          %1469 = vmatpush1.msra.mxu0 0.0
          %1470 = vmatprep.subr.mxu0 0.0
          %1471 = vmatpush1.msra.mxu0 0.0
          %1472 = vmatprep.subr.mxu0 0.0
          %1473 = vmatpush1.msra.mxu0 0.0
          %1474 = vmatprep.subr.mxu0 0.0
          %1475 = vmatpush1.msra.mxu0 0.0
          %1476 = vmatprep.subr.mxu0 0.0
          %1477 = vmatpush1.msra.mxu0 0.0
          %1478 = vmatprep.subr.mxu0 0.0
          %1479 = vmatpush1.msra.mxu0 0.0
          %1480 = vmatprep.subr.mxu0 0.0
          %1481 = vmatpush1.msra.mxu0 0.0
          %1482 = vmatprep.subr.mxu0 0.0
          %1483 = vmatpush1.msra.mxu0 0.0
          %1484 = vmatprep.subr.mxu0 0.0
          %1485 = vmatpush1.msra.mxu0 0.0
          %1486 = vmatprep.subr.mxu0 0.0
          %1487 = vmatpush1.msra.mxu0 %v1451
          %1488 = vmatprep.subr.mxu0 0.0
          %1489 = vmatpush2.msra.mxu0 0.0
          %1490 = vmatprep.subr.mxu0 0.0
          %1491 = vmatpush2.msra.mxu0 0.0
          %1492 = vmatprep.subr.mxu0 0.0
          %1493 = vmatpush2.msra.mxu0 0.0
          %1494 = vmatprep.subr.mxu0 0.0
          %1495 = vmatpush2.msra.mxu0 0.0
          %1496 = vmatprep.subr.mxu0 0.0
          %1497 = vmatpush2.msra.mxu0 0.0
          %1498 = vmatprep.subr.mxu0 0.0
          %1499 = vmatpush2.msra.mxu0 0.0
          %1500 = vmatprep.subr.mxu0 0.0
          %1501 = vmatpush2.msra.mxu0 0.0
          %1502 = vmatprep.subr.mxu0 0.0
          %1503 = vmatpush2.msra.mxu0 0.0
          %1504 = vmatprep.subr.mxu0 0.0
          %1505 = vmatpush2.msra.mxu0 0.0
          %1506 = vmatprep.subr.mxu0 0.0
          %1507 = vmatpush2.msra.mxu0 0.0
          %1508 = vmatprep.subr.mxu0 0.0
          %1509 = vmatpush2.msra.mxu0 0.0
          %1510 = vmatprep.subr.mxu0 0.0
          %1511 = vmatpush2.msra.mxu0 0.0
          %1512 = vmatprep.subr.mxu0 0.0
          %1513 = vmatpush2.msra.mxu0 0.0
          %1514 = vmatprep.subr.mxu0 0.0
          %1515 = vmatpush2.msra.mxu0 0.0
          %1516 = vmatprep.subr.mxu0 0.0
          %1517 = vmatpush2.msra.mxu0 0.0
          %1518 = vmatprep.subr.mxu0 0.0
          %1519 = vmatpush2.msra.mxu0 0.0
          %1520 = vmatprep.mubr.f32.mxu0 0.0
          %1521 = vmatmul.mubr.f32.gmra.mxu0 %v1454
          %v1522 = vpop.f32.mrf.mxu0
          %v1523 = vadd.f32 0.0, %v1522
          %v1524 = vpop.f32.mrf.mxu0
          %1525 = vdwg.mxu0
          %1527 = vrot.lane.b32.xlu0 %v1523, 16
          %v1528 = vpop.permute.xlu0 %1527
          %vm1530 = vcmask 195712
          %1531 = vst.msk [vmem:[#allocation2] sm:$0xff] %vm1530, %v1528
          %1532 = vrot.lane.b32.xlu0 %v1013, 104
          %v1533 = vpop.permute.xlu0 %1532
          %1534 = vrot.lane.b32.xlu0 %v1013, 72
          %v1535 = vpop.permute.xlu0 %1534
          %v1536 = vsel %vm1024, %v1533, 0
          %v1538 = vsel %vm1024, %v1535, 0
          %1540 = vmatprep.subr.mxu0 0.0
          %1541 = vmatpush1.xpose.msra.mxu0 0.0
          %1542 = vmatprep.subr.mxu0 0.0
          %1543 = vmatpush1.xpose.msra.mxu0 0.0
          %1544 = vmatprep.subr.mxu0 0.0
          %1545 = vmatpush1.xpose.msra.mxu0 0.0
          %1546 = vmatprep.subr.mxu0 0.0
          %1547 = vmatpush1.xpose.msra.mxu0 0.0
          %1548 = vmatprep.subr.mxu0 0.0
          %1549 = vmatpush1.xpose.msra.mxu0 0.0
          %1550 = vmatprep.subr.mxu0 0.0
          %1551 = vmatpush1.xpose.msra.mxu0 0.0
          %1552 = vmatprep.subr.mxu0 0.0
          %1553 = vmatpush1.xpose.msra.mxu0 0.0
          %1554 = vmatprep.subr.mxu0 0.0
          %1555 = vmatpush1.xpose.msra.mxu0 0.0
          %1556 = vmatprep.subr.mxu0 0.0
          %1557 = vmatpush1.xpose.msra.mxu0 0.0
          %1558 = vmatprep.subr.mxu0 0.0
          %1559 = vmatpush1.xpose.msra.mxu0 0.0
          %1560 = vmatprep.subr.mxu0 0.0
          %1561 = vmatpush1.xpose.msra.mxu0 0.0
          %1562 = vmatprep.subr.mxu0 0.0
          %1563 = vmatpush1.xpose.msra.mxu0 0.0
          %1564 = vmatprep.subr.mxu0 0.0
          %1565 = vmatpush1.xpose.msra.mxu0 0.0
          %1566 = vmatprep.subr.mxu0 0.0
          %1567 = vmatpush1.xpose.msra.mxu0 0.0
          %1568 = vmatprep.subr.mxu0 0.0
          %1569 = vmatpush1.xpose.msra.mxu0 0.0
          %1570 = vmatprep.subr.mxu0 0.0
          %1571 = vmatpush1.xpose.msra.mxu0 %v1538
          %1572 = vmatprep.subr.mxu0 0.0
          %1573 = vmatpush2.xpose.msra.mxu0 0.0
          %1574 = vmatprep.subr.mxu0 0.0
          %1575 = vmatpush2.xpose.msra.mxu0 0.0
          %1576 = vmatprep.subr.mxu0 0.0
          %1577 = vmatpush2.xpose.msra.mxu0 0.0
          %1578 = vmatprep.subr.mxu0 0.0
          %1579 = vmatpush2.xpose.msra.mxu0 0.0
          %1580 = vmatprep.subr.mxu0 0.0
          %1581 = vmatpush2.xpose.msra.mxu0 0.0
          %1582 = vmatprep.subr.mxu0 0.0
          %1583 = vmatpush2.xpose.msra.mxu0 0.0
          %1584 = vmatprep.subr.mxu0 0.0
          %1585 = vmatpush2.xpose.msra.mxu0 0.0
          %1586 = vmatprep.subr.mxu0 0.0
          %1587 = vmatpush2.xpose.msra.mxu0 0.0
          %1588 = vmatprep.subr.mxu0 0.0
          %1589 = vmatpush2.xpose.msra.mxu0 0.0
          %1590 = vmatprep.subr.mxu0 0.0
          %1591 = vmatpush2.xpose.msra.mxu0 0.0
          %1592 = vmatprep.subr.mxu0 0.0
          %1593 = vmatpush2.xpose.msra.mxu0 0.0
          %1594 = vmatprep.subr.mxu0 0.0
          %1595 = vmatpush2.xpose.msra.mxu0 0.0
          %1596 = vmatprep.subr.mxu0 0.0
          %1597 = vmatpush2.xpose.msra.mxu0 0.0
          %1598 = vmatprep.subr.mxu0 0.0
          %1599 = vmatpush2.xpose.msra.mxu0 0.0
          %1600 = vmatprep.subr.mxu0 0.0
          %1601 = vmatpush2.xpose.msra.mxu0 0.0
          %1602 = vmatprep.subr.mxu0 0.0
          %1603 = vmatpush2.xpose.msra.mxu0 0.0
          %1604 = vmatprep.mubr.f32.mxu0 0.0
          %1605 = vmatmul.mubr.f32.gmra.mxu0 %v1536
          %v1606 = vpop.f32.mrf.mxu0
          %v1607 = vadd.f32 0.0, %v1606
          %v1608 = vpop.f32.mrf.mxu0
          %1609 = vdwg.mxu0
          %v1610 = vmul.f32 %v1607, 0.35355338
          %v1611 = vsel %vm1024, %v1610, -inf
          %1612 = vmax.xlane.f32.xlu0 %v1611
          %v1613 = vpop.xlane.xlu0 %1612
          %v1614 = vsub.f32 %v1610, %v1613
          %v1615 = vmul.f32 %v1614, 1.442695
          %v1616 = vpow.pop %v1615
          %v1617 = vsel %vm1024, %v1616, 0.0
          %1618 = vadd.xlane.f32.xlu0 %v1617
          %v1619 = vpop.xlane.xlu0 %1618
          %v1620 = vrcp.pop %v1619
          %v1621 = vmul.f32 %v1616, %v1620
          %1622 = vrot.lane.b32.xlu0 %v1013, 40
          %v1623 = vpop.permute.xlu0 %1622
          %v1626 = vsel %vm1024, %v1621, 0
          %1628 = vmatprep.subr.mxu0 0.0
          %1629 = vmatpush1.msra.mxu0 0.0
          %1630 = vmatprep.subr.mxu0 0.0
          %1631 = vmatpush1.msra.mxu0 0.0
          %1632 = vmatprep.subr.mxu0 0.0
          %1633 = vmatpush1.msra.mxu0 0.0
          %1634 = vmatprep.subr.mxu0 0.0
          %1635 = vmatpush1.msra.mxu0 0.0
          %1636 = vmatprep.subr.mxu0 0.0
          %1637 = vmatpush1.msra.mxu0 0.0
          %1638 = vmatprep.subr.mxu0 0.0
          %1639 = vmatpush1.msra.mxu0 0.0
          %1640 = vmatprep.subr.mxu0 0.0
          %1641 = vmatpush1.msra.mxu0 0.0
          %1642 = vmatprep.subr.mxu0 0.0
          %1643 = vmatpush1.msra.mxu0 0.0
          %1644 = vmatprep.subr.mxu0 0.0
          %1645 = vmatpush1.msra.mxu0 0.0
          %1646 = vmatprep.subr.mxu0 0.0
          %1647 = vmatpush1.msra.mxu0 0.0
          %1648 = vmatprep.subr.mxu0 0.0
          %1649 = vmatpush1.msra.mxu0 0.0
          %1650 = vmatprep.subr.mxu0 0.0
          %1651 = vmatpush1.msra.mxu0 0.0
          %1652 = vmatprep.subr.mxu0 0.0
          %1653 = vmatpush1.msra.mxu0 0.0
          %1654 = vmatprep.subr.mxu0 0.0
          %1655 = vmatpush1.msra.mxu0 0.0
          %1656 = vmatprep.subr.mxu0 0.0
          %1657 = vmatpush1.msra.mxu0 0.0
          %1658 = vmatprep.subr.mxu0 0.0
          %1659 = vmatpush1.msra.mxu0 %v1623
          %1660 = vmatprep.subr.mxu0 0.0
          %1661 = vmatpush2.msra.mxu0 0.0
          %1662 = vmatprep.subr.mxu0 0.0
          %1663 = vmatpush2.msra.mxu0 0.0
          %1664 = vmatprep.subr.mxu0 0.0
          %1665 = vmatpush2.msra.mxu0 0.0
          %1666 = vmatprep.subr.mxu0 0.0
          %1667 = vmatpush2.msra.mxu0 0.0
          %1668 = vmatprep.subr.mxu0 0.0
          %1669 = vmatpush2.msra.mxu0 0.0
          %1670 = vmatprep.subr.mxu0 0.0
          %1671 = vmatpush2.msra.mxu0 0.0
          %1672 = vmatprep.subr.mxu0 0.0
          %1673 = vmatpush2.msra.mxu0 0.0
          %1674 = vmatprep.subr.mxu0 0.0
          %1675 = vmatpush2.msra.mxu0 0.0
          %1676 = vmatprep.subr.mxu0 0.0
          %1677 = vmatpush2.msra.mxu0 0.0
          %1678 = vmatprep.subr.mxu0 0.0
          %1679 = vmatpush2.msra.mxu0 0.0
          %1680 = vmatprep.subr.mxu0 0.0
          %1681 = vmatpush2.msra.mxu0 0.0
          %1682 = vmatprep.subr.mxu0 0.0
          %1683 = vmatpush2.msra.mxu0 0.0
          %1684 = vmatprep.subr.mxu0 0.0
          %1685 = vmatpush2.msra.mxu0 0.0
          %1686 = vmatprep.subr.mxu0 0.0
          %1687 = vmatpush2.msra.mxu0 0.0
          %1688 = vmatprep.subr.mxu0 0.0
          %1689 = vmatpush2.msra.mxu0 0.0
          %1690 = vmatprep.subr.mxu0 0.0
          %1691 = vmatpush2.msra.mxu0 0.0
          %1692 = vmatprep.mubr.f32.mxu0 0.0
          %1693 = vmatmul.mubr.f32.gmra.mxu0 %v1626
          %v1694 = vpop.f32.mrf.mxu0
          %v1695 = vadd.f32 0.0, %v1694
          %v1696 = vpop.f32.mrf.mxu0
          %1697 = vdwg.mxu0
          %1699 = vrot.lane.b32.xlu0 %v1695, 24
          %v1700 = vpop.permute.xlu0 %1699
          %vm1702 = vcmask 261312
          %1703 = vst.msk [vmem:[#allocation2] sm:$0xff] %vm1702, %v1700
          %v1704 = vld [vmem:[#allocation2] sm:$0xff]
          %v1706 = vlaneseq
          %v1707 = vshrl.u32 %v1706, 7
          %v1708 = vsub.s32 0, %v1707
          %v1709 = vrot.slane %v1020, %v1708
          %v1712 = vsel %vm903, %v1704, 0
          %1714 = vmatprep.subr.mxu0 0.0
          %1715 = vmatpush1.msra.mxu0 0.0
          %1716 = vmatprep.subr.mxu0 0.0
          %1717 = vmatpush1.msra.mxu0 0.0
          %1718 = vmatprep.subr.mxu0 0.0
          %1719 = vmatpush1.msra.mxu0 0.0
          %1720 = vmatprep.subr.mxu0 0.0
          %1721 = vmatpush1.msra.mxu0 0.0
          %1722 = vmatprep.subr.mxu0 0.0
          %1723 = vmatpush1.msra.mxu0 0.0
          %1724 = vmatprep.subr.mxu0 0.0
          %1725 = vmatpush1.msra.mxu0 0.0
          %1726 = vmatprep.subr.mxu0 0.0
          %1727 = vmatpush1.msra.mxu0 0.0
          %1728 = vmatprep.subr.mxu0 0.0
          %1729 = vmatpush1.msra.mxu0 0.0
          %1730 = vmatprep.subr.mxu0 0.0
          %1731 = vmatpush1.msra.mxu0 0.0
          %1732 = vmatprep.subr.mxu0 0.0
          %1733 = vmatpush1.msra.mxu0 0.0
          %1734 = vmatprep.subr.mxu0 0.0
          %1735 = vmatpush1.msra.mxu0 0.0
          %1736 = vmatprep.subr.mxu0 0.0
          %1737 = vmatpush1.msra.mxu0 0.0
          %1738 = vmatprep.subr.mxu0 0.0
          %1739 = vmatpush1.msra.mxu0 %v1019
          %1740 = vmatprep.subr.mxu0 0.0
          %1741 = vmatpush1.msra.mxu0 %v1018
          %1742 = vmatprep.subr.mxu0 0.0
          %1743 = vmatpush1.msra.mxu0 %v1017
          %1744 = vmatprep.subr.mxu0 0.0
          %1745 = vmatpush1.msra.mxu0 %v1016
          %1746 = vmatprep.subr.mxu0 0.0
          %1747 = vmatpush2.msra.mxu0 0.0
          %1748 = vmatprep.subr.mxu0 0.0
          %1749 = vmatpush2.msra.mxu0 0.0
          %1750 = vmatprep.subr.mxu0 0.0
          %1751 = vmatpush2.msra.mxu0 0.0
          %1752 = vmatprep.subr.mxu0 0.0
          %1753 = vmatpush2.msra.mxu0 0.0
          %1754 = vmatprep.subr.mxu0 0.0
          %1755 = vmatpush2.msra.mxu0 0.0
          %1756 = vmatprep.subr.mxu0 0.0
          %1757 = vmatpush2.msra.mxu0 0.0
          %1758 = vmatprep.subr.mxu0 0.0
          %1759 = vmatpush2.msra.mxu0 0.0
          %1760 = vmatprep.subr.mxu0 0.0
          %1761 = vmatpush2.msra.mxu0 0.0
          %1762 = vmatprep.subr.mxu0 0.0
          %1763 = vmatpush2.msra.mxu0 0.0
          %1764 = vmatprep.subr.mxu0 0.0
          %1765 = vmatpush2.msra.mxu0 0.0
          %1766 = vmatprep.subr.mxu0 0.0
          %1767 = vmatpush2.msra.mxu0 0.0
          %1768 = vmatprep.subr.mxu0 0.0
          %1769 = vmatpush2.msra.mxu0 0.0
          %1770 = vmatprep.subr.mxu0 0.0
          %1771 = vmatpush2.msra.mxu0 0.0
          %1772 = vmatprep.subr.mxu0 0.0
          %1773 = vmatpush2.msra.mxu0 0.0
          %1774 = vmatprep.subr.mxu0 0.0
          %1775 = vmatpush2.msra.mxu0 0.0
          %1776 = vmatprep.subr.mxu0 0.0
          %1777 = vmatpush2.msra.mxu0 0.0
          %1778 = vmatprep.mubr.f32.mxu0 0.0
          %1779 = vmatmul.mubr.f32.gmra.mxu0 %v1712
          %v1780 = vpop.f32.mrf.mxu0
          %v1781 = vadd.f32 %v1709, %v1780
          %v1782 = vpop.f32.mrf.mxu0
          %1783 = vdwg.mxu0
          %v1784 = vadd.f32 %v898, %v1781
          %v1785 = vld [vmem:[#allocation11] sm:$0x1]
          %v1786 = vld [vmem:[#allocation13] sm:$0x1]
          %v1787 = vsel %vm903, %v1784, 0.0
          %1788 = vadd.xlane.f32.xlu0 %v1787
          %v1789 = vpop.xlane.xlu0 %1788
          %v1790 = vmul.f32 %v1789, %v907
          %v1791 = vsub.f32 %v1784, %v1790
          %v1792 = vmul.f32 %v1791, %v1791
          %v1793 = vsel %vm903, %v1792, 0.0
          %1794 = vadd.xlane.f32.xlu0 %v1793
          %v1795 = vpop.xlane.xlu0 %1794
          %v1796 = vmul.f32 %v1795, %v907
          %v1797 = vadd.f32 %v1796, 1e-05
          %v1798 = vrsqrt.pop %v1797
          %v1799 = vmul.f32 %v1791, %v1798
          %v1801 = vlaneseq
          %v1802 = vshrl.u32 %v1801, 7
          %v1803 = vsub.s32 0, %v1802
          %v1804 = vrot.slane %v1785, %v1803
          %v1806 = vmul.f32 %v1799, %v1804
          %v1808 = vlaneseq
          %v1809 = vshrl.u32 %v1808, 7
          %v1810 = vsub.s32 0, %v1809
          %v1811 = vrot.slane %v1786, %v1810
          %v1813 = vadd.f32 %v1806, %v1811
          %v1814 = vld [vmem:[#allocation20] sm:$0xff]
          %v1815 = vld [vmem:[#allocation20 + $0x8] sm:$0xff]
          %v1816 = vld [vmem:[#allocation20 + $0x10] sm:$0xff]
          %v1817 = vld [vmem:[#allocation20 + $0x18] sm:$0xff]
          %v1818 = vld [vmem:[#allocation22] sm:$0x1]
          %v1820 = vlaneseq
          %v1821 = vshrl.u32 %v1820, 7
          %v1822 = vsub.s32 0, %v1821
          %v1823 = vrot.slane %v1818, %v1822
          %v1826 = vsel %vm903, %v1813, 0
          %1828 = vmatprep.subr.mxu0 0.0
          %1829 = vmatpush1.msra.mxu0 0.0
          %1830 = vmatprep.subr.mxu0 0.0
          %1831 = vmatpush1.msra.mxu0 0.0
          %1832 = vmatprep.subr.mxu0 0.0
          %1833 = vmatpush1.msra.mxu0 0.0
          %1834 = vmatprep.subr.mxu0 0.0
          %1835 = vmatpush1.msra.mxu0 0.0
          %1836 = vmatprep.subr.mxu0 0.0
          %1837 = vmatpush1.msra.mxu0 0.0
          %1838 = vmatprep.subr.mxu0 0.0
          %1839 = vmatpush1.msra.mxu0 0.0
          %1840 = vmatprep.subr.mxu0 0.0
          %1841 = vmatpush1.msra.mxu0 0.0
          %1842 = vmatprep.subr.mxu0 0.0
          %1843 = vmatpush1.msra.mxu0 0.0
          %1844 = vmatprep.subr.mxu0 0.0
          %1845 = vmatpush1.msra.mxu0 0.0
          %1846 = vmatprep.subr.mxu0 0.0
          %1847 = vmatpush1.msra.mxu0 0.0
          %1848 = vmatprep.subr.mxu0 0.0
          %1849 = vmatpush1.msra.mxu0 0.0
          %1850 = vmatprep.subr.mxu0 0.0
          %1851 = vmatpush1.msra.mxu0 0.0
          %1852 = vmatprep.subr.mxu0 0.0
          %1853 = vmatpush1.msra.mxu0 %v1817
          %1854 = vmatprep.subr.mxu0 0.0
          %1855 = vmatpush1.msra.mxu0 %v1816
          %1856 = vmatprep.subr.mxu0 0.0
          %1857 = vmatpush1.msra.mxu0 %v1815
          %1858 = vmatprep.subr.mxu0 0.0
          %1859 = vmatpush1.msra.mxu0 %v1814
          %1860 = vmatprep.subr.mxu0 0.0
          %1861 = vmatpush2.msra.mxu0 0.0
          %1862 = vmatprep.subr.mxu0 0.0
          %1863 = vmatpush2.msra.mxu0 0.0
          %1864 = vmatprep.subr.mxu0 0.0
          %1865 = vmatpush2.msra.mxu0 0.0
          %1866 = vmatprep.subr.mxu0 0.0
          %1867 = vmatpush2.msra.mxu0 0.0
          %1868 = vmatprep.subr.mxu0 0.0
          %1869 = vmatpush2.msra.mxu0 0.0
          %1870 = vmatprep.subr.mxu0 0.0
          %1871 = vmatpush2.msra.mxu0 0.0
          %1872 = vmatprep.subr.mxu0 0.0
          %1873 = vmatpush2.msra.mxu0 0.0
          %1874 = vmatprep.subr.mxu0 0.0
          %1875 = vmatpush2.msra.mxu0 0.0
          %1876 = vmatprep.subr.mxu0 0.0
          %1877 = vmatpush2.msra.mxu0 0.0
          %1878 = vmatprep.subr.mxu0 0.0
          %1879 = vmatpush2.msra.mxu0 0.0
          %1880 = vmatprep.subr.mxu0 0.0
          %1881 = vmatpush2.msra.mxu0 0.0
          %1882 = vmatprep.subr.mxu0 0.0
          %1883 = vmatpush2.msra.mxu0 0.0
          %1884 = vmatprep.subr.mxu0 0.0
          %1885 = vmatpush2.msra.mxu0 0.0
          %1886 = vmatprep.subr.mxu0 0.0
          %1887 = vmatpush2.msra.mxu0 0.0
          %1888 = vmatprep.subr.mxu0 0.0
          %1889 = vmatpush2.msra.mxu0 0.0
          %1890 = vmatprep.subr.mxu0 0.0
          %1891 = vmatpush2.msra.mxu0 0.0
          %1892 = vmatprep.mubr.f32.mxu0 0.0
          %1893 = vmatmul.mubr.f32.gmra.mxu0 %v1826
          %v1894 = vpop.f32.mrf.mxu0
          %v1895 = vadd.f32 %v1823, %v1894
          %v1896 = vpop.f32.mrf.mxu0
          %1897 = vdwg.mxu0
          %1902 = vrot.lane.b32.xlu0 %v1814, 96
          %v1903 = vpop.permute.xlu0 %1902
          %1904 = vrot.lane.b32.xlu0 %v1815, 96
          %v1905 = vpop.permute.xlu0 %1904
          %1906 = vrot.lane.b32.xlu0 %v1816, 96
          %v1907 = vpop.permute.xlu0 %1906
          %1908 = vrot.lane.b32.xlu0 %v1817, 96
          %v1909 = vpop.permute.xlu0 %1908
          %1914 = vrot.lane.b32.xlu0 %v1823, 96
          %v1915 = vpop.permute.xlu0 %1914
          %v1918 = vsel %vm903, %v899, 0
          %v1921 = vsel %vm903, %v900, 0
          %1923 = vmatprep.subr.mxu0 0.0
          %1924 = vmatpush1.msra.mxu0 0.0
          %1925 = vmatprep.subr.mxu0 0.0
          %1926 = vmatpush1.msra.mxu0 0.0
          %1927 = vmatprep.subr.mxu0 0.0
          %1928 = vmatpush1.msra.mxu0 0.0
          %1929 = vmatprep.subr.mxu0 0.0
          %1930 = vmatpush1.msra.mxu0 0.0
          %1931 = vmatprep.subr.mxu0 0.0
          %1932 = vmatpush1.msra.mxu0 0.0
          %1933 = vmatprep.subr.mxu0 0.0
          %1934 = vmatpush1.msra.mxu0 0.0
          %1935 = vmatprep.subr.mxu0 0.0
          %1936 = vmatpush1.msra.mxu0 0.0
          %1937 = vmatprep.subr.mxu0 0.0
          %1938 = vmatpush1.msra.mxu0 0.0
          %1939 = vmatprep.subr.mxu0 0.0
          %1940 = vmatpush1.msra.mxu0 0.0
          %1941 = vmatprep.subr.mxu0 0.0
          %1942 = vmatpush1.msra.mxu0 0.0
          %1943 = vmatprep.subr.mxu0 0.0
          %1944 = vmatpush1.msra.mxu0 0.0
          %1945 = vmatprep.subr.mxu0 0.0
          %1946 = vmatpush1.msra.mxu0 0.0
          %1947 = vmatprep.subr.mxu0 0.0
          %1948 = vmatpush1.msra.mxu0 %v1909
          %1949 = vmatprep.subr.mxu0 0.0
          %1950 = vmatpush1.msra.mxu0 %v1907
          %1951 = vmatprep.subr.mxu0 0.0
          %1952 = vmatpush1.msra.mxu0 %v1905
          %1953 = vmatprep.subr.mxu0 0.0
          %1954 = vmatpush1.msra.mxu0 %v1903
          %1955 = vmatprep.subr.mxu0 0.0
          %1956 = vmatpush2.msra.mxu0 0.0
          %1957 = vmatprep.subr.mxu0 0.0
          %1958 = vmatpush2.msra.mxu0 0.0
          %1959 = vmatprep.subr.mxu0 0.0
          %1960 = vmatpush2.msra.mxu0 0.0
          %1961 = vmatprep.subr.mxu0 0.0
          %1962 = vmatpush2.msra.mxu0 0.0
          %1963 = vmatprep.subr.mxu0 0.0
          %1964 = vmatpush2.msra.mxu0 0.0
          %1965 = vmatprep.subr.mxu0 0.0
          %1966 = vmatpush2.msra.mxu0 0.0
          %1967 = vmatprep.subr.mxu0 0.0
          %1968 = vmatpush2.msra.mxu0 0.0
          %1969 = vmatprep.subr.mxu0 0.0
          %1970 = vmatpush2.msra.mxu0 0.0
          %1971 = vmatprep.subr.mxu0 0.0
          %1972 = vmatpush2.msra.mxu0 0.0
          %1973 = vmatprep.subr.mxu0 0.0
          %1974 = vmatpush2.msra.mxu0 0.0
          %1975 = vmatprep.subr.mxu0 0.0
          %1976 = vmatpush2.msra.mxu0 0.0
          %1977 = vmatprep.subr.mxu0 0.0
          %1978 = vmatpush2.msra.mxu0 0.0
          %1979 = vmatprep.subr.mxu0 0.0
          %1980 = vmatpush2.msra.mxu0 0.0
          %1981 = vmatprep.subr.mxu0 0.0
          %1982 = vmatpush2.msra.mxu0 0.0
          %1983 = vmatprep.subr.mxu0 0.0
          %1984 = vmatpush2.msra.mxu0 0.0
          %1985 = vmatprep.subr.mxu0 0.0
          %1986 = vmatpush2.msra.mxu0 0.0
          %1987 = vmatprep.mubr.f32.mxu0 0.0
          %1988 = vmatmul.mubr.f32.gmra.mxu0 %v1918
          %v1989 = vpop.f32.mrf.mxu0
          %v1990 = vadd.f32 %v1915, %v1989
          %v1991 = vpop.f32.mrf.mxu0
          %1992 = vmatprep.mubr.f32.mxu0 0.0
          %1993 = vmatmul.mubr.f32.gmra.mxu0 %v1921
          %v1994 = vpop.f32.mrf.mxu0
          %v1995 = vadd.f32 %v1915, %v1994
          %v1996 = vpop.f32.mrf.mxu0
          %1997 = vdwg.mxu0
          %v1998 = vld [vmem:[#allocation23] sm:$0xff]
          %v1999 = vld [vmem:[#allocation23 + $0x8] sm:$0xff]
          %v2000 = vld [vmem:[#allocation23 + $0x10] sm:$0xff]
          %v2001 = vld [vmem:[#allocation23 + $0x18] sm:$0xff]
          %v2002 = vld [vmem:[#allocation25] sm:$0x1]
          %v2004 = vsel %vm1024, %v1895, 0
          %v2007 = vsel %vm1024, %v1990, 0
          %v2010 = vsel %vm1024, %v1995, 0
          %2012 = vmatprep.subr.mxu0 0.0
          %2013 = vmatpush1.xpose.msra.mxu0 0.0
          %2014 = vmatprep.subr.mxu0 0.0
          %2015 = vmatpush1.xpose.msra.mxu0 0.0
          %2016 = vmatprep.subr.mxu0 0.0
          %2017 = vmatpush1.xpose.msra.mxu0 0.0
          %2018 = vmatprep.subr.mxu0 0.0
          %2019 = vmatpush1.xpose.msra.mxu0 0.0
          %2020 = vmatprep.subr.mxu0 0.0
          %2021 = vmatpush1.xpose.msra.mxu0 0.0
          %2022 = vmatprep.subr.mxu0 0.0
          %2023 = vmatpush1.xpose.msra.mxu0 0.0
          %2024 = vmatprep.subr.mxu0 0.0
          %2025 = vmatpush1.xpose.msra.mxu0 0.0
          %2026 = vmatprep.subr.mxu0 0.0
          %2027 = vmatpush1.xpose.msra.mxu0 0.0
          %2028 = vmatprep.subr.mxu0 0.0
          %2029 = vmatpush1.xpose.msra.mxu0 0.0
          %2030 = vmatprep.subr.mxu0 0.0
          %2031 = vmatpush1.xpose.msra.mxu0 0.0
          %2032 = vmatprep.subr.mxu0 0.0
          %2033 = vmatpush1.xpose.msra.mxu0 0.0
          %2034 = vmatprep.subr.mxu0 0.0
          %2035 = vmatpush1.xpose.msra.mxu0 0.0
          %2036 = vmatprep.subr.mxu0 0.0
          %2037 = vmatpush1.xpose.msra.mxu0 0.0
          %2038 = vmatprep.subr.mxu0 0.0
          %2039 = vmatpush1.xpose.msra.mxu0 0.0
          %2040 = vmatprep.subr.mxu0 0.0
          %2041 = vmatpush1.xpose.msra.mxu0 %v2010
          %2042 = vmatprep.subr.mxu0 0.0
          %2043 = vmatpush1.xpose.msra.mxu0 %v2007
          %2044 = vmatprep.subr.mxu0 0.0
          %2045 = vmatpush2.xpose.msra.mxu0 0.0
          %2046 = vmatprep.subr.mxu0 0.0
          %2047 = vmatpush2.xpose.msra.mxu0 0.0
          %2048 = vmatprep.subr.mxu0 0.0
          %2049 = vmatpush2.xpose.msra.mxu0 0.0
          %2050 = vmatprep.subr.mxu0 0.0
          %2051 = vmatpush2.xpose.msra.mxu0 0.0
          %2052 = vmatprep.subr.mxu0 0.0
          %2053 = vmatpush2.xpose.msra.mxu0 0.0
          %2054 = vmatprep.subr.mxu0 0.0
          %2055 = vmatpush2.xpose.msra.mxu0 0.0
          %2056 = vmatprep.subr.mxu0 0.0
          %2057 = vmatpush2.xpose.msra.mxu0 0.0
          %2058 = vmatprep.subr.mxu0 0.0
          %2059 = vmatpush2.xpose.msra.mxu0 0.0
          %2060 = vmatprep.subr.mxu0 0.0
          %2061 = vmatpush2.xpose.msra.mxu0 0.0
          %2062 = vmatprep.subr.mxu0 0.0
          %2063 = vmatpush2.xpose.msra.mxu0 0.0
          %2064 = vmatprep.subr.mxu0 0.0
          %2065 = vmatpush2.xpose.msra.mxu0 0.0
          %2066 = vmatprep.subr.mxu0 0.0
          %2067 = vmatpush2.xpose.msra.mxu0 0.0
          %2068 = vmatprep.subr.mxu0 0.0
          %2069 = vmatpush2.xpose.msra.mxu0 0.0
          %2070 = vmatprep.subr.mxu0 0.0
          %2071 = vmatpush2.xpose.msra.mxu0 0.0
          %2072 = vmatprep.subr.mxu0 0.0
          %2073 = vmatpush2.xpose.msra.mxu0 0.0
          %2074 = vmatprep.subr.mxu0 0.0
          %2075 = vmatpush2.xpose.msra.mxu0 0.0
          %2076 = vmatprep.mubr.f32.mxu0 0.0
          %2077 = vmatmul.mubr.f32.gmra.mxu0 %v2004
          %v2078 = vpop.f32.mrf.mxu0
          %v2079 = vadd.f32 0.0, %v2078
          %v2080 = vpop.f32.mrf.mxu0
          %2081 = vdwg.mxu0
          %v2082 = vmul.f32 %v2079, 0.35355338
          %vm2083 = vcmask 130048
          %v2084 = vsel %vm2083, %v2082, -inf
          %2085 = vmax.xlane.f32.xlu0 %v2084
          %v2086 = vpop.xlane.xlu0 %2085
          %v2087 = vsub.f32 %v2082, %v2086
          %v2088 = vmul.f32 %v2087, 1.442695
          %v2089 = vpow.pop %v2088
          %v2090 = vsel %vm2083, %v2089, 0.0
          %2091 = vadd.xlane.f32.xlu0 %v2090
          %v2092 = vpop.xlane.xlu0 %2091
          %v2093 = vrcp.pop %v2092
          %v2094 = vmul.f32 %v2089, %v2093
          %2095 = vrot.lane.b32.xlu0 %v1990, 96
          %v2096 = vpop.permute.xlu0 %2095
          %2097 = vrot.lane.b32.xlu0 %v1995, 96
          %v2098 = vpop.permute.xlu0 %2097
          %v2102 = vsel %vm2083, %v2094, 0
          %2104 = vmatprep.subr.mxu0 0.0
          %2105 = vmatpush1.msra.mxu0 0.0
          %2106 = vmatprep.subr.mxu0 0.0
          %2107 = vmatpush1.msra.mxu0 0.0
          %2108 = vmatprep.subr.mxu0 0.0
          %2109 = vmatpush1.msra.mxu0 0.0
          %2110 = vmatprep.subr.mxu0 0.0
          %2111 = vmatpush1.msra.mxu0 0.0
          %2112 = vmatprep.subr.mxu0 0.0
          %2113 = vmatpush1.msra.mxu0 0.0
          %2114 = vmatprep.subr.mxu0 0.0
          %2115 = vmatpush1.msra.mxu0 0.0
          %2116 = vmatprep.subr.mxu0 0.0
          %2117 = vmatpush1.msra.mxu0 0.0
          %2118 = vmatprep.subr.mxu0 0.0
          %2119 = vmatpush1.msra.mxu0 0.0
          %2120 = vmatprep.subr.mxu0 0.0
          %2121 = vmatpush1.msra.mxu0 0.0
          %2122 = vmatprep.subr.mxu0 0.0
          %2123 = vmatpush1.msra.mxu0 0.0
          %2124 = vmatprep.subr.mxu0 0.0
          %2125 = vmatpush1.msra.mxu0 0.0
          %2126 = vmatprep.subr.mxu0 0.0
          %2127 = vmatpush1.msra.mxu0 0.0
          %2128 = vmatprep.subr.mxu0 0.0
          %2129 = vmatpush1.msra.mxu0 0.0
          %2130 = vmatprep.subr.mxu0 0.0
          %2131 = vmatpush1.msra.mxu0 0.0
          %2132 = vmatprep.subr.mxu0 0.0
          %2133 = vmatpush1.msra.mxu0 %v2098
          %2134 = vmatprep.subr.mxu0 0.0
          %2135 = vmatpush1.msra.mxu0 %v2096
          %2136 = vmatprep.subr.mxu0 0.0
          %2137 = vmatpush2.msra.mxu0 0.0
          %2138 = vmatprep.subr.mxu0 0.0
          %2139 = vmatpush2.msra.mxu0 0.0
          %2140 = vmatprep.subr.mxu0 0.0
          %2141 = vmatpush2.msra.mxu0 0.0
          %2142 = vmatprep.subr.mxu0 0.0
          %2143 = vmatpush2.msra.mxu0 0.0
          %2144 = vmatprep.subr.mxu0 0.0
          %2145 = vmatpush2.msra.mxu0 0.0
          %2146 = vmatprep.subr.mxu0 0.0
          %2147 = vmatpush2.msra.mxu0 0.0
          %2148 = vmatprep.subr.mxu0 0.0
          %2149 = vmatpush2.msra.mxu0 0.0
          %2150 = vmatprep.subr.mxu0 0.0
          %2151 = vmatpush2.msra.mxu0 0.0
          %2152 = vmatprep.subr.mxu0 0.0
          %2153 = vmatpush2.msra.mxu0 0.0
          %2154 = vmatprep.subr.mxu0 0.0
          %2155 = vmatpush2.msra.mxu0 0.0
          %2156 = vmatprep.subr.mxu0 0.0
          %2157 = vmatpush2.msra.mxu0 0.0
          %2158 = vmatprep.subr.mxu0 0.0
          %2159 = vmatpush2.msra.mxu0 0.0
          %2160 = vmatprep.subr.mxu0 0.0
          %2161 = vmatpush2.msra.mxu0 0.0
          %2162 = vmatprep.subr.mxu0 0.0
          %2163 = vmatpush2.msra.mxu0 0.0
          %2164 = vmatprep.subr.mxu0 0.0
          %2165 = vmatpush2.msra.mxu0 0.0
          %2166 = vmatprep.subr.mxu0 0.0
          %2167 = vmatpush2.msra.mxu0 0.0
          %2168 = vmatprep.mubr.f32.mxu0 0.0
          %2169 = vmatmul.mubr.f32.gmra.mxu0 %v2102
          %v2170 = vpop.f32.mrf.mxu0
          %v2171 = vadd.f32 0.0, %v2170
          %v2172 = vpop.f32.mrf.mxu0
          %2173 = vdwg.mxu0
          %2174 = vst.msk [vmem:[#allocation2] sm:$0xff] %vm1024, %v2171
          %2175 = vrot.lane.b32.xlu0 %v1895, 120
          %v2176 = vpop.permute.xlu0 %2175
          %2177 = vrot.lane.b32.xlu0 %v1990, 120
          %v2178 = vpop.permute.xlu0 %2177
          %2179 = vrot.lane.b32.xlu0 %v1995, 120
          %v2180 = vpop.permute.xlu0 %2179
          %v2181 = vsel %vm1024, %v2176, 0
          %v2183 = vsel %vm1024, %v2178, 0
          %v2185 = vsel %vm1024, %v2180, 0
          %2187 = vmatprep.subr.mxu0 0.0
          %2188 = vmatpush1.xpose.msra.mxu0 0.0
          %2189 = vmatprep.subr.mxu0 0.0
          %2190 = vmatpush1.xpose.msra.mxu0 0.0
          %2191 = vmatprep.subr.mxu0 0.0
          %2192 = vmatpush1.xpose.msra.mxu0 0.0
          %2193 = vmatprep.subr.mxu0 0.0
          %2194 = vmatpush1.xpose.msra.mxu0 0.0
          %2195 = vmatprep.subr.mxu0 0.0
          %2196 = vmatpush1.xpose.msra.mxu0 0.0
          %2197 = vmatprep.subr.mxu0 0.0
          %2198 = vmatpush1.xpose.msra.mxu0 0.0
          %2199 = vmatprep.subr.mxu0 0.0
          %2200 = vmatpush1.xpose.msra.mxu0 0.0
          %2201 = vmatprep.subr.mxu0 0.0
          %2202 = vmatpush1.xpose.msra.mxu0 0.0
          %2203 = vmatprep.subr.mxu0 0.0
          %2204 = vmatpush1.xpose.msra.mxu0 0.0
          %2205 = vmatprep.subr.mxu0 0.0
          %2206 = vmatpush1.xpose.msra.mxu0 0.0
          %2207 = vmatprep.subr.mxu0 0.0
          %2208 = vmatpush1.xpose.msra.mxu0 0.0
          %2209 = vmatprep.subr.mxu0 0.0
          %2210 = vmatpush1.xpose.msra.mxu0 0.0
          %2211 = vmatprep.subr.mxu0 0.0
          %2212 = vmatpush1.xpose.msra.mxu0 0.0
          %2213 = vmatprep.subr.mxu0 0.0
          %2214 = vmatpush1.xpose.msra.mxu0 0.0
          %2215 = vmatprep.subr.mxu0 0.0
          %2216 = vmatpush1.xpose.msra.mxu0 %v2185
          %2217 = vmatprep.subr.mxu0 0.0
          %2218 = vmatpush1.xpose.msra.mxu0 %v2183
          %2219 = vmatprep.subr.mxu0 0.0
          %2220 = vmatpush2.xpose.msra.mxu0 0.0
          %2221 = vmatprep.subr.mxu0 0.0
          %2222 = vmatpush2.xpose.msra.mxu0 0.0
          %2223 = vmatprep.subr.mxu0 0.0
          %2224 = vmatpush2.xpose.msra.mxu0 0.0
          %2225 = vmatprep.subr.mxu0 0.0
          %2226 = vmatpush2.xpose.msra.mxu0 0.0
          %2227 = vmatprep.subr.mxu0 0.0
          %2228 = vmatpush2.xpose.msra.mxu0 0.0
          %2229 = vmatprep.subr.mxu0 0.0
          %2230 = vmatpush2.xpose.msra.mxu0 0.0
          %2231 = vmatprep.subr.mxu0 0.0
          %2232 = vmatpush2.xpose.msra.mxu0 0.0
          %2233 = vmatprep.subr.mxu0 0.0
          %2234 = vmatpush2.xpose.msra.mxu0 0.0
          %2235 = vmatprep.subr.mxu0 0.0
          %2236 = vmatpush2.xpose.msra.mxu0 0.0
          %2237 = vmatprep.subr.mxu0 0.0
          %2238 = vmatpush2.xpose.msra.mxu0 0.0
          %2239 = vmatprep.subr.mxu0 0.0
          %2240 = vmatpush2.xpose.msra.mxu0 0.0
          %2241 = vmatprep.subr.mxu0 0.0
          %2242 = vmatpush2.xpose.msra.mxu0 0.0
          %2243 = vmatprep.subr.mxu0 0.0
          %2244 = vmatpush2.xpose.msra.mxu0 0.0
          %2245 = vmatprep.subr.mxu0 0.0
          %2246 = vmatpush2.xpose.msra.mxu0 0.0
          %2247 = vmatprep.subr.mxu0 0.0
          %2248 = vmatpush2.xpose.msra.mxu0 0.0
          %2249 = vmatprep.subr.mxu0 0.0
          %2250 = vmatpush2.xpose.msra.mxu0 0.0
          %2251 = vmatprep.mubr.f32.mxu0 0.0
          %2252 = vmatmul.mubr.f32.gmra.mxu0 %v2181
          %v2253 = vpop.f32.mrf.mxu0
          %v2254 = vadd.f32 0.0, %v2253
          %v2255 = vpop.f32.mrf.mxu0
          %2256 = vdwg.mxu0
          %v2257 = vmul.f32 %v2254, 0.35355338
          %v2258 = vsel %vm2083, %v2257, -inf
          %2259 = vmax.xlane.f32.xlu0 %v2258
          %v2260 = vpop.xlane.xlu0 %2259
          %v2261 = vsub.f32 %v2257, %v2260
          %v2262 = vmul.f32 %v2261, 1.442695
          %v2263 = vpow.pop %v2262
          %v2264 = vsel %vm2083, %v2263, 0.0
          %2265 = vadd.xlane.f32.xlu0 %v2264
          %v2266 = vpop.xlane.xlu0 %2265
          %v2267 = vrcp.pop %v2266
          %v2268 = vmul.f32 %v2263, %v2267
          %2269 = vrot.lane.b32.xlu0 %v1990, 88
          %v2270 = vpop.permute.xlu0 %2269
          %2271 = vrot.lane.b32.xlu0 %v1995, 88
          %v2272 = vpop.permute.xlu0 %2271
          %v2276 = vsel %vm2083, %v2268, 0
          %2278 = vmatprep.subr.mxu0 0.0
          %2279 = vmatpush1.msra.mxu0 0.0
          %2280 = vmatprep.subr.mxu0 0.0
          %2281 = vmatpush1.msra.mxu0 0.0
          %2282 = vmatprep.subr.mxu0 0.0
          %2283 = vmatpush1.msra.mxu0 0.0
          %2284 = vmatprep.subr.mxu0 0.0
          %2285 = vmatpush1.msra.mxu0 0.0
          %2286 = vmatprep.subr.mxu0 0.0
          %2287 = vmatpush1.msra.mxu0 0.0
          %2288 = vmatprep.subr.mxu0 0.0
          %2289 = vmatpush1.msra.mxu0 0.0
          %2290 = vmatprep.subr.mxu0 0.0
          %2291 = vmatpush1.msra.mxu0 0.0
          %2292 = vmatprep.subr.mxu0 0.0
          %2293 = vmatpush1.msra.mxu0 0.0
          %2294 = vmatprep.subr.mxu0 0.0
          %2295 = vmatpush1.msra.mxu0 0.0
          %2296 = vmatprep.subr.mxu0 0.0
          %2297 = vmatpush1.msra.mxu0 0.0
          %2298 = vmatprep.subr.mxu0 0.0
          %2299 = vmatpush1.msra.mxu0 0.0
          %2300 = vmatprep.subr.mxu0 0.0
          %2301 = vmatpush1.msra.mxu0 0.0
          %2302 = vmatprep.subr.mxu0 0.0
          %2303 = vmatpush1.msra.mxu0 0.0
          %2304 = vmatprep.subr.mxu0 0.0
          %2305 = vmatpush1.msra.mxu0 0.0
          %2306 = vmatprep.subr.mxu0 0.0
          %2307 = vmatpush1.msra.mxu0 %v2272
          %2308 = vmatprep.subr.mxu0 0.0
          %2309 = vmatpush1.msra.mxu0 %v2270
          %2310 = vmatprep.subr.mxu0 0.0
          %2311 = vmatpush2.msra.mxu0 0.0
          %2312 = vmatprep.subr.mxu0 0.0
          %2313 = vmatpush2.msra.mxu0 0.0
          %2314 = vmatprep.subr.mxu0 0.0
          %2315 = vmatpush2.msra.mxu0 0.0
          %2316 = vmatprep.subr.mxu0 0.0
          %2317 = vmatpush2.msra.mxu0 0.0
          %2318 = vmatprep.subr.mxu0 0.0
          %2319 = vmatpush2.msra.mxu0 0.0
          %2320 = vmatprep.subr.mxu0 0.0
          %2321 = vmatpush2.msra.mxu0 0.0
          %2322 = vmatprep.subr.mxu0 0.0
          %2323 = vmatpush2.msra.mxu0 0.0
          %2324 = vmatprep.subr.mxu0 0.0
          %2325 = vmatpush2.msra.mxu0 0.0
          %2326 = vmatprep.subr.mxu0 0.0
          %2327 = vmatpush2.msra.mxu0 0.0
          %2328 = vmatprep.subr.mxu0 0.0
          %2329 = vmatpush2.msra.mxu0 0.0
          %2330 = vmatprep.subr.mxu0 0.0
          %2331 = vmatpush2.msra.mxu0 0.0
          %2332 = vmatprep.subr.mxu0 0.0
          %2333 = vmatpush2.msra.mxu0 0.0
          %2334 = vmatprep.subr.mxu0 0.0
          %2335 = vmatpush2.msra.mxu0 0.0
          %2336 = vmatprep.subr.mxu0 0.0
          %2337 = vmatpush2.msra.mxu0 0.0
          %2338 = vmatprep.subr.mxu0 0.0
          %2339 = vmatpush2.msra.mxu0 0.0
          %2340 = vmatprep.subr.mxu0 0.0
          %2341 = vmatpush2.msra.mxu0 0.0
          %2342 = vmatprep.mubr.f32.mxu0 0.0
          %2343 = vmatmul.mubr.f32.gmra.mxu0 %v2276
          %v2344 = vpop.f32.mrf.mxu0
          %v2345 = vadd.f32 0.0, %v2344
          %v2346 = vpop.f32.mrf.mxu0
          %2347 = vdwg.mxu0
          %2349 = vrot.lane.b32.xlu0 %v2345, 8
          %v2350 = vpop.permute.xlu0 %2349
          %2352 = vst.msk [vmem:[#allocation2] sm:$0xff] %vm1358, %v2350
          %2353 = vrot.lane.b32.xlu0 %v1895, 112
          %v2354 = vpop.permute.xlu0 %2353
          %2355 = vrot.lane.b32.xlu0 %v1990, 112
          %v2356 = vpop.permute.xlu0 %2355
          %2357 = vrot.lane.b32.xlu0 %v1995, 112
          %v2358 = vpop.permute.xlu0 %2357
          %v2359 = vsel %vm1024, %v2354, 0
          %v2361 = vsel %vm1024, %v2356, 0
          %v2363 = vsel %vm1024, %v2358, 0
          %2365 = vmatprep.subr.mxu0 0.0
          %2366 = vmatpush1.xpose.msra.mxu0 0.0
          %2367 = vmatprep.subr.mxu0 0.0
          %2368 = vmatpush1.xpose.msra.mxu0 0.0
          %2369 = vmatprep.subr.mxu0 0.0
          %2370 = vmatpush1.xpose.msra.mxu0 0.0
          %2371 = vmatprep.subr.mxu0 0.0
          %2372 = vmatpush1.xpose.msra.mxu0 0.0
          %2373 = vmatprep.subr.mxu0 0.0
          %2374 = vmatpush1.xpose.msra.mxu0 0.0
          %2375 = vmatprep.subr.mxu0 0.0
          %2376 = vmatpush1.xpose.msra.mxu0 0.0
          %2377 = vmatprep.subr.mxu0 0.0
          %2378 = vmatpush1.xpose.msra.mxu0 0.0
          %2379 = vmatprep.subr.mxu0 0.0
          %2380 = vmatpush1.xpose.msra.mxu0 0.0
          %2381 = vmatprep.subr.mxu0 0.0
          %2382 = vmatpush1.xpose.msra.mxu0 0.0
          %2383 = vmatprep.subr.mxu0 0.0
          %2384 = vmatpush1.xpose.msra.mxu0 0.0
          %2385 = vmatprep.subr.mxu0 0.0
          %2386 = vmatpush1.xpose.msra.mxu0 0.0
          %2387 = vmatprep.subr.mxu0 0.0
          %2388 = vmatpush1.xpose.msra.mxu0 0.0
          %2389 = vmatprep.subr.mxu0 0.0
          %2390 = vmatpush1.xpose.msra.mxu0 0.0
          %2391 = vmatprep.subr.mxu0 0.0
          %2392 = vmatpush1.xpose.msra.mxu0 0.0
          %2393 = vmatprep.subr.mxu0 0.0
          %2394 = vmatpush1.xpose.msra.mxu0 %v2363
          %2395 = vmatprep.subr.mxu0 0.0
          %2396 = vmatpush1.xpose.msra.mxu0 %v2361
          %2397 = vmatprep.subr.mxu0 0.0
          %2398 = vmatpush2.xpose.msra.mxu0 0.0
          %2399 = vmatprep.subr.mxu0 0.0
          %2400 = vmatpush2.xpose.msra.mxu0 0.0
          %2401 = vmatprep.subr.mxu0 0.0
          %2402 = vmatpush2.xpose.msra.mxu0 0.0
          %2403 = vmatprep.subr.mxu0 0.0
          %2404 = vmatpush2.xpose.msra.mxu0 0.0
          %2405 = vmatprep.subr.mxu0 0.0
          %2406 = vmatpush2.xpose.msra.mxu0 0.0
          %2407 = vmatprep.subr.mxu0 0.0
          %2408 = vmatpush2.xpose.msra.mxu0 0.0
          %2409 = vmatprep.subr.mxu0 0.0
          %2410 = vmatpush2.xpose.msra.mxu0 0.0
          %2411 = vmatprep.subr.mxu0 0.0
          %2412 = vmatpush2.xpose.msra.mxu0 0.0
          %2413 = vmatprep.subr.mxu0 0.0
          %2414 = vmatpush2.xpose.msra.mxu0 0.0
          %2415 = vmatprep.subr.mxu0 0.0
          %2416 = vmatpush2.xpose.msra.mxu0 0.0
          %2417 = vmatprep.subr.mxu0 0.0
          %2418 = vmatpush2.xpose.msra.mxu0 0.0
          %2419 = vmatprep.subr.mxu0 0.0
          %2420 = vmatpush2.xpose.msra.mxu0 0.0
          %2421 = vmatprep.subr.mxu0 0.0
          %2422 = vmatpush2.xpose.msra.mxu0 0.0
          %2423 = vmatprep.subr.mxu0 0.0
          %2424 = vmatpush2.xpose.msra.mxu0 0.0
          %2425 = vmatprep.subr.mxu0 0.0
          %2426 = vmatpush2.xpose.msra.mxu0 0.0
          %2427 = vmatprep.subr.mxu0 0.0
          %2428 = vmatpush2.xpose.msra.mxu0 0.0
          %2429 = vmatprep.mubr.f32.mxu0 0.0
          %2430 = vmatmul.mubr.f32.gmra.mxu0 %v2359
          %v2431 = vpop.f32.mrf.mxu0
          %v2432 = vadd.f32 0.0, %v2431
          %v2433 = vpop.f32.mrf.mxu0
          %2434 = vdwg.mxu0
          %v2435 = vmul.f32 %v2432, 0.35355338
          %v2436 = vsel %vm2083, %v2435, -inf
          %2437 = vmax.xlane.f32.xlu0 %v2436
          %v2438 = vpop.xlane.xlu0 %2437
          %v2439 = vsub.f32 %v2435, %v2438
          %v2440 = vmul.f32 %v2439, 1.442695
          %v2441 = vpow.pop %v2440
          %v2442 = vsel %vm2083, %v2441, 0.0
          %2443 = vadd.xlane.f32.xlu0 %v2442
          %v2444 = vpop.xlane.xlu0 %2443
          %v2445 = vrcp.pop %v2444
          %v2446 = vmul.f32 %v2441, %v2445
          %2447 = vrot.lane.b32.xlu0 %v1990, 80
          %v2448 = vpop.permute.xlu0 %2447
          %2449 = vrot.lane.b32.xlu0 %v1995, 80
          %v2450 = vpop.permute.xlu0 %2449
          %v2454 = vsel %vm2083, %v2446, 0
          %2456 = vmatprep.subr.mxu0 0.0
          %2457 = vmatpush1.msra.mxu0 0.0
          %2458 = vmatprep.subr.mxu0 0.0
          %2459 = vmatpush1.msra.mxu0 0.0
          %2460 = vmatprep.subr.mxu0 0.0
          %2461 = vmatpush1.msra.mxu0 0.0
          %2462 = vmatprep.subr.mxu0 0.0
          %2463 = vmatpush1.msra.mxu0 0.0
          %2464 = vmatprep.subr.mxu0 0.0
          %2465 = vmatpush1.msra.mxu0 0.0
          %2466 = vmatprep.subr.mxu0 0.0
          %2467 = vmatpush1.msra.mxu0 0.0
          %2468 = vmatprep.subr.mxu0 0.0
          %2469 = vmatpush1.msra.mxu0 0.0
          %2470 = vmatprep.subr.mxu0 0.0
          %2471 = vmatpush1.msra.mxu0 0.0
          %2472 = vmatprep.subr.mxu0 0.0
          %2473 = vmatpush1.msra.mxu0 0.0
          %2474 = vmatprep.subr.mxu0 0.0
          %2475 = vmatpush1.msra.mxu0 0.0
          %2476 = vmatprep.subr.mxu0 0.0
          %2477 = vmatpush1.msra.mxu0 0.0
          %2478 = vmatprep.subr.mxu0 0.0
          %2479 = vmatpush1.msra.mxu0 0.0
          %2480 = vmatprep.subr.mxu0 0.0
          %2481 = vmatpush1.msra.mxu0 0.0
          %2482 = vmatprep.subr.mxu0 0.0
          %2483 = vmatpush1.msra.mxu0 0.0
          %2484 = vmatprep.subr.mxu0 0.0
          %2485 = vmatpush1.msra.mxu0 %v2450
          %2486 = vmatprep.subr.mxu0 0.0
          %2487 = vmatpush1.msra.mxu0 %v2448
          %2488 = vmatprep.subr.mxu0 0.0
          %2489 = vmatpush2.msra.mxu0 0.0
          %2490 = vmatprep.subr.mxu0 0.0
          %2491 = vmatpush2.msra.mxu0 0.0
          %2492 = vmatprep.subr.mxu0 0.0
          %2493 = vmatpush2.msra.mxu0 0.0
          %2494 = vmatprep.subr.mxu0 0.0
          %2495 = vmatpush2.msra.mxu0 0.0
          %2496 = vmatprep.subr.mxu0 0.0
          %2497 = vmatpush2.msra.mxu0 0.0
          %2498 = vmatprep.subr.mxu0 0.0
          %2499 = vmatpush2.msra.mxu0 0.0
          %2500 = vmatprep.subr.mxu0 0.0
          %2501 = vmatpush2.msra.mxu0 0.0
          %2502 = vmatprep.subr.mxu0 0.0
          %2503 = vmatpush2.msra.mxu0 0.0
          %2504 = vmatprep.subr.mxu0 0.0
          %2505 = vmatpush2.msra.mxu0 0.0
          %2506 = vmatprep.subr.mxu0 0.0
          %2507 = vmatpush2.msra.mxu0 0.0
          %2508 = vmatprep.subr.mxu0 0.0
          %2509 = vmatpush2.msra.mxu0 0.0
          %2510 = vmatprep.subr.mxu0 0.0
          %2511 = vmatpush2.msra.mxu0 0.0
          %2512 = vmatprep.subr.mxu0 0.0
          %2513 = vmatpush2.msra.mxu0 0.0
          %2514 = vmatprep.subr.mxu0 0.0
          %2515 = vmatpush2.msra.mxu0 0.0
          %2516 = vmatprep.subr.mxu0 0.0
          %2517 = vmatpush2.msra.mxu0 0.0
          %2518 = vmatprep.subr.mxu0 0.0
          %2519 = vmatpush2.msra.mxu0 0.0
          %2520 = vmatprep.mubr.f32.mxu0 0.0
          %2521 = vmatmul.mubr.f32.gmra.mxu0 %v2454
          %v2522 = vpop.f32.mrf.mxu0
          %v2523 = vadd.f32 0.0, %v2522
          %v2524 = vpop.f32.mrf.mxu0
          %2525 = vdwg.mxu0
          %2527 = vrot.lane.b32.xlu0 %v2523, 16
          %v2528 = vpop.permute.xlu0 %2527
          %2530 = vst.msk [vmem:[#allocation2] sm:$0xff] %vm1530, %v2528
          %2531 = vrot.lane.b32.xlu0 %v1895, 104
          %v2532 = vpop.permute.xlu0 %2531
          %2533 = vrot.lane.b32.xlu0 %v1990, 104
          %v2534 = vpop.permute.xlu0 %2533
          %2535 = vrot.lane.b32.xlu0 %v1995, 104
          %v2536 = vpop.permute.xlu0 %2535
          %v2537 = vsel %vm1024, %v2532, 0
          %v2539 = vsel %vm1024, %v2534, 0
          %v2541 = vsel %vm1024, %v2536, 0
          %2543 = vmatprep.subr.mxu0 0.0
          %2544 = vmatpush1.xpose.msra.mxu0 0.0
          %2545 = vmatprep.subr.mxu0 0.0
          %2546 = vmatpush1.xpose.msra.mxu0 0.0
          %2547 = vmatprep.subr.mxu0 0.0
          %2548 = vmatpush1.xpose.msra.mxu0 0.0
          %2549 = vmatprep.subr.mxu0 0.0
          %2550 = vmatpush1.xpose.msra.mxu0 0.0
          %2551 = vmatprep.subr.mxu0 0.0
          %2552 = vmatpush1.xpose.msra.mxu0 0.0
          %2553 = vmatprep.subr.mxu0 0.0
          %2554 = vmatpush1.xpose.msra.mxu0 0.0
          %2555 = vmatprep.subr.mxu0 0.0
          %2556 = vmatpush1.xpose.msra.mxu0 0.0
          %2557 = vmatprep.subr.mxu0 0.0
          %2558 = vmatpush1.xpose.msra.mxu0 0.0
          %2559 = vmatprep.subr.mxu0 0.0
          %2560 = vmatpush1.xpose.msra.mxu0 0.0
          %2561 = vmatprep.subr.mxu0 0.0
          %2562 = vmatpush1.xpose.msra.mxu0 0.0
          %2563 = vmatprep.subr.mxu0 0.0
          %2564 = vmatpush1.xpose.msra.mxu0 0.0
          %2565 = vmatprep.subr.mxu0 0.0
          %2566 = vmatpush1.xpose.msra.mxu0 0.0
          %2567 = vmatprep.subr.mxu0 0.0
          %2568 = vmatpush1.xpose.msra.mxu0 0.0
          %2569 = vmatprep.subr.mxu0 0.0
          %2570 = vmatpush1.xpose.msra.mxu0 0.0
          %2571 = vmatprep.subr.mxu0 0.0
          %2572 = vmatpush1.xpose.msra.mxu0 %v2541
          %2573 = vmatprep.subr.mxu0 0.0
          %2574 = vmatpush1.xpose.msra.mxu0 %v2539
          %2575 = vmatprep.subr.mxu0 0.0
          %2576 = vmatpush2.xpose.msra.mxu0 0.0
          %2577 = vmatprep.subr.mxu0 0.0
          %2578 = vmatpush2.xpose.msra.mxu0 0.0
          %2579 = vmatprep.subr.mxu0 0.0
          %2580 = vmatpush2.xpose.msra.mxu0 0.0
          %2581 = vmatprep.subr.mxu0 0.0
          %2582 = vmatpush2.xpose.msra.mxu0 0.0
          %2583 = vmatprep.subr.mxu0 0.0
          %2584 = vmatpush2.xpose.msra.mxu0 0.0
          %2585 = vmatprep.subr.mxu0 0.0
          %2586 = vmatpush2.xpose.msra.mxu0 0.0
          %2587 = vmatprep.subr.mxu0 0.0
          %2588 = vmatpush2.xpose.msra.mxu0 0.0
          %2589 = vmatprep.subr.mxu0 0.0
          %2590 = vmatpush2.xpose.msra.mxu0 0.0
          %2591 = vmatprep.subr.mxu0 0.0
          %2592 = vmatpush2.xpose.msra.mxu0 0.0
          %2593 = vmatprep.subr.mxu0 0.0
          %2594 = vmatpush2.xpose.msra.mxu0 0.0
          %2595 = vmatprep.subr.mxu0 0.0
          %2596 = vmatpush2.xpose.msra.mxu0 0.0
          %2597 = vmatprep.subr.mxu0 0.0
          %2598 = vmatpush2.xpose.msra.mxu0 0.0
          %2599 = vmatprep.subr.mxu0 0.0
          %2600 = vmatpush2.xpose.msra.mxu0 0.0
          %2601 = vmatprep.subr.mxu0 0.0
          %2602 = vmatpush2.xpose.msra.mxu0 0.0
          %2603 = vmatprep.subr.mxu0 0.0
          %2604 = vmatpush2.xpose.msra.mxu0 0.0
          %2605 = vmatprep.subr.mxu0 0.0
          %2606 = vmatpush2.xpose.msra.mxu0 0.0
          %2607 = vmatprep.mubr.f32.mxu0 0.0
          %2608 = vmatmul.mubr.f32.gmra.mxu0 %v2537
          %v2609 = vpop.f32.mrf.mxu0
          %v2610 = vadd.f32 0.0, %v2609
          %v2611 = vpop.f32.mrf.mxu0
          %2612 = vdwg.mxu0
          %v2613 = vmul.f32 %v2610, 0.35355338
          %v2614 = vsel %vm2083, %v2613, -inf
          %2615 = vmax.xlane.f32.xlu0 %v2614
          %v2616 = vpop.xlane.xlu0 %2615
          %v2617 = vsub.f32 %v2613, %v2616
          %v2618 = vmul.f32 %v2617, 1.442695
          %v2619 = vpow.pop %v2618
          %v2620 = vsel %vm2083, %v2619, 0.0
          %2621 = vadd.xlane.f32.xlu0 %v2620
          %v2622 = vpop.xlane.xlu0 %2621
          %v2623 = vrcp.pop %v2622
          %v2624 = vmul.f32 %v2619, %v2623
          %2625 = vrot.lane.b32.xlu0 %v1990, 72
          %v2626 = vpop.permute.xlu0 %2625
          %2627 = vrot.lane.b32.xlu0 %v1995, 72
          %v2628 = vpop.permute.xlu0 %2627
          %v2632 = vsel %vm2083, %v2624, 0
          %2634 = vmatprep.subr.mxu0 0.0
          %2635 = vmatpush1.msra.mxu0 0.0
          %2636 = vmatprep.subr.mxu0 0.0
          %2637 = vmatpush1.msra.mxu0 0.0
          %2638 = vmatprep.subr.mxu0 0.0
          %2639 = vmatpush1.msra.mxu0 0.0
          %2640 = vmatprep.subr.mxu0 0.0
          %2641 = vmatpush1.msra.mxu0 0.0
          %2642 = vmatprep.subr.mxu0 0.0
          %2643 = vmatpush1.msra.mxu0 0.0
          %2644 = vmatprep.subr.mxu0 0.0
          %2645 = vmatpush1.msra.mxu0 0.0
          %2646 = vmatprep.subr.mxu0 0.0
          %2647 = vmatpush1.msra.mxu0 0.0
          %2648 = vmatprep.subr.mxu0 0.0
          %2649 = vmatpush1.msra.mxu0 0.0
          %2650 = vmatprep.subr.mxu0 0.0
          %2651 = vmatpush1.msra.mxu0 0.0
          %2652 = vmatprep.subr.mxu0 0.0
          %2653 = vmatpush1.msra.mxu0 0.0
          %2654 = vmatprep.subr.mxu0 0.0
          %2655 = vmatpush1.msra.mxu0 0.0
          %2656 = vmatprep.subr.mxu0 0.0
          %2657 = vmatpush1.msra.mxu0 0.0
          %2658 = vmatprep.subr.mxu0 0.0
          %2659 = vmatpush1.msra.mxu0 0.0
          %2660 = vmatprep.subr.mxu0 0.0
          %2661 = vmatpush1.msra.mxu0 0.0
          %2662 = vmatprep.subr.mxu0 0.0
          %2663 = vmatpush1.msra.mxu0 %v2628
          %2664 = vmatprep.subr.mxu0 0.0
          %2665 = vmatpush1.msra.mxu0 %v2626
          %2666 = vmatprep.subr.mxu0 0.0
          %2667 = vmatpush2.msra.mxu0 0.0
          %2668 = vmatprep.subr.mxu0 0.0
          %2669 = vmatpush2.msra.mxu0 0.0
          %2670 = vmatprep.subr.mxu0 0.0
          %2671 = vmatpush2.msra.mxu0 0.0
          %2672 = vmatprep.subr.mxu0 0.0
          %2673 = vmatpush2.msra.mxu0 0.0
          %2674 = vmatprep.subr.mxu0 0.0
          %2675 = vmatpush2.msra.mxu0 0.0
          %2676 = vmatprep.subr.mxu0 0.0
          %2677 = vmatpush2.msra.mxu0 0.0
          %2678 = vmatprep.subr.mxu0 0.0
          %2679 = vmatpush2.msra.mxu0 0.0
          %2680 = vmatprep.subr.mxu0 0.0
          %2681 = vmatpush2.msra.mxu0 0.0
          %2682 = vmatprep.subr.mxu0 0.0
          %2683 = vmatpush2.msra.mxu0 0.0
          %2684 = vmatprep.subr.mxu0 0.0
          %2685 = vmatpush2.msra.mxu0 0.0
          %2686 = vmatprep.subr.mxu0 0.0
          %2687 = vmatpush2.msra.mxu0 0.0
          %2688 = vmatprep.subr.mxu0 0.0
          %2689 = vmatpush2.msra.mxu0 0.0
          %2690 = vmatprep.subr.mxu0 0.0
          %2691 = vmatpush2.msra.mxu0 0.0
          %2692 = vmatprep.subr.mxu0 0.0
          %2693 = vmatpush2.msra.mxu0 0.0
          %2694 = vmatprep.subr.mxu0 0.0
          %2695 = vmatpush2.msra.mxu0 0.0
          %2696 = vmatprep.subr.mxu0 0.0
          %2697 = vmatpush2.msra.mxu0 0.0
          %2698 = vmatprep.mubr.f32.mxu0 0.0
          %2699 = vmatmul.mubr.f32.gmra.mxu0 %v2632
          %v2700 = vpop.f32.mrf.mxu0
          %v2701 = vadd.f32 0.0, %v2700
          %v2702 = vpop.f32.mrf.mxu0
          %2703 = vdwg.mxu0
          %2705 = vrot.lane.b32.xlu0 %v2701, 24
          %v2706 = vpop.permute.xlu0 %2705
          %2708 = vst.msk [vmem:[#allocation2] sm:$0xff] %vm1702, %v2706
          %v2709 = vld [vmem:[#allocation2] sm:$0xff]
          %v2711 = vlaneseq
          %v2712 = vshrl.u32 %v2711, 7
          %v2713 = vsub.s32 0, %v2712
          %v2714 = vrot.slane %v2002, %v2713
          %v2717 = vsel %vm903, %v2709, 0
          %2719 = vmatprep.subr.mxu0 0.0
          %2720 = vmatpush1.msra.mxu0 0.0
          %2721 = vmatprep.subr.mxu0 0.0
          %2722 = vmatpush1.msra.mxu0 0.0
          %2723 = vmatprep.subr.mxu0 0.0
          %2724 = vmatpush1.msra.mxu0 0.0
          %2725 = vmatprep.subr.mxu0 0.0
          %2726 = vmatpush1.msra.mxu0 0.0
          %2727 = vmatprep.subr.mxu0 0.0
          %2728 = vmatpush1.msra.mxu0 0.0
          %2729 = vmatprep.subr.mxu0 0.0
          %2730 = vmatpush1.msra.mxu0 0.0
          %2731 = vmatprep.subr.mxu0 0.0
          %2732 = vmatpush1.msra.mxu0 0.0
          %2733 = vmatprep.subr.mxu0 0.0
          %2734 = vmatpush1.msra.mxu0 0.0
          %2735 = vmatprep.subr.mxu0 0.0
          %2736 = vmatpush1.msra.mxu0 0.0
          %2737 = vmatprep.subr.mxu0 0.0
          %2738 = vmatpush1.msra.mxu0 0.0
          %2739 = vmatprep.subr.mxu0 0.0
          %2740 = vmatpush1.msra.mxu0 0.0
          %2741 = vmatprep.subr.mxu0 0.0
          %2742 = vmatpush1.msra.mxu0 0.0
          %2743 = vmatprep.subr.mxu0 0.0
          %2744 = vmatpush1.msra.mxu0 %v2001
          %2745 = vmatprep.subr.mxu0 0.0
          %2746 = vmatpush1.msra.mxu0 %v2000
          %2747 = vmatprep.subr.mxu0 0.0
          %2748 = vmatpush1.msra.mxu0 %v1999
          %2749 = vmatprep.subr.mxu0 0.0
          %2750 = vmatpush1.msra.mxu0 %v1998
          %2751 = vmatprep.subr.mxu0 0.0
          %2752 = vmatpush2.msra.mxu0 0.0
          %2753 = vmatprep.subr.mxu0 0.0
          %2754 = vmatpush2.msra.mxu0 0.0
          %2755 = vmatprep.subr.mxu0 0.0
          %2756 = vmatpush2.msra.mxu0 0.0
          %2757 = vmatprep.subr.mxu0 0.0
          %2758 = vmatpush2.msra.mxu0 0.0
          %2759 = vmatprep.subr.mxu0 0.0
          %2760 = vmatpush2.msra.mxu0 0.0
          %2761 = vmatprep.subr.mxu0 0.0
          %2762 = vmatpush2.msra.mxu0 0.0
          %2763 = vmatprep.subr.mxu0 0.0
          %2764 = vmatpush2.msra.mxu0 0.0
          %2765 = vmatprep.subr.mxu0 0.0
          %2766 = vmatpush2.msra.mxu0 0.0
          %2767 = vmatprep.subr.mxu0 0.0
          %2768 = vmatpush2.msra.mxu0 0.0
          %2769 = vmatprep.subr.mxu0 0.0
          %2770 = vmatpush2.msra.mxu0 0.0
          %2771 = vmatprep.subr.mxu0 0.0
          %2772 = vmatpush2.msra.mxu0 0.0
          %2773 = vmatprep.subr.mxu0 0.0
          %2774 = vmatpush2.msra.mxu0 0.0
          %2775 = vmatprep.subr.mxu0 0.0
          %2776 = vmatpush2.msra.mxu0 0.0
          %2777 = vmatprep.subr.mxu0 0.0
          %2778 = vmatpush2.msra.mxu0 0.0
          %2779 = vmatprep.subr.mxu0 0.0
          %2780 = vmatpush2.msra.mxu0 0.0
          %2781 = vmatprep.subr.mxu0 0.0
          %2782 = vmatpush2.msra.mxu0 0.0
          %2783 = vmatprep.mubr.f32.mxu0 0.0
          %2784 = vmatmul.mubr.f32.gmra.mxu0 %v2717
          %v2785 = vpop.f32.mrf.mxu0
          %v2786 = vadd.f32 %v2714, %v2785
          %v2787 = vpop.f32.mrf.mxu0
          %2788 = vdwg.mxu0
          %v2789 = vadd.f32 %v1784, %v2786
          %2790 = vst.msk [vmem:[#allocation3] sm:$0xff] %vm903, %v2789
          %2791 = vst.msk [vmem:[#allocation4] sm:$0xff] %vm903, 0.0
        $region164: #{tpu_custom_call.1} parent=99 // pred_fallthru
          _
        %v2792 = vld [vmem:[#allocation3] sm:$0xff]
        %v2793 = vld [vmem:[#allocation14] sm:$0x1]
        %v2794 = vld [vmem:[#allocation16] sm:$0x1]
        %vm2795 = vcmask 261120
        %v2796 = vsel %vm2795, %v2792, 0.0
        %2797 = vadd.xlane.f32.xlu0 %v2796
        %v2798 = vpop.xlane.xlu0 %2797
        %v2799 = vrcp.pop 32.0
        %v2800 = vmul.f32 %v2798, %v2799
        %v2801 = vsub.f32 %v2792, %v2800
        %v2802 = vmul.f32 %v2801, %v2801
        %v2803 = vsel %vm2795, %v2802, 0.0
        %2804 = vadd.xlane.f32.xlu0 %v2803
        %v2805 = vpop.xlane.xlu0 %2804
        %v2806 = vmul.f32 %v2805, %v2799
        %v2807 = vadd.f32 %v2806, 1e-05
        %v2808 = vrsqrt.pop %v2807
        %v2809 = vmul.f32 %v2801, %v2808
        %v2811 = vlaneseq
        %v2812 = vshrl.u32 %v2811, 7
        %v2813 = vsub.s32 0, %v2812
        %v2814 = vrot.slane %v2793, %v2813
        %v2816 = vmul.f32 %v2809, %v2814
        %v2818 = vlaneseq
        %v2819 = vshrl.u32 %v2818, 7
        %v2820 = vsub.s32 0, %v2819
        %v2821 = vrot.slane %v2794, %v2820
        %v2823 = vadd.f32 %v2816, %v2821
        %v2824 = vld [vmem:[#allocation26] sm:$0xff]
        %v2825 = vld [vmem:[#allocation26 + $0x8] sm:$0xff]
        %v2826 = vld [vmem:[#allocation26 + $0x10] sm:$0xff]
        %v2827 = vld [vmem:[#allocation26 + $0x18] sm:$0xff]
        %v2828 = vld [vmem:[#allocation28] sm:$0x1]
        %v2830 = vlaneseq
        %v2831 = vshrl.u32 %v2830, 7
        %v2832 = vsub.s32 0, %v2831
        %v2833 = vrot.slane %v2828, %v2832
        %v2836 = vsel %vm2795, %v2823, 0
        %2838 = vmatprep.subr.mxu0 0.0
        %2839 = vmatpush1.msra.mxu0 0.0
        %2840 = vmatprep.subr.mxu0 0.0
        %2841 = vmatpush1.msra.mxu0 0.0
        %2842 = vmatprep.subr.mxu0 0.0
        %2843 = vmatpush1.msra.mxu0 0.0
        %2844 = vmatprep.subr.mxu0 0.0
        %2845 = vmatpush1.msra.mxu0 0.0
        %2846 = vmatprep.subr.mxu0 0.0
        %2847 = vmatpush1.msra.mxu0 0.0
        %2848 = vmatprep.subr.mxu0 0.0
        %2849 = vmatpush1.msra.mxu0 0.0
        %2850 = vmatprep.subr.mxu0 0.0
        %2851 = vmatpush1.msra.mxu0 0.0
        %2852 = vmatprep.subr.mxu0 0.0
        %2853 = vmatpush1.msra.mxu0 0.0
        %2854 = vmatprep.subr.mxu0 0.0
        %2855 = vmatpush1.msra.mxu0 0.0
        %2856 = vmatprep.subr.mxu0 0.0
        %2857 = vmatpush1.msra.mxu0 0.0
        %2858 = vmatprep.subr.mxu0 0.0
        %2859 = vmatpush1.msra.mxu0 0.0
        %2860 = vmatprep.subr.mxu0 0.0
        %2861 = vmatpush1.msra.mxu0 0.0
        %2862 = vmatprep.subr.mxu0 0.0
        %2863 = vmatpush1.msra.mxu0 %v2827
        %2864 = vmatprep.subr.mxu0 0.0
        %2865 = vmatpush1.msra.mxu0 %v2826
        %2866 = vmatprep.subr.mxu0 0.0
        %2867 = vmatpush1.msra.mxu0 %v2825
        %2868 = vmatprep.subr.mxu0 0.0
        %2869 = vmatpush1.msra.mxu0 %v2824
        %2870 = vmatprep.subr.mxu0 0.0
        %2871 = vmatpush2.msra.mxu0 0.0
        %2872 = vmatprep.subr.mxu0 0.0
        %2873 = vmatpush2.msra.mxu0 0.0
        %2874 = vmatprep.subr.mxu0 0.0
        %2875 = vmatpush2.msra.mxu0 0.0
        %2876 = vmatprep.subr.mxu0 0.0
        %2877 = vmatpush2.msra.mxu0 0.0
        %2878 = vmatprep.subr.mxu0 0.0
        %2879 = vmatpush2.msra.mxu0 0.0
        %2880 = vmatprep.subr.mxu0 0.0
        %2881 = vmatpush2.msra.mxu0 0.0
        %2882 = vmatprep.subr.mxu0 0.0
        %2883 = vmatpush2.msra.mxu0 0.0
        %2884 = vmatprep.subr.mxu0 0.0
        %2885 = vmatpush2.msra.mxu0 0.0
        %2886 = vmatprep.subr.mxu0 0.0
        %2887 = vmatpush2.msra.mxu0 0.0
        %2888 = vmatprep.subr.mxu0 0.0
        %2889 = vmatpush2.msra.mxu0 0.0
        %2890 = vmatprep.subr.mxu0 0.0
        %2891 = vmatpush2.msra.mxu0 0.0
        %2892 = vmatprep.subr.mxu0 0.0
        %2893 = vmatpush2.msra.mxu0 0.0
        %2894 = vmatprep.subr.mxu0 0.0
        %2895 = vmatpush2.msra.mxu0 0.0
        %2896 = vmatprep.subr.mxu0 0.0
        %2897 = vmatpush2.msra.mxu0 0.0
        %2898 = vmatprep.subr.mxu0 0.0
        %2899 = vmatpush2.msra.mxu0 0.0
        %2900 = vmatprep.subr.mxu0 0.0
        %2901 = vmatpush2.msra.mxu0 0.0
        %2902 = vmatprep.mubr.f32.mxu0 0.0
        %2903 = vmatmul.mubr.f32.gmra.mxu0 %v2836
        %v2904 = vpop.f32.mrf.mxu0
        %v2905 = vadd.f32 %v2833, %v2904
        %v2906 = vpop.f32.mrf.mxu0
        %2907 = vdwg.mxu0
        %v2908 = vmax.f32 %v2905, 0.0
        %v2909 = vld [vmem:[#allocation4] sm:$0xff]
        %v2910 = vld [vmem:[%s892] sm:$0xff]
        %v2911 = vld [vmem:[%s892 + $0x8] sm:$0xff]
        %v2912 = vld [vmem:[%s892 + $0x10] sm:$0xff]
        %v2913 = vld [vmem:[%s892 + $0x18] sm:$0xff]
        %v2914 = vld [vmem:[%s892 + $0x20] sm:$0xff]
        %v2915 = vld [vmem:[%s892 + $0x28] sm:$0xff]
        %v2916 = vld [vmem:[%s892 + $0x30] sm:$0xff]
        %v2917 = vld [vmem:[%s892 + $0x38] sm:$0xff]
        %vm2918 = vcmask 523264
        %v2920 = vsel %vm2918, %v2908, 0
        %2922 = vmatprep.subr.mxu0 0.0
        %2923 = vmatpush1.msra.mxu0 0.0
        %2924 = vmatprep.subr.mxu0 0.0
        %2925 = vmatpush1.msra.mxu0 0.0
        %2926 = vmatprep.subr.mxu0 0.0
        %2927 = vmatpush1.msra.mxu0 0.0
        %2928 = vmatprep.subr.mxu0 0.0
        %2929 = vmatpush1.msra.mxu0 0.0
        %2930 = vmatprep.subr.mxu0 0.0
        %2931 = vmatpush1.msra.mxu0 0.0
        %2932 = vmatprep.subr.mxu0 0.0
        %2933 = vmatpush1.msra.mxu0 0.0
        %2934 = vmatprep.subr.mxu0 0.0
        %2935 = vmatpush1.msra.mxu0 0.0
        %2936 = vmatprep.subr.mxu0 0.0
        %2937 = vmatpush1.msra.mxu0 0.0
        %2938 = vmatprep.subr.mxu0 0.0
        %2939 = vmatpush1.msra.mxu0 %v2917
        %2940 = vmatprep.subr.mxu0 0.0
        %2941 = vmatpush1.msra.mxu0 %v2916
        %2942 = vmatprep.subr.mxu0 0.0
        %2943 = vmatpush1.msra.mxu0 %v2915
        %2944 = vmatprep.subr.mxu0 0.0
        %2945 = vmatpush1.msra.mxu0 %v2914
        %2946 = vmatprep.subr.mxu0 0.0
        %2947 = vmatpush1.msra.mxu0 %v2913
        %2948 = vmatprep.subr.mxu0 0.0
        %2949 = vmatpush1.msra.mxu0 %v2912
        %2950 = vmatprep.subr.mxu0 0.0
        %2951 = vmatpush1.msra.mxu0 %v2911
        %2952 = vmatprep.subr.mxu0 0.0
        %2953 = vmatpush1.msra.mxu0 %v2910
        %2954 = vmatprep.subr.mxu0 0.0
        %2955 = vmatpush2.msra.mxu0 0.0
        %2956 = vmatprep.subr.mxu0 0.0
        %2957 = vmatpush2.msra.mxu0 0.0
        %2958 = vmatprep.subr.mxu0 0.0
        %2959 = vmatpush2.msra.mxu0 0.0
        %2960 = vmatprep.subr.mxu0 0.0
        %2961 = vmatpush2.msra.mxu0 0.0
        %2962 = vmatprep.subr.mxu0 0.0
        %2963 = vmatpush2.msra.mxu0 0.0
        %2964 = vmatprep.subr.mxu0 0.0
        %2965 = vmatpush2.msra.mxu0 0.0
        %2966 = vmatprep.subr.mxu0 0.0
        %2967 = vmatpush2.msra.mxu0 0.0
        %2968 = vmatprep.subr.mxu0 0.0
        %2969 = vmatpush2.msra.mxu0 0.0
        %2970 = vmatprep.subr.mxu0 0.0
        %2971 = vmatpush2.msra.mxu0 0.0
        %2972 = vmatprep.subr.mxu0 0.0
        %2973 = vmatpush2.msra.mxu0 0.0
        %2974 = vmatprep.subr.mxu0 0.0
        %2975 = vmatpush2.msra.mxu0 0.0
        %2976 = vmatprep.subr.mxu0 0.0
        %2977 = vmatpush2.msra.mxu0 0.0
        %2978 = vmatprep.subr.mxu0 0.0
        %2979 = vmatpush2.msra.mxu0 0.0
        %2980 = vmatprep.subr.mxu0 0.0
        %2981 = vmatpush2.msra.mxu0 0.0
        %2982 = vmatprep.subr.mxu0 0.0
        %2983 = vmatpush2.msra.mxu0 0.0
        %2984 = vmatprep.subr.mxu0 0.0
        %2985 = vmatpush2.msra.mxu0 0.0
        %2986 = vmatprep.mubr.f32.mxu0 0.0
        %2987 = vmatmul.mubr.f32.gmra.mxu0 %v2920
        %v2988 = vpop.f32.mrf.mxu0
        %v2989 = vadd.f32 0.0, %v2988
        %v2990 = vpop.f32.mrf.mxu0
        %2991 = vdwg.mxu0
        %v2992 = vadd.f32 %v2909, %v2989
        %2993 = vst.msk [vmem:[#allocation4] sm:$0xff] %vm2795, %v2992
        // Predicated region
        $region165: #{tpu_custom_call.1} parent=99 // pred_check
          %p2994 = pneg %p894
        $region166: #{tpu_custom_call.1} parent=99 // pred_check_branch
          %2996 = sbr.rel (%p2994) target = $region168
        $region167: #{tpu_custom_call.1} parent=99 // pred_region
          %v2997 = vld [vmem:[#allocation3] sm:$0xff]
          %v2998 = vld [vmem:[#allocation4] sm:$0xff]
          %v2999 = vadd.f32 %v2997, %v2998
          %v3000 = vld [vmem:[%s19] sm:$0x1]
          %v3002 = vlaneseq
          %v3003 = vshrl.u32 %v3002, 7
          %v3004 = vsub.s32 0, %v3003
          %v3005 = vrot.slane %v3000, %v3004
          %v3007 = vadd.f32 %v2999, %v3005
          %3008 = vst.msk [vmem:[%s882] sm:$0xff] %vm2795, %v3007
        $region168: #{tpu_custom_call.1} parent=99 // pred_fallthru
          _
        %s3009 = sand.u32 %s509, 1
        %s3010 = scalar_lea.sflag [#allocation7], %s3009
        %s3011 = sand.u32 %s509, 1
        %s3012 = smul.addr %s3011, 8
        %s3013 = scalar_lea.vmem [#allocation29], %s3012
        // Predicated region
        $region169: #{tpu_custom_call.1} parent=99 // pred_check
          %p3014 = pneg %p519
        $region170: #{tpu_custom_call.1} parent=99 // pred_check_branch
          %3016 = sbr.rel (%p3014) target = $region172
        $region171: #{tpu_custom_call.1} parent=99 // pred_region
          %s3018 = ssub.s32 128, 128
          %3019 = vsyncadd %s3010, %s3018
          %s3020 = smul.addr %s48, 128
          %s3021 = scalar_lea.hbm %s20, %s3020
          %s3023 = sshll.u32 %s3013, 4
          %s3024 = int_to_ptr.vmem [resolvable:$true] %s3023
          %3026 = dma.vmem_to_hbm [thread:$0]  %s3024, 128, %s3021, %s3010
        $region172: #{tpu_custom_call.1} parent=99 // pred_fallthru
          _
      $region100: #{tpu_custom_call.1} parent=5 // pred_fallthru
        _
      %p3027 = scmp.le.s32.totalorder 2, %s39
      // Predicated region
      $region173: #{tpu_custom_call.1} parent=5 // pred_check
        %p3028 = pneg %p3027
      $region174: #{tpu_custom_call.1} parent=5 // pred_check_branch
        %3030 = sbr.rel (%p3028) target = $region176
      $region175: #{tpu_custom_call.1} parent=5 // pred_region
        %s3031 = ssub.s32 %s39, 2
        // Predicated region
        $region177: #{tpu_custom_call.1} parent=175 // pred_check
          %p3032 = pneg %p525
        $region178: #{tpu_custom_call.1} parent=175 // pred_check_branch
          %3034 = sbr.rel (%p3032) target = $region180
        $region179: #{tpu_custom_call.1} parent=175 // pred_region
          %s3035 = sand.u32 %s510, 1
          %s3036 = scalar_lea.sflag [#allocation7], %s3035
          %s3037 = sand.u32 %s510, 1
          %s3038 = smul.addr %s3037, 8
          %s3039 = scalar_lea.vmem [#allocation29], %s3038
          %3040 = dma.done %s3036, 128
        $region180: #{tpu_custom_call.1} parent=175 // pred_fallthru
          _
      $region176: #{tpu_custom_call.1} parent=5 // pred_fallthru
        _
    $region6: #{tpu_custom_call.1} parent=1 // loop_footer
      %s43 = sadd.s32 1, %s39
    $region7: #{tpu_custom_call.1} parent=1 // loop_footer_branch
      %38 = sbr.rel target = $region3
    $region8: #{tpu_custom_call.1} parent=1 // loop_exit
      _
    %3041 = vsyncpa [#allocation6], 1
    %s3042 = scalar_lea.sflag [#allocation6], 1
    %3043 = vsyncpa %s3042, 1
    %3044 = vsyncpa [#allocation9], 1
    %3045 = vsyncpa [#allocation12], 1
    %3046 = vsyncpa [#allocation15], 1
    %3047 = vsyncpa [#allocation18], 1
    %3048 = vsyncpa [#allocation21], 1
    %3049 = vsyncpa [#allocation24], 1
    %3050 = vsyncpa [#allocation27], 1
    %3051 = vsyncpa [#allocation7], 1
    %s3052 = scalar_lea.sflag [#allocation7], 1
    %3053 = vsyncpa %s3052, 1

</llo_original>
